<compile_context>
chip_gen: v6e
topology: v6e:2x2x1
jax: 0.10.0
libtpu: 0.0.40
codegen_flags: <defaults>
</compile_context>

<pallas_src>
import functools
import math

import jax
import jax.numpy as jnp
import numpy as np
from jax.experimental import pallas as pl
from jax.experimental.pallas import tpu as pltpu


def _round_up(x, m):
    return ((x + m - 1) // m) * m


def _pick_tile(hw, batch, max_tile, min_steps=8):
    """Largest 128-multiple divisor of hw <= max_tile (prefer >= min_steps grid
    steps total for 2-TC load balance); fall back to round-up padding."""
    divs = [t for t in range(128, min(hw, max_tile) + 1, 128) if hw % t == 0]
    if divs:
        good = [t for t in divs if batch * (hw // t) >= min_steps]
        tile = max(good) if good else max(divs)
        return tile, hw
    tile = min(max_tile, _round_up(hw, 128))
    return tile, _round_up(hw, tile)


# ----------------------------------------------------------------------------
# Fused Pallas kernel: 8 x BlockPGA + outc on one lane-dense pixel tile
# ----------------------------------------------------------------------------
def fused_pga_kernel(x_ref, w1_ref, wrest_ref, bcat_ref, dt_ref, ow_ref, ob_ref,
                     o_ref, *, n_blocks, cemb):
    """Everything channel-major; pixels live on the 128-lane axis.

    x_ref:     (1, Cin, T)                input pixels (T = pixel tile)
    w1_ref:    (Cemb+K, Cin)              block-1 packed weight [w.T ; scale*dct@w.T]
    wrest_ref: (n_blocks-1, Cemb+K, Cemb) blocks 2..n packed weights
    bcat_ref:  (n_blocks, Cemb+K, 1)      packed biases [b ; scale*dct@b] (f32)
    dt_ref:    (Cemb, K)                  pre-transposed prototype dictionary
    ow_ref:    (n_classes, Cemb)          outc weight (pre-transposed)
    ob_ref:    (n_classes, 1)             outc bias (f32)
    o_ref:     (1, n_classes, T)          logits (f32)
    """
    mm_dtype = w1_ref.dtype                     # f32 or bf16 MXU operands
    x = x_ref[0].astype(mm_dtype)               # (Cin, T)
    dt = dt_ref[...]                            # (Cemb, K)

    for blk in range(n_blocks):
        wcat = w1_ref[...] if blk == 0 else wrest_ref[blk - 1]   # (Cemb+K, Cin*)

        # One MXU push gives both the pixel embedding f and the (pre-scaled)
        # prototype scores s.  Accumulate in f32.
        fs = jnp.dot(wcat, x, preferred_element_type=jnp.float32) + bcat_ref[blk]
        f = fs[:cemb]                           # (Cemb, T)
        s = fs[cemb:]                           # (K, T), already * 1/sqrt(Cemb)

        # softmax over prototypes (axis 0), all f32 elementwise math
        s = s - jnp.max(s, axis=0, keepdims=True)
        p = jnp.exp(s)
        attn = p * pl.reciprocal(jnp.sum(p, axis=0, keepdims=True), approx=True)

        # aggregate prototypes back to pixel space, residual, ReLU
        agg = jnp.dot(dt, attn.astype(mm_dtype),
                      preferred_element_type=jnp.float32)          # (Cemb, T)
        x = jnp.maximum(f + agg, 0.0).astype(mm_dtype)

    logits = jnp.dot(ow_ref[...], x, preferred_element_type=jnp.float32) + ob_ref[...]
    o_ref[0] = logits.astype(o_ref.dtype)


# ----------------------------------------------------------------------------
# Wrapper: weight packing + layout plumbing + single pallas_call
# ----------------------------------------------------------------------------
def big_only_pga_forward(params, x_nchw, obj_dict, bg_dict, *,
                         max_tile=16384, use_bf16_matmul=False):
    b_, c_, h_, w_ = x_nchw.shape
    hw = h_ * w_
    cemb = params["blocks"][0][0].shape[1]
    n_classes = params["outc_w"].shape[1]
    n_blocks = len(params["blocks"])
    scale = 1.0 / math.sqrt(cemb)

    tile, hw_pad = _pick_tile(hw, b_, max_tile)

    # Native NCHW read: (B, C, H*W); no transposes outside the kernel.
    x = x_nchw.reshape(b_, c_, hw)
    if hw_pad != hw:
        x = jnp.pad(x, ((0, 0), (0, 0), (0, hw_pad - hw)))

    # --- pack per-block weights (tiny one-time constants, hoisted out) -------
    dct = jnp.concatenate([obj_dict, bg_dict], axis=0)           # (K, Cemb)
    k = dct.shape[0]

    def pack(w, bias):
        wt = w.T                                                  # (Cemb, Cin)
        bcol = bias.reshape(cemb, 1)
        wcat = jnp.concatenate([wt, scale * (dct @ wt)], axis=0)  # (Cemb+K, Cin)
        bcat = jnp.concatenate([bcol, scale * (dct @ bcol)], 0)   # (Cemb+K, 1)
        return wcat, bcat

    packed = [pack(w, bias) for (w, bias) in params["blocks"]]
    w1cat = packed[0][0]                                          # (Cemb+K, Cin)
    wrestcat = jnp.stack([p[0] for p in packed[1:]])              # (n-1, Cemb+K, Cemb)
    bcat_all = jnp.stack([p[1] for p in packed])                  # (n, Cemb+K, 1)
    dct_t = dct.T                                                 # (Cemb, K)
    ow_t = params["outc_w"].T                                     # (n_classes, Cemb)
    ob = params["outc_b"].reshape(n_classes, 1)                   # (n_classes, 1)

    mm_dtype = jnp.bfloat16 if use_bf16_matmul else jnp.float32
    w1cat = w1cat.astype(mm_dtype)
    wrestcat = wrestcat.astype(mm_dtype)
    dct_t = dct_t.astype(mm_dtype)
    ow_t = ow_t.astype(mm_dtype)

    kernel = functools.partial(fused_pga_kernel, n_blocks=n_blocks, cemb=cemb)

    logits = pl.pallas_call(
        kernel,
        out_shape=jax.ShapeDtypeStruct((b_, n_classes, hw_pad), jnp.float32),
        grid=(b_, hw_pad // tile),
        in_specs=[
            pl.BlockSpec((1, c_, tile), lambda b, i: (b, 0, i)),
            pl.BlockSpec((cemb + k, c_), lambda b, i: (0, 0)),
            pl.BlockSpec((n_blocks - 1, cemb + k, cemb), lambda b, i: (0, 0, 0)),
            pl.BlockSpec((n_blocks, cemb + k, 1), lambda b, i: (0, 0, 0)),
            pl.BlockSpec((cemb, k), lambda b, i: (0, 0)),
            pl.BlockSpec((n_classes, cemb), lambda b, i: (0, 0)),
            pl.BlockSpec((n_classes, 1), lambda b, i: (0, 0)),
        ],
        out_specs=pl.BlockSpec((1, n_classes, tile), lambda b, i: (b, 0, i)),
        compiler_params=pltpu.CompilerParams(
            dimension_semantics=("parallel", "parallel"),
            vmem_limit_bytes=48 * 1024 * 1024),
    )(x, w1cat, wrestcat, bcat_all, dct_t, ow_t, ob)

    if hw_pad != hw:
        logits = logits[:, :, :hw]
    return logits.reshape(b_, n_classes, h_, w_)


# ----------------------------------------------------------------------------
# Params + pure-JAX reference for sanity checking the fused kernel
# ----------------------------------------------------------------------------
def init_params(key, channels, n_classes, embedding_dims, n_blocks=8):
    params = {"blocks": []}
    cin = channels
    for _ in range(n_blocks):
        key, kw, kb = jax.random.split(key, 3)
        w = jax.random.normal(kw, (cin, embedding_dims), jnp.float32) * 0.05
        b = jax.random.normal(kb, (1, embedding_dims), jnp.float32) * 0.01
        params["blocks"].append((w, b))
        cin = embedding_dims
    key, kw, kb = jax.random.split(key, 3)
    params["outc_w"] = jax.random.normal(kw, (embedding_dims, n_classes), jnp.float32) * 0.05
    params["outc_b"] = jax.random.normal(kb, (1, n_classes), jnp.float32) * 0.01
    return params


def reference_forward(params, x_nchw, obj_dict, bg_dict):
    b_, c_, h_, w_ = x_nchw.shape
    x = jnp.transpose(x_nchw, (0, 2, 3, 1)).reshape(b_ * h_ * w_, c_)
    dct = jnp.concatenate([obj_dict, bg_dict], axis=0)
    for (w, bias) in params["blocks"]:
        f = x @ w + bias
        scores = (f @ dct.T) / math.sqrt(w.shape[1])
        attn = jax.nn.softmax(scores, axis=-1)
        x = jax.nn.relu(f + attn @ dct)
    logits = x @ params["outc_w"] + params["outc_b"]
    n_classes = params["outc_w"].shape[1]
    return jnp.transpose(logits.reshape(b_, h_, w_, n_classes), (0, 3, 1, 2))


if __name__ == "__main__":
    key = jax.random.PRNGKey(0)
    channels, n_classes, embedding_dims = 4, 3, 32
    batch, img = 2, 16          # small stand-in for img_crop=320
    n_obj, n_bg = 8, 8          # prototype dictionary sizes

    key, kx, ko, kb = jax.random.split(key, 4)
    x = jax.random.normal(kx, (batch, channels, img, img), jnp.float32)
    obj_dict = jax.random.normal(ko, (n_obj, embedding_dims), jnp.float32)
    bg_dict = jax.random.normal(kb, (n_bg, embedding_dims), jnp.float32)

    params = init_params(key, channels, n_classes, embedding_dims)

    # f32-MXU path (default).  Tolerance 2e-3 leaves headroom for the
    # approx=True EUP reciprocal in the softmax (denominator >= 1, so its
    # ~2^-12 relative error stays tiny across the 8-block chain).
    logits = jax.block_until_ready(big_only_pga_forward(params, x, obj_dict, bg_dict))
    ref = jax.block_until_ready(reference_forward(params, x, obj_dict, bg_dict))
    assert logits.shape == (batch, n_classes, img, img), logits.shape
    np.testing.assert_allclose(np.asarray(logits), np.asarray(ref), rtol=2e-3, atol=2e-3)

    # Exercise the remainder/padding path (H*W with no 128-multiple divisor).
    key, kx2 = jax.random.split(key)
    x2 = jax.random.normal(kx2, (batch, channels, 10, 10), jnp.float32)
    logits2 = jax.block_until_ready(big_only_pga_forward(params, x2, obj_dict, bg_dict))
    ref2 = jax.block_until_ready(reference_forward(params, x2, obj_dict, bg_dict))
    np.testing.assert_allclose(np.asarray(logits2), np.asarray(ref2), rtol=2e-3, atol=2e-3)

    # bf16-MXU-operand path (the v6e/v7x perf lever); looser tolerance since
    # bf16 operands carry ~0.4% relative error through the 8-block chain.
    logits_bf16 = jax.block_until_ready(
        big_only_pga_forward(params, x, obj_dict, bg_dict, use_bf16_matmul=True))
    np.testing.assert_allclose(np.asarray(logits_bf16), np.asarray(ref), rtol=2e-2, atol=2e-2)

    print("KERNEL_OK")
</pallas_src>

<mosaic_0001>
module attributes {stable_mosaic.version = 11 : i64} {
  func.func @fused_pga_kernel(%arg0: i32, %arg1: i32, %arg2: memref<1x4x256xf32, #tpu.memory_space<vmem>>, %arg3: memref<48x4xf32, #tpu.memory_space<vmem>>, %arg4: memref<7x48x32xf32, #tpu.memory_space<vmem>>, %arg5: memref<8x48x1xf32, #tpu.memory_space<vmem>>, %arg6: memref<32x16xf32, #tpu.memory_space<vmem>>, %arg7: memref<3x32xf32, #tpu.memory_space<vmem>>, %arg8: memref<3x1xf32, #tpu.memory_space<vmem>>, %arg9: memref<1x3x256xf32, #tpu.memory_space<vmem>>) attributes {dimension_semantics = [#tpu.dimension_semantics<parallel>, #tpu.dimension_semantics<parallel>], iteration_bounds = array<i64: 2, 1>, scalar_prefetch = 0 : i64, scratch_operands = 0 : i64, tpu.core_type = #tpu.core_type<tc>, window_params = [{transform_indices = @transform_0, window_bounds = array<i64: 1, 4, 256>}, {pipeline_mode = #tpu.pipeline_mode<synchronous>, transform_indices = @transform_1, window_bounds = array<i64: 48, 4>}, {pipeline_mode = #tpu.pipeline_mode<synchronous>, transform_indices = @transform_2, window_bounds = array<i64: 7, 48, 32>}, {pipeline_mode = #tpu.pipeline_mode<synchronous>, transform_indices = @transform_3, window_bounds = array<i64: 8, 48, 1>}, {pipeline_mode = #tpu.pipeline_mode<synchronous>, transform_indices = @transform_4, window_bounds = array<i64: 32, 16>}, {pipeline_mode = #tpu.pipeline_mode<synchronous>, transform_indices = @transform_5, window_bounds = array<i64: 3, 32>}, {pipeline_mode = #tpu.pipeline_mode<synchronous>, transform_indices = @transform_6, window_bounds = array<i64: 3, 1>}, {transform_indices = @transform_7, window_bounds = array<i64: 1, 3, 256>}]} {
    %c0 = arith.constant 0 : index
    %c0_0 = arith.constant 0 : index
    %c0_1 = arith.constant 0 : index
    %0 = vector.load %arg2[%c0, %c0_0, %c0_1] : memref<1x4x256xf32, #tpu.memory_space<vmem>>, vector<1x4x256xf32>
    %1 = vector.shape_cast %0 : vector<1x4x256xf32> to vector<4x256xf32>
    %c0_2 = arith.constant 0 : index
    %c0_3 = arith.constant 0 : index
    %2 = vector.load %arg6[%c0_2, %c0_3] : memref<32x16xf32, #tpu.memory_space<vmem>>, vector<32x16xf32>
    %c0_4 = arith.constant 0 : index
    %c0_5 = arith.constant 0 : index
    %3 = vector.load %arg3[%c0_4, %c0_5] : memref<48x4xf32, #tpu.memory_space<vmem>>, vector<48x4xf32>
    %cst = arith.constant dense<0.000000e+00> : vector<48x256xf32>
    %4 = tpu.matmul %3, %1, %cst {dimension_numbers = #tpu.dot_dimension_numbers<[1], [0], [0], [1], [0, 0, 1, 1], [], []>} : vector<48x4xf32>, vector<4x256xf32>, vector<48x256xf32> -> vector<48x256xf32>
    %c0_6 = arith.constant 0 : index
    %c0_7 = arith.constant 0 : index
    %c0_8 = arith.constant 0 : index
    %5 = vector.load %arg5[%c0_6, %c0_7, %c0_8] : memref<8x48x1xf32, #tpu.memory_space<vmem>>, vector<1x48x1xf32>
    %6 = vector.shape_cast %5 : vector<1x48x1xf32> to vector<48x1xf32>
    %7 = vector.broadcast %6 : vector<48x1xf32> to vector<48x256xf32>
    %8 = arith.addf %4, %7 : vector<48x256xf32>
    %9 = vector.extract_strided_slice %8 {offsets = [0, 0], sizes = [32, 256], strides = [1, 1]} : vector<48x256xf32> to vector<32x256xf32>
    %10 = vector.extract_strided_slice %8 {offsets = [32, 0], sizes = [16, 256], strides = [1, 1]} : vector<48x256xf32> to vector<16x256xf32>
    %cst_9 = arith.constant dense<0xFF800000> : vector<256xf32>
    %11 = vector.multi_reduction <maximumf>, %10, %cst_9 [0] : vector<16x256xf32> to vector<256xf32>
    %12 = vector.shape_cast %11 : vector<256xf32> to vector<1x256xf32>
    %13 = vector.broadcast %12 : vector<1x256xf32> to vector<16x256xf32>
    %14 = arith.subf %10, %13 : vector<16x256xf32>
    %15 = math.exp %14 : vector<16x256xf32>
    %cst_10 = arith.constant dense<0.000000e+00> : vector<256xf32>
    %16 = vector.multi_reduction <add>, %15, %cst_10 [0] : vector<16x256xf32> to vector<256xf32>
    %17 = vector.shape_cast %16 : vector<256xf32> to vector<1x256xf32>
    %18 = tpu.reciprocal %17 {approx = true} : vector<1x256xf32> -> vector<1x256xf32>
    %19 = vector.broadcast %18 : vector<1x256xf32> to vector<16x256xf32>
    %20 = arith.mulf %15, %19 : vector<16x256xf32>
    %cst_11 = arith.constant dense<0.000000e+00> : vector<32x256xf32>
    %21 = tpu.matmul %2, %20, %cst_11 {dimension_numbers = #tpu.dot_dimension_numbers<[1], [0], [0], [1], [0, 0, 1, 1], [], []>} : vector<32x16xf32>, vector<16x256xf32>, vector<32x256xf32> -> vector<32x256xf32>
    %22 = arith.addf %9, %21 : vector<32x256xf32>
    %cst_12 = arith.constant 0.000000e+00 : f32
    %23 = vector.broadcast %cst_12 : f32 to vector<32x256xf32>
    %24 = arith.maximumf %22, %23 : vector<32x256xf32>
    %c0_13 = arith.constant 0 : index
    %c0_14 = arith.constant 0 : index
    %c0_15 = arith.constant 0 : index
    %25 = vector.load %arg4[%c0_13, %c0_14, %c0_15] : memref<7x48x32xf32, #tpu.memory_space<vmem>>, vector<1x48x32xf32>
    %26 = vector.shape_cast %25 : vector<1x48x32xf32> to vector<48x32xf32>
    %cst_16 = arith.constant dense<0.000000e+00> : vector<48x256xf32>
    %27 = tpu.matmul %26, %24, %cst_16 {dimension_numbers = #tpu.dot_dimension_numbers<[1], [0], [0], [1], [0, 0, 1, 1], [], []>} : vector<48x32xf32>, vector<32x256xf32>, vector<48x256xf32> -> vector<48x256xf32>
    %c1 = arith.constant 1 : index
    %c0_17 = arith.constant 0 : index
    %c0_18 = arith.constant 0 : index
    %28 = vector.load %arg5[%c1, %c0_17, %c0_18] : memref<8x48x1xf32, #tpu.memory_space<vmem>>, vector<1x48x1xf32>
    %29 = vector.shape_cast %28 : vector<1x48x1xf32> to vector<48x1xf32>
    %30 = vector.broadcast %29 : vector<48x1xf32> to vector<48x256xf32>
    %31 = arith.addf %27, %30 : vector<48x256xf32>
    %32 = vector.extract_strided_slice %31 {offsets = [0, 0], sizes = [32, 256], strides = [1, 1]} : vector<48x256xf32> to vector<32x256xf32>
    %33 = vector.extract_strided_slice %31 {offsets = [32, 0], sizes = [16, 256], strides = [1, 1]} : vector<48x256xf32> to vector<16x256xf32>
    %cst_19 = arith.constant dense<0xFF800000> : vector<256xf32>
    %34 = vector.multi_reduction <maximumf>, %33, %cst_19 [0] : vector<16x256xf32> to vector<256xf32>
    %35 = vector.shape_cast %34 : vector<256xf32> to vector<1x256xf32>
    %36 = vector.broadcast %35 : vector<1x256xf32> to vector<16x256xf32>
    %37 = arith.subf %33, %36 : vector<16x256xf32>
    %38 = math.exp %37 : vector<16x256xf32>
    %cst_20 = arith.constant dense<0.000000e+00> : vector<256xf32>
    %39 = vector.multi_reduction <add>, %38, %cst_20 [0] : vector<16x256xf32> to vector<256xf32>
    %40 = vector.shape_cast %39 : vector<256xf32> to vector<1x256xf32>
    %41 = tpu.reciprocal %40 {approx = true} : vector<1x256xf32> -> vector<1x256xf32>
    %42 = vector.broadcast %41 : vector<1x256xf32> to vector<16x256xf32>
    %43 = arith.mulf %38, %42 : vector<16x256xf32>
    %cst_21 = arith.constant dense<0.000000e+00> : vector<32x256xf32>
    %44 = tpu.matmul %2, %43, %cst_21 {dimension_numbers = #tpu.dot_dimension_numbers<[1], [0], [0], [1], [0, 0, 1, 1], [], []>} : vector<32x16xf32>, vector<16x256xf32>, vector<32x256xf32> -> vector<32x256xf32>
    %45 = arith.addf %32, %44 : vector<32x256xf32>
    %cst_22 = arith.constant 0.000000e+00 : f32
    %46 = vector.broadcast %cst_22 : f32 to vector<32x256xf32>
    %47 = arith.maximumf %45, %46 : vector<32x256xf32>
    %c1_23 = arith.constant 1 : index
    %c0_24 = arith.constant 0 : index
    %c0_25 = arith.constant 0 : index
    %48 = vector.load %arg4[%c1_23, %c0_24, %c0_25] : memref<7x48x32xf32, #tpu.memory_space<vmem>>, vector<1x48x32xf32>
    %49 = vector.shape_cast %48 : vector<1x48x32xf32> to vector<48x32xf32>
    %cst_26 = arith.constant dense<0.000000e+00> : vector<48x256xf32>
    %50 = tpu.matmul %49, %47, %cst_26 {dimension_numbers = #tpu.dot_dimension_numbers<[1], [0], [0], [1], [0, 0, 1, 1], [], []>} : vector<48x32xf32>, vector<32x256xf32>, vector<48x256xf32> -> vector<48x256xf32>
    %c2 = arith.constant 2 : index
    %c0_27 = arith.constant 0 : index
    %c0_28 = arith.constant 0 : index
    %51 = vector.load %arg5[%c2, %c0_27, %c0_28] : memref<8x48x1xf32, #tpu.memory_space<vmem>>, vector<1x48x1xf32>
    %52 = vector.shape_cast %51 : vector<1x48x1xf32> to vector<48x1xf32>
    %53 = vector.broadcast %52 : vector<48x1xf32> to vector<48x256xf32>
    %54 = arith.addf %50, %53 : vector<48x256xf32>
    %55 = vector.extract_strided_slice %54 {offsets = [0, 0], sizes = [32, 256], strides = [1, 1]} : vector<48x256xf32> to vector<32x256xf32>
    %56 = vector.extract_strided_slice %54 {offsets = [32, 0], sizes = [16, 256], strides = [1, 1]} : vector<48x256xf32> to vector<16x256xf32>
    %cst_29 = arith.constant dense<0xFF800000> : vector<256xf32>
    %57 = vector.multi_reduction <maximumf>, %56, %cst_29 [0] : vector<16x256xf32> to vector<256xf32>
    %58 = vector.shape_cast %57 : vector<256xf32> to vector<1x256xf32>
    %59 = vector.broadcast %58 : vector<1x256xf32> to vector<16x256xf32>
    %60 = arith.subf %56, %59 : vector<16x256xf32>
    %61 = math.exp %60 : vector<16x256xf32>
    %cst_30 = arith.constant dense<0.000000e+00> : vector<256xf32>
    %62 = vector.multi_reduction <add>, %61, %cst_30 [0] : vector<16x256xf32> to vector<256xf32>
    %63 = vector.shape_cast %62 : vector<256xf32> to vector<1x256xf32>
    %64 = tpu.reciprocal %63 {approx = true} : vector<1x256xf32> -> vector<1x256xf32>
    %65 = vector.broadcast %64 : vector<1x256xf32> to vector<16x256xf32>
    %66 = arith.mulf %61, %65 : vector<16x256xf32>
    %cst_31 = arith.constant dense<0.000000e+00> : vector<32x256xf32>
    %67 = tpu.matmul %2, %66, %cst_31 {dimension_numbers = #tpu.dot_dimension_numbers<[1], [0], [0], [1], [0, 0, 1, 1], [], []>} : vector<32x16xf32>, vector<16x256xf32>, vector<32x256xf32> -> vector<32x256xf32>
    %68 = arith.addf %55, %67 : vector<32x256xf32>
    %cst_32 = arith.constant 0.000000e+00 : f32
    %69 = vector.broadcast %cst_32 : f32 to vector<32x256xf32>
    %70 = arith.maximumf %68, %69 : vector<32x256xf32>
    %c2_33 = arith.constant 2 : index
    %c0_34 = arith.constant 0 : index
    %c0_35 = arith.constant 0 : index
    %71 = vector.load %arg4[%c2_33, %c0_34, %c0_35] : memref<7x48x32xf32, #tpu.memory_space<vmem>>, vector<1x48x32xf32>
    %72 = vector.shape_cast %71 : vector<1x48x32xf32> to vector<48x32xf32>
    %cst_36 = arith.constant dense<0.000000e+00> : vector<48x256xf32>
    %73 = tpu.matmul %72, %70, %cst_36 {dimension_numbers = #tpu.dot_dimension_numbers<[1], [0], [0], [1], [0, 0, 1, 1], [], []>} : vector<48x32xf32>, vector<32x256xf32>, vector<48x256xf32> -> vector<48x256xf32>
    %c3 = arith.constant 3 : index
    %c0_37 = arith.constant 0 : index
    %c0_38 = arith.constant 0 : index
    %74 = vector.load %arg5[%c3, %c0_37, %c0_38] : memref<8x48x1xf32, #tpu.memory_space<vmem>>, vector<1x48x1xf32>
    %75 = vector.shape_cast %74 : vector<1x48x1xf32> to vector<48x1xf32>
    %76 = vector.broadcast %75 : vector<48x1xf32> to vector<48x256xf32>
    %77 = arith.addf %73, %76 : vector<48x256xf32>
    %78 = vector.extract_strided_slice %77 {offsets = [0, 0], sizes = [32, 256], strides = [1, 1]} : vector<48x256xf32> to vector<32x256xf32>
    %79 = vector.extract_strided_slice %77 {offsets = [32, 0], sizes = [16, 256], strides = [1, 1]} : vector<48x256xf32> to vector<16x256xf32>
    %cst_39 = arith.constant dense<0xFF800000> : vector<256xf32>
    %80 = vector.multi_reduction <maximumf>, %79, %cst_39 [0] : vector<16x256xf32> to vector<256xf32>
    %81 = vector.shape_cast %80 : vector<256xf32> to vector<1x256xf32>
    %82 = vector.broadcast %81 : vector<1x256xf32> to vector<16x256xf32>
    %83 = arith.subf %79, %82 : vector<16x256xf32>
    %84 = math.exp %83 : vector<16x256xf32>
    %cst_40 = arith.constant dense<0.000000e+00> : vector<256xf32>
    %85 = vector.multi_reduction <add>, %84, %cst_40 [0] : vector<16x256xf32> to vector<256xf32>
    %86 = vector.shape_cast %85 : vector<256xf32> to vector<1x256xf32>
    %87 = tpu.reciprocal %86 {approx = true} : vector<1x256xf32> -> vector<1x256xf32>
    %88 = vector.broadcast %87 : vector<1x256xf32> to vector<16x256xf32>
    %89 = arith.mulf %84, %88 : vector<16x256xf32>
    %cst_41 = arith.constant dense<0.000000e+00> : vector<32x256xf32>
    %90 = tpu.matmul %2, %89, %cst_41 {dimension_numbers = #tpu.dot_dimension_numbers<[1], [0], [0], [1], [0, 0, 1, 1], [], []>} : vector<32x16xf32>, vector<16x256xf32>, vector<32x256xf32> -> vector<32x256xf32>
    %91 = arith.addf %78, %90 : vector<32x256xf32>
    %cst_42 = arith.constant 0.000000e+00 : f32
    %92 = vector.broadcast %cst_42 : f32 to vector<32x256xf32>
    %93 = arith.maximumf %91, %92 : vector<32x256xf32>
    %c3_43 = arith.constant 3 : index
    %c0_44 = arith.constant 0 : index
    %c0_45 = arith.constant 0 : index
    %94 = vector.load %arg4[%c3_43, %c0_44, %c0_45] : memref<7x48x32xf32, #tpu.memory_space<vmem>>, vector<1x48x32xf32>
    %95 = vector.shape_cast %94 : vector<1x48x32xf32> to vector<48x32xf32>
    %cst_46 = arith.constant dense<0.000000e+00> : vector<48x256xf32>
    %96 = tpu.matmul %95, %93, %cst_46 {dimension_numbers = #tpu.dot_dimension_numbers<[1], [0], [0], [1], [0, 0, 1, 1], [], []>} : vector<48x32xf32>, vector<32x256xf32>, vector<48x256xf32> -> vector<48x256xf32>
    %c4 = arith.constant 4 : index
    %c0_47 = arith.constant 0 : index
    %c0_48 = arith.constant 0 : index
    %97 = vector.load %arg5[%c4, %c0_47, %c0_48] : memref<8x48x1xf32, #tpu.memory_space<vmem>>, vector<1x48x1xf32>
    %98 = vector.shape_cast %97 : vector<1x48x1xf32> to vector<48x1xf32>
    %99 = vector.broadcast %98 : vector<48x1xf32> to vector<48x256xf32>
    %100 = arith.addf %96, %99 : vector<48x256xf32>
    %101 = vector.extract_strided_slice %100 {offsets = [0, 0], sizes = [32, 256], strides = [1, 1]} : vector<48x256xf32> to vector<32x256xf32>
    %102 = vector.extract_strided_slice %100 {offsets = [32, 0], sizes = [16, 256], strides = [1, 1]} : vector<48x256xf32> to vector<16x256xf32>
    %cst_49 = arith.constant dense<0xFF800000> : vector<256xf32>
    %103 = vector.multi_reduction <maximumf>, %102, %cst_49 [0] : vector<16x256xf32> to vector<256xf32>
    %104 = vector.shape_cast %103 : vector<256xf32> to vector<1x256xf32>
    %105 = vector.broadcast %104 : vector<1x256xf32> to vector<16x256xf32>
    %106 = arith.subf %102, %105 : vector<16x256xf32>
    %107 = math.exp %106 : vector<16x256xf32>
    %cst_50 = arith.constant dense<0.000000e+00> : vector<256xf32>
    %108 = vector.multi_reduction <add>, %107, %cst_50 [0] : vector<16x256xf32> to vector<256xf32>
    %109 = vector.shape_cast %108 : vector<256xf32> to vector<1x256xf32>
    %110 = tpu.reciprocal %109 {approx = true} : vector<1x256xf32> -> vector<1x256xf32>
    %111 = vector.broadcast %110 : vector<1x256xf32> to vector<16x256xf32>
    %112 = arith.mulf %107, %111 : vector<16x256xf32>
    %cst_51 = arith.constant dense<0.000000e+00> : vector<32x256xf32>
    %113 = tpu.matmul %2, %112, %cst_51 {dimension_numbers = #tpu.dot_dimension_numbers<[1], [0], [0], [1], [0, 0, 1, 1], [], []>} : vector<32x16xf32>, vector<16x256xf32>, vector<32x256xf32> -> vector<32x256xf32>
    %114 = arith.addf %101, %113 : vector<32x256xf32>
    %cst_52 = arith.constant 0.000000e+00 : f32
    %115 = vector.broadcast %cst_52 : f32 to vector<32x256xf32>
    %116 = arith.maximumf %114, %115 : vector<32x256xf32>
    %c4_53 = arith.constant 4 : index
    %c0_54 = arith.constant 0 : index
    %c0_55 = arith.constant 0 : index
    %117 = vector.load %arg4[%c4_53, %c0_54, %c0_55] : memref<7x48x32xf32, #tpu.memory_space<vmem>>, vector<1x48x32xf32>
    %118 = vector.shape_cast %117 : vector<1x48x32xf32> to vector<48x32xf32>
    %cst_56 = arith.constant dense<0.000000e+00> : vector<48x256xf32>
    %119 = tpu.matmul %118, %116, %cst_56 {dimension_numbers = #tpu.dot_dimension_numbers<[1], [0], [0], [1], [0, 0, 1, 1], [], []>} : vector<48x32xf32>, vector<32x256xf32>, vector<48x256xf32> -> vector<48x256xf32>
    %c5 = arith.constant 5 : index
    %c0_57 = arith.constant 0 : index
    %c0_58 = arith.constant 0 : index
    %120 = vector.load %arg5[%c5, %c0_57, %c0_58] : memref<8x48x1xf32, #tpu.memory_space<vmem>>, vector<1x48x1xf32>
    %121 = vector.shape_cast %120 : vector<1x48x1xf32> to vector<48x1xf32>
    %122 = vector.broadcast %121 : vector<48x1xf32> to vector<48x256xf32>
    %123 = arith.addf %119, %122 : vector<48x256xf32>
    %124 = vector.extract_strided_slice %123 {offsets = [0, 0], sizes = [32, 256], strides = [1, 1]} : vector<48x256xf32> to vector<32x256xf32>
    %125 = vector.extract_strided_slice %123 {offsets = [32, 0], sizes = [16, 256], strides = [1, 1]} : vector<48x256xf32> to vector<16x256xf32>
    %cst_59 = arith.constant dense<0xFF800000> : vector<256xf32>
    %126 = vector.multi_reduction <maximumf>, %125, %cst_59 [0] : vector<16x256xf32> to vector<256xf32>
    %127 = vector.shape_cast %126 : vector<256xf32> to vector<1x256xf32>
    %128 = vector.broadcast %127 : vector<1x256xf32> to vector<16x256xf32>
    %129 = arith.subf %125, %128 : vector<16x256xf32>
    %130 = math.exp %129 : vector<16x256xf32>
    %cst_60 = arith.constant dense<0.000000e+00> : vector<256xf32>
    %131 = vector.multi_reduction <add>, %130, %cst_60 [0] : vector<16x256xf32> to vector<256xf32>
    %132 = vector.shape_cast %131 : vector<256xf32> to vector<1x256xf32>
    %133 = tpu.reciprocal %132 {approx = true} : vector<1x256xf32> -> vector<1x256xf32>
    %134 = vector.broadcast %133 : vector<1x256xf32> to vector<16x256xf32>
    %135 = arith.mulf %130, %134 : vector<16x256xf32>
    %cst_61 = arith.constant dense<0.000000e+00> : vector<32x256xf32>
    %136 = tpu.matmul %2, %135, %cst_61 {dimension_numbers = #tpu.dot_dimension_numbers<[1], [0], [0], [1], [0, 0, 1, 1], [], []>} : vector<32x16xf32>, vector<16x256xf32>, vector<32x256xf32> -> vector<32x256xf32>
    %137 = arith.addf %124, %136 : vector<32x256xf32>
    %cst_62 = arith.constant 0.000000e+00 : f32
    %138 = vector.broadcast %cst_62 : f32 to vector<32x256xf32>
    %139 = arith.maximumf %137, %138 : vector<32x256xf32>
    %c5_63 = arith.constant 5 : index
    %c0_64 = arith.constant 0 : index
    %c0_65 = arith.constant 0 : index
    %140 = vector.load %arg4[%c5_63, %c0_64, %c0_65] : memref<7x48x32xf32, #tpu.memory_space<vmem>>, vector<1x48x32xf32>
    %141 = vector.shape_cast %140 : vector<1x48x32xf32> to vector<48x32xf32>
    %cst_66 = arith.constant dense<0.000000e+00> : vector<48x256xf32>
    %142 = tpu.matmul %141, %139, %cst_66 {dimension_numbers = #tpu.dot_dimension_numbers<[1], [0], [0], [1], [0, 0, 1, 1], [], []>} : vector<48x32xf32>, vector<32x256xf32>, vector<48x256xf32> -> vector<48x256xf32>
    %c6 = arith.constant 6 : index
    %c0_67 = arith.constant 0 : index
    %c0_68 = arith.constant 0 : index
    %143 = vector.load %arg5[%c6, %c0_67, %c0_68] : memref<8x48x1xf32, #tpu.memory_space<vmem>>, vector<1x48x1xf32>
    %144 = vector.shape_cast %143 : vector<1x48x1xf32> to vector<48x1xf32>
    %145 = vector.broadcast %144 : vector<48x1xf32> to vector<48x256xf32>
    %146 = arith.addf %142, %145 : vector<48x256xf32>
    %147 = vector.extract_strided_slice %146 {offsets = [0, 0], sizes = [32, 256], strides = [1, 1]} : vector<48x256xf32> to vector<32x256xf32>
    %148 = vector.extract_strided_slice %146 {offsets = [32, 0], sizes = [16, 256], strides = [1, 1]} : vector<48x256xf32> to vector<16x256xf32>
    %cst_69 = arith.constant dense<0xFF800000> : vector<256xf32>
    %149 = vector.multi_reduction <maximumf>, %148, %cst_69 [0] : vector<16x256xf32> to vector<256xf32>
    %150 = vector.shape_cast %149 : vector<256xf32> to vector<1x256xf32>
    %151 = vector.broadcast %150 : vector<1x256xf32> to vector<16x256xf32>
    %152 = arith.subf %148, %151 : vector<16x256xf32>
    %153 = math.exp %152 : vector<16x256xf32>
    %cst_70 = arith.constant dense<0.000000e+00> : vector<256xf32>
    %154 = vector.multi_reduction <add>, %153, %cst_70 [0] : vector<16x256xf32> to vector<256xf32>
    %155 = vector.shape_cast %154 : vector<256xf32> to vector<1x256xf32>
    %156 = tpu.reciprocal %155 {approx = true} : vector<1x256xf32> -> vector<1x256xf32>
    %157 = vector.broadcast %156 : vector<1x256xf32> to vector<16x256xf32>
    %158 = arith.mulf %153, %157 : vector<16x256xf32>
    %cst_71 = arith.constant dense<0.000000e+00> : vector<32x256xf32>
    %159 = tpu.matmul %2, %158, %cst_71 {dimension_numbers = #tpu.dot_dimension_numbers<[1], [0], [0], [1], [0, 0, 1, 1], [], []>} : vector<32x16xf32>, vector<16x256xf32>, vector<32x256xf32> -> vector<32x256xf32>
    %160 = arith.addf %147, %159 : vector<32x256xf32>
    %cst_72 = arith.constant 0.000000e+00 : f32
    %161 = vector.broadcast %cst_72 : f32 to vector<32x256xf32>
    %162 = arith.maximumf %160, %161 : vector<32x256xf32>
    %c6_73 = arith.constant 6 : index
    %c0_74 = arith.constant 0 : index
    %c0_75 = arith.constant 0 : index
    %163 = vector.load %arg4[%c6_73, %c0_74, %c0_75] : memref<7x48x32xf32, #tpu.memory_space<vmem>>, vector<1x48x32xf32>
    %164 = vector.shape_cast %163 : vector<1x48x32xf32> to vector<48x32xf32>
    %cst_76 = arith.constant dense<0.000000e+00> : vector<48x256xf32>
    %165 = tpu.matmul %164, %162, %cst_76 {dimension_numbers = #tpu.dot_dimension_numbers<[1], [0], [0], [1], [0, 0, 1, 1], [], []>} : vector<48x32xf32>, vector<32x256xf32>, vector<48x256xf32> -> vector<48x256xf32>
    %c7 = arith.constant 7 : index
    %c0_77 = arith.constant 0 : index
    %c0_78 = arith.constant 0 : index
    %166 = vector.load %arg5[%c7, %c0_77, %c0_78] : memref<8x48x1xf32, #tpu.memory_space<vmem>>, vector<1x48x1xf32>
    %167 = vector.shape_cast %166 : vector<1x48x1xf32> to vector<48x1xf32>
    %168 = vector.broadcast %167 : vector<48x1xf32> to vector<48x256xf32>
    %169 = arith.addf %165, %168 : vector<48x256xf32>
    %170 = vector.extract_strided_slice %169 {offsets = [0, 0], sizes = [32, 256], strides = [1, 1]} : vector<48x256xf32> to vector<32x256xf32>
    %171 = vector.extract_strided_slice %169 {offsets = [32, 0], sizes = [16, 256], strides = [1, 1]} : vector<48x256xf32> to vector<16x256xf32>
    %cst_79 = arith.constant dense<0xFF800000> : vector<256xf32>
    %172 = vector.multi_reduction <maximumf>, %171, %cst_79 [0] : vector<16x256xf32> to vector<256xf32>
    %173 = vector.shape_cast %172 : vector<256xf32> to vector<1x256xf32>
    %174 = vector.broadcast %173 : vector<1x256xf32> to vector<16x256xf32>
    %175 = arith.subf %171, %174 : vector<16x256xf32>
    %176 = math.exp %175 : vector<16x256xf32>
    %cst_80 = arith.constant dense<0.000000e+00> : vector<256xf32>
    %177 = vector.multi_reduction <add>, %176, %cst_80 [0] : vector<16x256xf32> to vector<256xf32>
    %178 = vector.shape_cast %177 : vector<256xf32> to vector<1x256xf32>
    %179 = tpu.reciprocal %178 {approx = true} : vector<1x256xf32> -> vector<1x256xf32>
    %180 = vector.broadcast %179 : vector<1x256xf32> to vector<16x256xf32>
    %181 = arith.mulf %176, %180 : vector<16x256xf32>
    %cst_81 = arith.constant dense<0.000000e+00> : vector<32x256xf32>
    %182 = tpu.matmul %2, %181, %cst_81 {dimension_numbers = #tpu.dot_dimension_numbers<[1], [0], [0], [1], [0, 0, 1, 1], [], []>} : vector<32x16xf32>, vector<16x256xf32>, vector<32x256xf32> -> vector<32x256xf32>
    %183 = arith.addf %170, %182 : vector<32x256xf32>
    %cst_82 = arith.constant 0.000000e+00 : f32
    %184 = vector.broadcast %cst_82 : f32 to vector<32x256xf32>
    %185 = arith.maximumf %183, %184 : vector<32x256xf32>
    %c0_83 = arith.constant 0 : index
    %c0_84 = arith.constant 0 : index
    %186 = vector.load %arg7[%c0_83, %c0_84] : memref<3x32xf32, #tpu.memory_space<vmem>>, vector<3x32xf32>
    %cst_85 = arith.constant dense<0.000000e+00> : vector<3x256xf32>
    %187 = tpu.matmul %186, %185, %cst_85 {dimension_numbers = #tpu.dot_dimension_numbers<[1], [0], [0], [1], [0, 0, 1, 1], [], []>} : vector<3x32xf32>, vector<32x256xf32>, vector<3x256xf32> -> vector<3x256xf32>
    %c0_86 = arith.constant 0 : index
    %c0_87 = arith.constant 0 : index
    %188 = vector.load %arg8[%c0_86, %c0_87] : memref<3x1xf32, #tpu.memory_space<vmem>>, vector<3x1xf32>
    %189 = vector.broadcast %188 : vector<3x1xf32> to vector<3x256xf32>
    %190 = arith.addf %187, %189 : vector<3x256xf32>
    %c0_88 = arith.constant 0 : index
    %c0_89 = arith.constant 0 : index
    %c0_90 = arith.constant 0 : index
    %191 = vector.load %arg9[%c0_88, %c0_89, %c0_90] : memref<1x3x256xf32, #tpu.memory_space<vmem>>, vector<1x3x256xf32>
    %192 = vector.shape_cast %191 : vector<1x3x256xf32> to vector<3x256xf32>
    %193 = vector.shape_cast %190 : vector<3x256xf32> to vector<1x3x256xf32>
    tpu.vector_store %arg9[%c0_88, %c0_89, %c0_90], %193 {strides = array<i32>} : memref<1x3x256xf32, #tpu.memory_space<vmem>>, vector<1x3x256xf32>,
    return
  }
  func.func @transform_0(%arg0: i32, %arg1: i32) -> (i32, i32, i32) {
    %c0_i32 = arith.constant 0 : i32
    %c0_i32_0 = arith.constant 0 : i32
    return %arg0, %c0_i32, %arg1 : i32, i32, i32
  }
  func.func @transform_1(%arg0: i32, %arg1: i32) -> (i32, i32) {
    %c0_i32 = arith.constant 0 : i32
    %c0_i32_0 = arith.constant 0 : i32
    %c0_i32_1 = arith.constant 0 : i32
    return %c0_i32, %c0_i32_0 : i32, i32
  }
  func.func @transform_2(%arg0: i32, %arg1: i32) -> (i32, i32, i32) {
    %c0_i32 = arith.constant 0 : i32
    %c0_i32_0 = arith.constant 0 : i32
    %c0_i32_1 = arith.constant 0 : i32
    %c0_i32_2 = arith.constant 0 : i32
    return %c0_i32, %c0_i32_0, %c0_i32_1 : i32, i32, i32
  }
  func.func @transform_3(%arg0: i32, %arg1: i32) -> (i32, i32, i32) {
    %c0_i32 = arith.constant 0 : i32
    %c0_i32_0 = arith.constant 0 : i32
    %c0_i32_1 = arith.constant 0 : i32
    %c0_i32_2 = arith.constant 0 : i32
    return %c0_i32, %c0_i32_0, %c0_i32_1 : i32, i32, i32
  }
  func.func @transform_4(%arg0: i32, %arg1: i32) -> (i32, i32) {
    %c0_i32 = arith.constant 0 : i32
    %c0_i32_0 = arith.constant 0 : i32
    %c0_i32_1 = arith.constant 0 : i32
    return %c0_i32, %c0_i32_0 : i32, i32
  }
  func.func @transform_5(%arg0: i32, %arg1: i32) -> (i32, i32) {
    %c0_i32 = arith.constant 0 : i32
    %c0_i32_0 = arith.constant 0 : i32
    %c0_i32_1 = arith.constant 0 : i32
    return %c0_i32, %c0_i32_0 : i32, i32
  }
  func.func @transform_6(%arg0: i32, %arg1: i32) -> (i32, i32) {
    %c0_i32 = arith.constant 0 : i32
    %c0_i32_0 = arith.constant 0 : i32
    %c0_i32_1 = arith.constant 0 : i32
    return %c0_i32, %c0_i32_0 : i32, i32
  }
  func.func @transform_7(%arg0: i32, %arg1: i32) -> (i32, i32, i32) {
    %c0_i32 = arith.constant 0 : i32
    %c0_i32_0 = arith.constant 0 : i32
    return %arg0, %c0_i32, %arg1 : i32, i32, i32
  }
}

</mosaic_0001>

<llo_original>
// kernel: tpu_custom_call.1
$region0: #{tpu_custom_call.1}
  #allocation0 [shape = 'u32[]', space=smem, size = 0x4, offset = 0x4, fixed_abs, tag = 'smem constant byte address 0x4 - core index']
  #allocation1 [shape = 'u32[144,128]{1,0:T(1,128)}', space=vmem, size = 0x12000, scoped, tag = 'internal scratch']
  %s0 = inlined_call_operand.vmem [shape: f32[2,4,256], index: 0, kind: input, shape index: {}]
  %s1 = inlined_call_operand.vmem [shape: f32[48,4], index: 1, kind: input, shape index: {}]
  %s2 = inlined_call_operand.vmem [shape: f32[7,48,32], index: 2, kind: input, shape index: {}]
  %s3 = inlined_call_operand.vmem [shape: f32[8,48,1], index: 3, kind: input, shape index: {}]
  %s4 = inlined_call_operand.vmem [shape: f32[32,16], index: 4, kind: input, shape index: {}]
  %s5 = inlined_call_operand.vmem [shape: f32[3,32], index: 5, kind: input, shape index: {}]
  %s6 = inlined_call_operand.vmem [shape: f32[3,1], index: 6, kind: input, shape index: {}]
  %s7 = inlined_call_operand.vmem [shape: f32[2,3,256], index: 7, kind: output, shape index: {}]
  %s8 = sld [smem:[#allocation0]]
  $region61: #{tpu_custom_call.1} parent=0
    _
  %s10 = ssub.s32 1, %s8
  %s11 = scalar_select 0, %s10, %s8
  loop: start=0, step=1, limit=4
  $region2: #{tpu_custom_call.1} parent=0 // loop_pre_header
    _
  $region3: #{tpu_custom_call.1} parent=0 // loop_header
    %s13 = sphi 0, %s17
    %p14 = scmp.ge.s32.totalorder %s13, 4
    %s20 = sphi 0, %s32
    %s21 = sphi 0, %s28
    %s22 = sphi 0, %s20
    %s23 = sphi 0, %s21
    %s24 = sphi 0, %s22
    %s25 = sphi 0, %s23
    %s37 = sphi 0, %s39
    %s40 = sphi 0, %s37
    %s41 = sphi 0, %s40
    %s57 = sphi 0, %s41
    %s61 = sphi 0, %s61
    %s63 = sphi 0, %s61
    %s64 = sphi 0, %s63
    %s78 = sphi 0, %s64
    %s82 = sphi 0, %s82
    %s84 = sphi 0, %s82
    %s85 = sphi 0, %s84
    %s99 = sphi 0, %s85
    %s103 = sphi 0, %s103
    %s105 = sphi 0, %s103
    %s106 = sphi 0, %s105
    %s120 = sphi 0, %s106
    %s124 = sphi 0, %s124
    %s126 = sphi 0, %s124
    %s127 = sphi 0, %s126
    %s141 = sphi 0, %s127
    %s145 = sphi 0, %s145
    %s147 = sphi 0, %s145
    %s148 = sphi 0, %s147
    %s162 = sphi 0, %s148
    %s166 = sphi 0, %s166
    %s168 = sphi 0, %s166
    %s169 = sphi 0, %s168
    %s183 = sphi 0, %s169
    %s191 = sphi 0, %s193
    %s194 = sphi 0, %s191
    %s195 = sphi 0, %s194
    %s211 = sphi 0, %s195
  $region4: #{tpu_custom_call.1} parent=0 // loop_header_branch
    %16 = sbr.rel (%p14) target = $region8
  $region5: #{tpu_custom_call.1} parent=0 // loop_body
    %s18 = ssub.s32 %s13, 1
    %s19 = ssub.s32 %s13, 2
    %s26 = sadd.s32 1, %s21
    %p27 = scmp.ge.s32.totalorder %s26, 1
    %s28 = scalar_select %p27, 0, %s26
    %s29 = sadd.s32 1, %s20
    %s30 = scalar_select %p27, %s29, %s20
    %p31 = scmp.ge.s32.totalorder %s30, 2
    %s32 = scalar_select %p31, 0, %s30
    %s33 = ssub.s32 %s20, %s32
    %s34 = ssub.s32 %s21, %s28
    %s35 = sor.u32 %s33, %s34
    %p36 = scmp.eq.s32.totalorder %s35, 0
    %s38 = sadd.s32 %s37, 1
    %s39 = scalar_select %p36, %s37, %s38
    %p42 = pneg %p36
    %p43 = scmp.eq.s32.totalorder %s13, 1
    %p44 = por %p42, %p43
    %p45 = scmp.ne.s32.totalorder %s37, %s40
    %p46 = scmp.eq.s32.totalorder %s13, 0
    %p47 = por %p45, %p46
    %p48 = scmp.ne.s32.totalorder %s37, %s40
    %p49 = scmp.eq.s32.totalorder %s18, 1
    %p50 = por %p48, %p49
    %p51 = scmp.ne.s32.totalorder %s40, %s41
    %p52 = scmp.eq.s32.totalorder %s18, 0
    %p53 = por %p51, %p52
    %p54 = scmp.ne.s32.totalorder %s40, %s41
    %p55 = scmp.eq.s32.totalorder %s19, 1
    %p56 = por %p54, %p55
    %p58 = scmp.ne.s32.totalorder %s41, %s57
    %p59 = scmp.eq.s32.totalorder %s19, 0
    %p60 = por %p58, %p59
    %s62 = sadd.s32 %s61, 1
    %p65 = scmp.eq.s32.totalorder %s13, 1
    %p66 = scmp.ne.s32.totalorder %s61, %s63
    %p67 = scmp.eq.s32.totalorder %s13, 0
    %p68 = por %p66, %p67
    %p69 = scmp.ne.s32.totalorder %s61, %s63
    %p70 = scmp.eq.s32.totalorder %s18, 1
    %p71 = por %p69, %p70
    %p72 = scmp.ne.s32.totalorder %s63, %s64
    %p73 = scmp.eq.s32.totalorder %s18, 0
    %p74 = por %p72, %p73
    %p75 = scmp.ne.s32.totalorder %s63, %s64
    %p76 = scmp.eq.s32.totalorder %s19, 1
    %p77 = por %p75, %p76
    %p79 = scmp.ne.s32.totalorder %s64, %s78
    %p80 = scmp.eq.s32.totalorder %s19, 0
    %p81 = por %p79, %p80
    %s83 = sadd.s32 %s82, 1
    %p86 = scmp.eq.s32.totalorder %s13, 1
    %p87 = scmp.ne.s32.totalorder %s82, %s84
    %p88 = scmp.eq.s32.totalorder %s13, 0
    %p89 = por %p87, %p88
    %p90 = scmp.ne.s32.totalorder %s82, %s84
    %p91 = scmp.eq.s32.totalorder %s18, 1
    %p92 = por %p90, %p91
    %p93 = scmp.ne.s32.totalorder %s84, %s85
    %p94 = scmp.eq.s32.totalorder %s18, 0
    %p95 = por %p93, %p94
    %p96 = scmp.ne.s32.totalorder %s84, %s85
    %p97 = scmp.eq.s32.totalorder %s19, 1
    %p98 = por %p96, %p97
    %p100 = scmp.ne.s32.totalorder %s85, %s99
    %p101 = scmp.eq.s32.totalorder %s19, 0
    %p102 = por %p100, %p101
    %s104 = sadd.s32 %s103, 1
    %p107 = scmp.eq.s32.totalorder %s13, 1
    %p108 = scmp.ne.s32.totalorder %s103, %s105
    %p109 = scmp.eq.s32.totalorder %s13, 0
    %p110 = por %p108, %p109
    %p111 = scmp.ne.s32.totalorder %s103, %s105
    %p112 = scmp.eq.s32.totalorder %s18, 1
    %p113 = por %p111, %p112
    %p114 = scmp.ne.s32.totalorder %s105, %s106
    %p115 = scmp.eq.s32.totalorder %s18, 0
    %p116 = por %p114, %p115
    %p117 = scmp.ne.s32.totalorder %s105, %s106
    %p118 = scmp.eq.s32.totalorder %s19, 1
    %p119 = por %p117, %p118
    %p121 = scmp.ne.s32.totalorder %s106, %s120
    %p122 = scmp.eq.s32.totalorder %s19, 0
    %p123 = por %p121, %p122
    %s125 = sadd.s32 %s124, 1
    %p128 = scmp.eq.s32.totalorder %s13, 1
    %p129 = scmp.ne.s32.totalorder %s124, %s126
    %p130 = scmp.eq.s32.totalorder %s13, 0
    %p131 = por %p129, %p130
    %p132 = scmp.ne.s32.totalorder %s124, %s126
    %p133 = scmp.eq.s32.totalorder %s18, 1
    %p134 = por %p132, %p133
    %p135 = scmp.ne.s32.totalorder %s126, %s127
    %p136 = scmp.eq.s32.totalorder %s18, 0
    %p137 = por %p135, %p136
    %p138 = scmp.ne.s32.totalorder %s126, %s127
    %p139 = scmp.eq.s32.totalorder %s19, 1
    %p140 = por %p138, %p139
    %p142 = scmp.ne.s32.totalorder %s127, %s141
    %p143 = scmp.eq.s32.totalorder %s19, 0
    %p144 = por %p142, %p143
    %s146 = sadd.s32 %s145, 1
    %p149 = scmp.eq.s32.totalorder %s13, 1
    %p150 = scmp.ne.s32.totalorder %s145, %s147
    %p151 = scmp.eq.s32.totalorder %s13, 0
    %p152 = por %p150, %p151
    %p153 = scmp.ne.s32.totalorder %s145, %s147
    %p154 = scmp.eq.s32.totalorder %s18, 1
    %p155 = por %p153, %p154
    %p156 = scmp.ne.s32.totalorder %s147, %s148
    %p157 = scmp.eq.s32.totalorder %s18, 0
    %p158 = por %p156, %p157
    %p159 = scmp.ne.s32.totalorder %s147, %s148
    %p160 = scmp.eq.s32.totalorder %s19, 1
    %p161 = por %p159, %p160
    %p163 = scmp.ne.s32.totalorder %s148, %s162
    %p164 = scmp.eq.s32.totalorder %s19, 0
    %p165 = por %p163, %p164
    %s167 = sadd.s32 %s166, 1
    %p170 = scmp.eq.s32.totalorder %s13, 1
    %p171 = scmp.ne.s32.totalorder %s166, %s168
    %p172 = scmp.eq.s32.totalorder %s13, 0
    %p173 = por %p171, %p172
    %p174 = scmp.ne.s32.totalorder %s166, %s168
    %p175 = scmp.eq.s32.totalorder %s18, 1
    %p176 = por %p174, %p175
    %p177 = scmp.ne.s32.totalorder %s168, %s169
    %p178 = scmp.eq.s32.totalorder %s18, 0
    %p179 = por %p177, %p178
    %p180 = scmp.ne.s32.totalorder %s168, %s169
    %p181 = scmp.eq.s32.totalorder %s19, 1
    %p182 = por %p180, %p181
    %p184 = scmp.ne.s32.totalorder %s169, %s183
    %p185 = scmp.eq.s32.totalorder %s19, 0
    %p186 = por %p184, %p185
    %s187 = ssub.s32 %s20, %s32
    %s188 = ssub.s32 %s21, %s28
    %s189 = sor.u32 %s187, %s188
    %p190 = scmp.eq.s32.totalorder %s189, 0
    %s192 = sadd.s32 %s191, 1
    %s193 = scalar_select %p190, %s191, %s192
    %p196 = pneg %p190
    %p197 = scmp.eq.s32.totalorder %s13, 1
    %p198 = por %p196, %p197
    %p199 = scmp.ne.s32.totalorder %s191, %s194
    %p200 = scmp.eq.s32.totalorder %s13, 0
    %p201 = por %p199, %p200
    %p202 = scmp.ne.s32.totalorder %s191, %s194
    %p203 = scmp.eq.s32.totalorder %s18, 1
    %p204 = por %p202, %p203
    %p205 = scmp.ne.s32.totalorder %s194, %s195
    %p206 = scmp.eq.s32.totalorder %s18, 0
    %p207 = por %p205, %p206
    %p208 = scmp.ne.s32.totalorder %s194, %s195
    %p209 = scmp.eq.s32.totalorder %s19, 1
    %p210 = por %p208, %p209
    %p212 = scmp.ne.s32.totalorder %s195, %s211
    %p213 = scmp.eq.s32.totalorder %s19, 0
    %p214 = por %p212, %p213
    %p215 = scmp.le.s32.totalorder 1, %s13
    %p216 = scmp.lt.s32.totalorder %s13, 3
    %p217 = pnand %p215, %p216
    %p218 = pneg %p217
    // Predicated region
    $region9: #{tpu_custom_call.1} parent=5 // pred_check
      _
    $region10: #{tpu_custom_call.1} parent=5 // pred_check_branch
      %220 = sbr.rel (%p217) target = $region12
    $region11: #{tpu_custom_call.1} parent=5 // pred_region
      %s221 = ssub.s32 %s13, 1
      // Predicated region
      $region13: #{tpu_custom_call.1} parent=11 // pred_check
        %p222 = pneg %p74
      $region14: #{tpu_custom_call.1} parent=11 // pred_check_branch
        %224 = sbr.rel (%p222) target = $region16
      $region15: #{tpu_custom_call.1} parent=11 // pred_region
        _
      $region16: #{tpu_custom_call.1} parent=11 // pred_fallthru
        _
      // Predicated region
      $region17: #{tpu_custom_call.1} parent=11 // pred_check
        %p225 = pneg %p95
      $region18: #{tpu_custom_call.1} parent=11 // pred_check_branch
        %227 = sbr.rel (%p225) target = $region20
      $region19: #{tpu_custom_call.1} parent=11 // pred_region
        _
      $region20: #{tpu_custom_call.1} parent=11 // pred_fallthru
        _
      // Predicated region
      $region21: #{tpu_custom_call.1} parent=11 // pred_check
        %p228 = pneg %p116
      $region22: #{tpu_custom_call.1} parent=11 // pred_check_branch
        %230 = sbr.rel (%p228) target = $region24
      $region23: #{tpu_custom_call.1} parent=11 // pred_region
        _
      $region24: #{tpu_custom_call.1} parent=11 // pred_fallthru
        _
      // Predicated region
      $region25: #{tpu_custom_call.1} parent=11 // pred_check
        %p231 = pneg %p137
      $region26: #{tpu_custom_call.1} parent=11 // pred_check_branch
        %233 = sbr.rel (%p231) target = $region28
      $region27: #{tpu_custom_call.1} parent=11 // pred_region
        _
      $region28: #{tpu_custom_call.1} parent=11 // pred_fallthru
        _
      // Predicated region
      $region29: #{tpu_custom_call.1} parent=11 // pred_check
        %p234 = pneg %p158
      $region30: #{tpu_custom_call.1} parent=11 // pred_check_branch
        %236 = sbr.rel (%p234) target = $region32
      $region31: #{tpu_custom_call.1} parent=11 // pred_region
        _
      $region32: #{tpu_custom_call.1} parent=11 // pred_fallthru
        _
      // Predicated region
      $region33: #{tpu_custom_call.1} parent=11 // pred_check
        %p237 = pneg %p179
      $region34: #{tpu_custom_call.1} parent=11 // pred_check_branch
        %239 = sbr.rel (%p237) target = $region36
      $region35: #{tpu_custom_call.1} parent=11 // pred_region
        _
      $region36: #{tpu_custom_call.1} parent=11 // pred_fallthru
        _
    $region12: #{tpu_custom_call.1} parent=5 // pred_fallthru
      _
    %p240 = scmp.lt.s32.totalorder %s13, 2
    // Predicated region
    $region37: #{tpu_custom_call.1} parent=5 // pred_check
      %p241 = pneg %p240
    $region38: #{tpu_custom_call.1} parent=5 // pred_check_branch
      %243 = sbr.rel (%p241) target = $region40
    $region39: #{tpu_custom_call.1} parent=5 // pred_region
      // Predicated region
      $region41: #{tpu_custom_call.1} parent=39 // pred_check
        %p244 = pneg %p47
      $region42: #{tpu_custom_call.1} parent=39 // pred_check_branch
        %246 = sbr.rel (%p244) target = $region44
      $region43: #{tpu_custom_call.1} parent=39 // pred_region
        %s247 = smul.u32 2, %s21
        %p248 = scmp.lt.s32.totalorder %s20, 1
        %s249 = scalar_select %p248, %s20, 1
        %p250 = scmp.lt.s32.totalorder %s247, 1
        %s251 = scalar_select %p250, %s247, 1
        %s252 = smul.addr %s249, 2
        %s253 = sadd.s32 %s251, %s252
        %s254 = smul.addr %s253, 4
        %s255 = scalar_lea.vmem %s0, %s254
        %s256 = smul.u32 2, %s21
      $region44: #{tpu_custom_call.1} parent=39 // pred_fallthru
        _
    $region40: #{tpu_custom_call.1} parent=5 // pred_fallthru
      _
    %p257 = scmp.le.s32.totalorder 1, %s13
    %p258 = scmp.lt.s32.totalorder %s13, 3
    %p259 = pnand %p257, %p258
    %p260 = pneg %p259
    // Predicated region
    $region45: #{tpu_custom_call.1} parent=5 // pred_check
      _
    $region46: #{tpu_custom_call.1} parent=5 // pred_check_branch
      %262 = sbr.rel (%p259) target = $region48
    $region47: #{tpu_custom_call.1} parent=5 // pred_region
      %s263 = ssub.s32 %s13, 1
      %s264 = smul.u32 2, %s23
      %p265 = scmp.lt.s32.totalorder %s22, 1
      %s266 = scalar_select %p265, %s22, 1
      %p267 = scmp.lt.s32.totalorder %s264, 1
      %s268 = scalar_select %p267, %s264, 1
      %s269 = smul.addr %s266, 2
      %s270 = sadd.s32 %s268, %s269
      %s271 = smul.addr %s270, 4
      %s272 = scalar_lea.vmem %s0, %s271
      %p273 = pneg %p53
      %p274 = pneg %p50
      %p275 = pneg %p74
      %p276 = pneg %p71
      %p277 = pneg %p95
      %p278 = pneg %p92
      %p279 = pneg %p116
      %p280 = pneg %p113
      %p281 = pneg %p137
      %p282 = pneg %p134
      %p283 = pneg %p158
      %p284 = pneg %p155
      %p285 = pneg %p179
      %p286 = pneg %p176
      %p287 = pneg %p207
      %p288 = pneg %p204
      %s289 = smul.u32 2, %s23
      %p290 = scmp.lt.s32.totalorder %s22, 1
      %s291 = scalar_select %p290, %s22, 1
      %p292 = scmp.lt.s32.totalorder %s289, 1
      %s293 = scalar_select %p292, %s289, 1
      %s294 = smul.addr %s291, 2
      %s295 = sadd.s32 %s293, %s294
      %s296 = smul.addr %s295, 4
      %s297 = scalar_lea.vmem %s7, %s296
      %s298 = smul.u32 2, %s23
      %p299 = scmp.lt.s32.totalorder %s22, 1
      %s300 = scalar_select %p299, %s22, 1
      %p301 = scmp.lt.s32.totalorder %s298, 1
      %s302 = scalar_select %p301, %s298, 1
      %s303 = smul.addr %s300, 2
      %s304 = sadd.s32 %s302, %s303
      %s305 = smul.addr %s304, 4
      %s306 = scalar_lea.vmem %s0, %s305
      %s307 = smul.u32 2, %s23
      %s308 = smul.u32 2, %s23
      %p309 = scmp.lt.s32.totalorder %s22, 1
      %s310 = scalar_select %p309, %s22, 1
      %p311 = scmp.lt.s32.totalorder %s308, 1
      %s312 = scalar_select %p311, %s308, 1
      %s313 = smul.addr %s310, 2
      %s314 = sadd.s32 %s312, %s313
      %s315 = smul.addr %s314, 4
      %s316 = scalar_lea.vmem %s7, %s315
      %s317 = smul.u32 2, %s23
      %v318 = vld [vmem:[%s306] sm:$0xff]
      %v319 = vld [vmem:[%s4] sm:$0xff]
      %v320 = vld [vmem:[%s4 + $0x8] sm:$0xff]
      %v321 = vld [vmem:[%s4 + $0x10] sm:$0xff]
      %v322 = vld [vmem:[%s4 + $0x18] sm:$0xff]
      %v323 = vld [vmem:[%s1] sm:$0xff]
      %v324 = vld [vmem:[%s1 + $0x8] sm:$0xff]
      %v325 = vld [vmem:[%s1 + $0x10] sm:$0xff]
      %v326 = vld [vmem:[%s1 + $0x18] sm:$0xff]
      %v327 = vld [vmem:[%s1 + $0x20] sm:$0xff]
      %v328 = vld [vmem:[%s1 + $0x28] sm:$0xff]
      %v329 = vld [vmem:[%s3] sm:$0xff]
      %v330 = vld [vmem:[%s3 + $0x8] sm:$0xff]
      %v331 = vld [vmem:[%s3 + $0x10] sm:$0xff]
      %v332 = vld [vmem:[%s3 + $0x18] sm:$0xff]
      %v333 = vld [vmem:[%s3 + $0x20] sm:$0xff]
      %v334 = vld [vmem:[%s3 + $0x28] sm:$0xff]
      %336 = vset.pattern.permute.xlu0 0
      %337 = vperm.xlu0 %336, %v329
      %v338 = vpop.permute.xlu0 %337
      %341 = vset.pattern.permute.xlu0 0
      %342 = vperm.xlu0 %341, %v330
      %v343 = vpop.permute.xlu0 %342
      %346 = vset.pattern.permute.xlu0 0
      %347 = vperm.xlu0 %346, %v331
      %v348 = vpop.permute.xlu0 %347
      %351 = vset.pattern.permute.xlu0 0
      %352 = vperm.xlu0 %351, %v332
      %v353 = vpop.permute.xlu0 %352
      %356 = vset.pattern.permute.xlu0 0
      %357 = vperm.xlu0 %356, %v333
      %v358 = vpop.permute.xlu0 %357
      %361 = vset.pattern.permute.xlu0 0
      %362 = vperm.xlu0 %361, %v334
      %v363 = vpop.permute.xlu0 %362
      %v366 = vcombine.high %v318, %v318
      %vm367 = vcmask 31744
      %v369 = vsel %vm367, %v323, 0
      %v372 = vsel %vm367, %v324, 0
      %v375 = vsel %vm367, %v325, 0
      %v378 = vsel %vm367, %v326, 0
      %v381 = vsel %vm367, %v327, 0
      %v384 = vsel %vm367, %v328, 0
      %vm386 = vcmask 1043456
      %v387 = vsel %vm386, %v318, 0
      %v389 = vsel %vm386, %v366, 0
      %391 = vmatprep.subr.mxu0 0.0
      %392 = vmatpush1.msra.mxu0 0.0
      %393 = vmatprep.subr.mxu0 0.0
      %394 = vmatpush1.msra.mxu0 0.0
      %395 = vmatprep.subr.mxu0 0.0
      %396 = vmatpush1.msra.mxu0 0.0
      %397 = vmatprep.subr.mxu0 0.0
      %398 = vmatpush1.msra.mxu0 0.0
      %399 = vmatprep.subr.mxu0 0.0
      %400 = vmatpush1.msra.mxu0 0.0
      %401 = vmatprep.subr.mxu0 0.0
      %402 = vmatpush1.msra.mxu0 0.0
      %403 = vmatprep.subr.mxu0 0.0
      %404 = vmatpush1.msra.mxu0 0.0
      %405 = vmatprep.subr.mxu0 0.0
      %406 = vmatpush1.msra.mxu0 0.0
      %407 = vmatprep.subr.mxu0 0.0
      %408 = vmatpush1.msra.mxu0 0.0
      %409 = vmatprep.subr.mxu0 0.0
      %410 = vmatpush1.msra.mxu0 0.0
      %411 = vmatprep.subr.mxu0 0.0
      %412 = vmatpush1.msra.mxu0 0.0
      %413 = vmatprep.subr.mxu0 0.0
      %414 = vmatpush1.msra.mxu0 0.0
      %415 = vmatprep.subr.mxu0 0.0
      %416 = vmatpush1.msra.mxu0 0.0
      %417 = vmatprep.subr.mxu0 0.0
      %418 = vmatpush1.msra.mxu0 0.0
      %419 = vmatprep.subr.mxu0 0.0
      %420 = vmatpush1.msra.mxu0 0.0
      %421 = vmatprep.subr.mxu0 %v389
      %422 = vmatpush1.msra.mxu0 %v387
      %423 = vmatprep.subr.mxu0 0.0
      %424 = vmatpush2.msra.mxu0 0.0
      %425 = vmatprep.subr.mxu0 0.0
      %426 = vmatpush2.msra.mxu0 0.0
      %427 = vmatprep.subr.mxu0 0.0
      %428 = vmatpush2.msra.mxu0 0.0
      %429 = vmatprep.subr.mxu0 0.0
      %430 = vmatpush2.msra.mxu0 0.0
      %431 = vmatprep.subr.mxu0 0.0
      %432 = vmatpush2.msra.mxu0 0.0
      %433 = vmatprep.subr.mxu0 0.0
      %434 = vmatpush2.msra.mxu0 0.0
      %435 = vmatprep.subr.mxu0 0.0
      %436 = vmatpush2.msra.mxu0 0.0
      %437 = vmatprep.subr.mxu0 0.0
      %438 = vmatpush2.msra.mxu0 0.0
      %439 = vmatprep.subr.mxu0 0.0
      %440 = vmatpush2.msra.mxu0 0.0
      %441 = vmatprep.subr.mxu0 0.0
      %442 = vmatpush2.msra.mxu0 0.0
      %443 = vmatprep.subr.mxu0 0.0
      %444 = vmatpush2.msra.mxu0 0.0
      %445 = vmatprep.subr.mxu0 0.0
      %446 = vmatpush2.msra.mxu0 0.0
      %447 = vmatprep.subr.mxu0 0.0
      %448 = vmatpush2.msra.mxu0 0.0
      %449 = vmatprep.subr.mxu0 0.0
      %450 = vmatpush2.msra.mxu0 0.0
      %451 = vmatprep.subr.mxu0 0.0
      %452 = vmatpush2.msra.mxu0 0.0
      %453 = vmatprep.subr.mxu0 0.0
      %454 = vmatpush2.msra.mxu0 0.0
      %455 = vmatprep.mubr.f32.mxu0 0.0
      %456 = vmatmul.mubr.f32.gmra.mxu0 %v369
      %v457 = vpop.f32.mrf.mxu0
      %v458 = vadd.f32 %v338, %v457
      %v459 = vpop.f32.mrf.mxu0
      %v460 = vadd.f32 %v338, %v459
      %461 = vmatprep.mubr.f32.mxu0 0.0
      %462 = vmatmul.mubr.f32.gmra.mxu0 %v372
      %v463 = vpop.f32.mrf.mxu0
      %v464 = vadd.f32 %v343, %v463
      %v465 = vpop.f32.mrf.mxu0
      %v466 = vadd.f32 %v343, %v465
      %467 = vmatprep.mubr.f32.mxu0 0.0
      %468 = vmatmul.mubr.f32.gmra.mxu0 %v375
      %v469 = vpop.f32.mrf.mxu0
      %v470 = vadd.f32 %v348, %v469
      %v471 = vpop.f32.mrf.mxu0
      %v472 = vadd.f32 %v348, %v471
      %473 = vmatprep.mubr.f32.mxu0 0.0
      %474 = vmatmul.mubr.f32.gmra.mxu0 %v378
      %v475 = vpop.f32.mrf.mxu0
      %v476 = vadd.f32 %v353, %v475
      %v477 = vpop.f32.mrf.mxu0
      %v478 = vadd.f32 %v353, %v477
      %479 = vmatprep.mubr.f32.mxu0 0.0
      %480 = vmatmul.mubr.f32.gmra.mxu0 %v381
      %v481 = vpop.f32.mrf.mxu0
      %v482 = vadd.f32 %v358, %v481
      %v483 = vpop.f32.mrf.mxu0
      %v484 = vadd.f32 %v358, %v483
      %485 = vmatprep.mubr.f32.mxu0 0.0
      %486 = vmatmul.mubr.f32.gmra.mxu0 %v384
      %v487 = vpop.f32.mrf.mxu0
      %v488 = vadd.f32 %v363, %v487
      %v489 = vpop.f32.mrf.mxu0
      %v490 = vadd.f32 %v363, %v489
      %491 = vdwg.mxu0
      %v492 = vmax.f32 %v482, %v488
      %v493 = vrot.slane %v492, 4
      %v494 = vmax.f32 %v492, %v493
      %v495 = vrot.slane %v494, 2
      %v496 = vmax.f32 %v494, %v495
      %v497 = vrot.slane %v496, 1
      %v498 = vmax.f32 %v496, %v497
      %v499 = vmax.f32 %v484, %v490
      %v500 = vrot.slane %v499, 4
      %v501 = vmax.f32 %v499, %v500
      %v502 = vrot.slane %v501, 2
      %v503 = vmax.f32 %v501, %v502
      %v504 = vrot.slane %v503, 1
      %v505 = vmax.f32 %v503, %v504
      %v506 = vsub.f32 %v482, %v498
      %v507 = vsub.f32 %v484, %v505
      %v508 = vsub.f32 %v488, %v498
      %v509 = vsub.f32 %v490, %v505
      %v510 = vmul.f32 %v506, 1.442695
      %v511 = vpow.pop %v510
      %v512 = vmul.f32 %v507, 1.442695
      %v513 = vpow.pop %v512
      %v514 = vmul.f32 %v508, 1.442695
      %v515 = vpow.pop %v514
      %v516 = vmul.f32 %v509, 1.442695
      %v517 = vpow.pop %v516
      %v518 = vadd.f32 %v511, %v515
      %v519 = vrot.slane %v518, 4
      %v520 = vadd.f32 %v518, %v519
      %v521 = vrot.slane %v520, 2
      %v522 = vadd.f32 %v520, %v521
      %v523 = vrot.slane %v522, 1
      %v524 = vadd.f32 %v522, %v523
      %v525 = vadd.f32 %v513, %v517
      %v526 = vrot.slane %v525, 4
      %v527 = vadd.f32 %v525, %v526
      %v528 = vrot.slane %v527, 2
      %v529 = vadd.f32 %v527, %v528
      %v530 = vrot.slane %v529, 1
      %v531 = vadd.f32 %v529, %v530
      %v532 = vrcp.pop %v524
      %v533 = vrcp.pop %v531
      %v534 = vmul.f32 %v511, %v532
      %v535 = vmul.f32 %v513, %v533
      %v536 = vmul.f32 %v515, %v532
      %v537 = vmul.f32 %v517, %v533
      %vm538 = vcmask 130048
      %v540 = vsel %vm538, %v319, 0
      %v543 = vsel %vm538, %v320, 0
      %v546 = vsel %vm538, %v321, 0
      %v549 = vsel %vm538, %v322, 0
      %551 = vmatprep.subr.mxu0 0.0
      %552 = vmatpush1.msra.mxu0 0.0
      %553 = vmatprep.subr.mxu0 0.0
      %554 = vmatpush1.msra.mxu0 0.0
      %555 = vmatprep.subr.mxu0 0.0
      %556 = vmatpush1.msra.mxu0 0.0
      %557 = vmatprep.subr.mxu0 0.0
      %558 = vmatpush1.msra.mxu0 0.0
      %559 = vmatprep.subr.mxu0 0.0
      %560 = vmatpush1.msra.mxu0 0.0
      %561 = vmatprep.subr.mxu0 0.0
      %562 = vmatpush1.msra.mxu0 0.0
      %563 = vmatprep.subr.mxu0 0.0
      %564 = vmatpush1.msra.mxu0 0.0
      %565 = vmatprep.subr.mxu0 0.0
      %566 = vmatpush1.msra.mxu0 0.0
      %567 = vmatprep.subr.mxu0 0.0
      %568 = vmatpush1.msra.mxu0 0.0
      %569 = vmatprep.subr.mxu0 0.0
      %570 = vmatpush1.msra.mxu0 0.0
      %571 = vmatprep.subr.mxu0 0.0
      %572 = vmatpush1.msra.mxu0 0.0
      %573 = vmatprep.subr.mxu0 0.0
      %574 = vmatpush1.msra.mxu0 0.0
      %575 = vmatprep.subr.mxu0 0.0
      %576 = vmatpush1.msra.mxu0 0.0
      %577 = vmatprep.subr.mxu0 0.0
      %578 = vmatpush1.msra.mxu0 0.0
      %579 = vmatprep.subr.mxu0 %v537
      %580 = vmatpush1.msra.mxu0 %v536
      %581 = vmatprep.subr.mxu0 %v535
      %582 = vmatpush1.msra.mxu0 %v534
      %583 = vmatprep.subr.mxu0 0.0
      %584 = vmatpush2.msra.mxu0 0.0
      %585 = vmatprep.subr.mxu0 0.0
      %586 = vmatpush2.msra.mxu0 0.0
      %587 = vmatprep.subr.mxu0 0.0
      %588 = vmatpush2.msra.mxu0 0.0
      %589 = vmatprep.subr.mxu0 0.0
      %590 = vmatpush2.msra.mxu0 0.0
      %591 = vmatprep.subr.mxu0 0.0
      %592 = vmatpush2.msra.mxu0 0.0
      %593 = vmatprep.subr.mxu0 0.0
      %594 = vmatpush2.msra.mxu0 0.0
      %595 = vmatprep.subr.mxu0 0.0
      %596 = vmatpush2.msra.mxu0 0.0
      %597 = vmatprep.subr.mxu0 0.0
      %598 = vmatpush2.msra.mxu0 0.0
      %599 = vmatprep.subr.mxu0 0.0
      %600 = vmatpush2.msra.mxu0 0.0
      %601 = vmatprep.subr.mxu0 0.0
      %602 = vmatpush2.msra.mxu0 0.0
      %603 = vmatprep.subr.mxu0 0.0
      %604 = vmatpush2.msra.mxu0 0.0
      %605 = vmatprep.subr.mxu0 0.0
      %606 = vmatpush2.msra.mxu0 0.0
      %607 = vmatprep.subr.mxu0 0.0
      %608 = vmatpush2.msra.mxu0 0.0
      %609 = vmatprep.subr.mxu0 0.0
      %610 = vmatpush2.msra.mxu0 0.0
      %611 = vmatprep.subr.mxu0 0.0
      %612 = vmatpush2.msra.mxu0 0.0
      %613 = vmatprep.subr.mxu0 0.0
      %614 = vmatpush2.msra.mxu0 0.0
      %615 = vmatprep.mubr.f32.mxu0 0.0
      %616 = vmatmul.mubr.f32.gmra.mxu0 %v540
      %v617 = vpop.f32.mrf.mxu0
      %v618 = vadd.f32 0.0, %v617
      %v619 = vpop.f32.mrf.mxu0
      %v620 = vadd.f32 0.0, %v619
      %621 = vmatprep.mubr.f32.mxu0 0.0
      %622 = vmatmul.mubr.f32.gmra.mxu0 %v543
      %v623 = vpop.f32.mrf.mxu0
      %v624 = vadd.f32 0.0, %v623
      %v625 = vpop.f32.mrf.mxu0
      %v626 = vadd.f32 0.0, %v625
      %627 = vmatprep.mubr.f32.mxu0 0.0
      %628 = vmatmul.mubr.f32.gmra.mxu0 %v546
      %v629 = vpop.f32.mrf.mxu0
      %v630 = vadd.f32 0.0, %v629
      %v631 = vpop.f32.mrf.mxu0
      %v632 = vadd.f32 0.0, %v631
      %633 = vmatprep.mubr.f32.mxu0 0.0
      %634 = vmatmul.mubr.f32.gmra.mxu0 %v549
      %v635 = vpop.f32.mrf.mxu0
      %v636 = vadd.f32 0.0, %v635
      %v637 = vpop.f32.mrf.mxu0
      %v638 = vadd.f32 0.0, %v637
      %639 = vdwg.mxu0
      %v640 = vadd.f32 %v458, %v618
      %v641 = vadd.f32 %v460, %v620
      %v642 = vadd.f32 %v464, %v624
      %v643 = vadd.f32 %v466, %v626
      %v644 = vadd.f32 %v470, %v630
      %v645 = vadd.f32 %v472, %v632
      %v646 = vadd.f32 %v476, %v636
      %v647 = vadd.f32 %v478, %v638
      %v648 = vmax.f32 %v640, 0.0
      %v649 = vmax.f32 %v641, 0.0
      %v650 = vmax.f32 %v642, 0.0
      %v651 = vmax.f32 %v643, 0.0
      %v652 = vmax.f32 %v644, 0.0
      %v653 = vmax.f32 %v645, 0.0
      %v654 = vmax.f32 %v646, 0.0
      %v655 = vmax.f32 %v647, 0.0
      %v656 = vld [vmem:[%s2] sm:$0xff]
      %v657 = vld [vmem:[%s2 + $0x8] sm:$0xff]
      %v658 = vld [vmem:[%s2 + $0x10] sm:$0xff]
      %v659 = vld [vmem:[%s2 + $0x18] sm:$0xff]
      %v660 = vld [vmem:[%s2 + $0x20] sm:$0xff]
      %v661 = vld [vmem:[%s2 + $0x28] sm:$0xff]
      %s662 = scalar_lea.vmem %s3, 48
      %v663 = vld [vmem:[%s662] sm:$0xff]
      %v664 = vld [vmem:[%s662 + $0x8] sm:$0xff]
      %v665 = vld [vmem:[%s662 + $0x10] sm:$0xff]
      %v666 = vld [vmem:[%s662 + $0x18] sm:$0xff]
      %v667 = vld [vmem:[%s662 + $0x20] sm:$0xff]
      %v668 = vld [vmem:[%s662 + $0x28] sm:$0xff]
      %670 = vset.pattern.permute.xlu0 0
      %671 = vperm.xlu0 %670, %v663
      %v672 = vpop.permute.xlu0 %671
      %675 = vset.pattern.permute.xlu0 0
      %676 = vperm.xlu0 %675, %v664
      %v677 = vpop.permute.xlu0 %676
      %680 = vset.pattern.permute.xlu0 0
      %681 = vperm.xlu0 %680, %v665
      %v682 = vpop.permute.xlu0 %681
      %685 = vset.pattern.permute.xlu0 0
      %686 = vperm.xlu0 %685, %v666
      %v687 = vpop.permute.xlu0 %686
      %690 = vset.pattern.permute.xlu0 0
      %691 = vperm.xlu0 %690, %v667
      %v692 = vpop.permute.xlu0 %691
      %695 = vset.pattern.permute.xlu0 0
      %696 = vperm.xlu0 %695, %v668
      %v697 = vpop.permute.xlu0 %696
      %vm699 = vcmask 261120
      %v701 = vsel %vm699, %v656, 0
      %v704 = vsel %vm699, %v657, 0
      %v707 = vsel %vm699, %v658, 0
      %v710 = vsel %vm699, %v659, 0
      %v713 = vsel %vm699, %v660, 0
      %v716 = vsel %vm699, %v661, 0
      %718 = vmatprep.subr.mxu0 0.0
      %719 = vmatpush1.msra.mxu0 0.0
      %720 = vmatprep.subr.mxu0 0.0
      %721 = vmatpush1.msra.mxu0 0.0
      %722 = vmatprep.subr.mxu0 0.0
      %723 = vmatpush1.msra.mxu0 0.0
      %724 = vmatprep.subr.mxu0 0.0
      %725 = vmatpush1.msra.mxu0 0.0
      %726 = vmatprep.subr.mxu0 0.0
      %727 = vmatpush1.msra.mxu0 0.0
      %728 = vmatprep.subr.mxu0 0.0
      %729 = vmatpush1.msra.mxu0 0.0
      %730 = vmatprep.subr.mxu0 0.0
      %731 = vmatpush1.msra.mxu0 0.0
      %732 = vmatprep.subr.mxu0 0.0
      %733 = vmatpush1.msra.mxu0 0.0
      %734 = vmatprep.subr.mxu0 0.0
      %735 = vmatpush1.msra.mxu0 0.0
      %736 = vmatprep.subr.mxu0 0.0
      %737 = vmatpush1.msra.mxu0 0.0
      %738 = vmatprep.subr.mxu0 0.0
      %739 = vmatpush1.msra.mxu0 0.0
      %740 = vmatprep.subr.mxu0 0.0
      %741 = vmatpush1.msra.mxu0 0.0
      %742 = vmatprep.subr.mxu0 %v655
      %743 = vmatpush1.msra.mxu0 %v654
      %744 = vmatprep.subr.mxu0 %v653
      %745 = vmatpush1.msra.mxu0 %v652
      %746 = vmatprep.subr.mxu0 %v651
      %747 = vmatpush1.msra.mxu0 %v650
      %748 = vmatprep.subr.mxu0 %v649
      %749 = vmatpush1.msra.mxu0 %v648
      %750 = vmatprep.subr.mxu0 0.0
      %751 = vmatpush2.msra.mxu0 0.0
      %752 = vmatprep.subr.mxu0 0.0
      %753 = vmatpush2.msra.mxu0 0.0
      %754 = vmatprep.subr.mxu0 0.0
      %755 = vmatpush2.msra.mxu0 0.0
      %756 = vmatprep.subr.mxu0 0.0
      %757 = vmatpush2.msra.mxu0 0.0
      %758 = vmatprep.subr.mxu0 0.0
      %759 = vmatpush2.msra.mxu0 0.0
      %760 = vmatprep.subr.mxu0 0.0
      %761 = vmatpush2.msra.mxu0 0.0
      %762 = vmatprep.subr.mxu0 0.0
      %763 = vmatpush2.msra.mxu0 0.0
      %764 = vmatprep.subr.mxu0 0.0
      %765 = vmatpush2.msra.mxu0 0.0
      %766 = vmatprep.subr.mxu0 0.0
      %767 = vmatpush2.msra.mxu0 0.0
      %768 = vmatprep.subr.mxu0 0.0
      %769 = vmatpush2.msra.mxu0 0.0
      %770 = vmatprep.subr.mxu0 0.0
      %771 = vmatpush2.msra.mxu0 0.0
      %772 = vmatprep.subr.mxu0 0.0
      %773 = vmatpush2.msra.mxu0 0.0
      %774 = vmatprep.subr.mxu0 0.0
      %775 = vmatpush2.msra.mxu0 0.0
      %776 = vmatprep.subr.mxu0 0.0
      %777 = vmatpush2.msra.mxu0 0.0
      %778 = vmatprep.subr.mxu0 0.0
      %779 = vmatpush2.msra.mxu0 0.0
      %780 = vmatprep.subr.mxu0 0.0
      %781 = vmatpush2.msra.mxu0 0.0
      %782 = vmatprep.mubr.f32.mxu0 0.0
      %783 = vmatmul.mubr.f32.gmra.mxu0 %v701
      %v784 = vpop.f32.mrf.mxu0
      %v785 = vadd.f32 %v672, %v784
      %v786 = vpop.f32.mrf.mxu0
      %v787 = vadd.f32 %v672, %v786
      %788 = vmatprep.mubr.f32.mxu0 0.0
      %789 = vmatmul.mubr.f32.gmra.mxu0 %v704
      %v790 = vpop.f32.mrf.mxu0
      %v791 = vadd.f32 %v677, %v790
      %v792 = vpop.f32.mrf.mxu0
      %v793 = vadd.f32 %v677, %v792
      %794 = vmatprep.mubr.f32.mxu0 0.0
      %795 = vmatmul.mubr.f32.gmra.mxu0 %v707
      %v796 = vpop.f32.mrf.mxu0
      %v797 = vadd.f32 %v682, %v796
      %v798 = vpop.f32.mrf.mxu0
      %v799 = vadd.f32 %v682, %v798
      %800 = vmatprep.mubr.f32.mxu0 0.0
      %801 = vmatmul.mubr.f32.gmra.mxu0 %v710
      %v802 = vpop.f32.mrf.mxu0
      %v803 = vadd.f32 %v687, %v802
      %v804 = vpop.f32.mrf.mxu0
      %v805 = vadd.f32 %v687, %v804
      %806 = vmatprep.mubr.f32.mxu0 0.0
      %807 = vmatmul.mubr.f32.gmra.mxu0 %v713
      %v808 = vpop.f32.mrf.mxu0
      %v809 = vadd.f32 %v692, %v808
      %v810 = vpop.f32.mrf.mxu0
      %v811 = vadd.f32 %v692, %v810
      %812 = vmatprep.mubr.f32.mxu0 0.0
      %813 = vmatmul.mubr.f32.gmra.mxu0 %v716
      %v814 = vpop.f32.mrf.mxu0
      %v815 = vadd.f32 %v697, %v814
      %v816 = vpop.f32.mrf.mxu0
      %v817 = vadd.f32 %v697, %v816
      %818 = vdwg.mxu0
      %v819 = vmax.f32 %v809, %v815
      %v820 = vrot.slane %v819, 4
      %v821 = vmax.f32 %v819, %v820
      %v822 = vrot.slane %v821, 2
      %v823 = vmax.f32 %v821, %v822
      %v824 = vrot.slane %v823, 1
      %v825 = vmax.f32 %v823, %v824
      %v826 = vmax.f32 %v811, %v817
      %v827 = vrot.slane %v826, 4
      %v828 = vmax.f32 %v826, %v827
      %v829 = vrot.slane %v828, 2
      %v830 = vmax.f32 %v828, %v829
      %v831 = vrot.slane %v830, 1
      %v832 = vmax.f32 %v830, %v831
      %v833 = vsub.f32 %v809, %v825
      %v834 = vsub.f32 %v811, %v832
      %v835 = vsub.f32 %v815, %v825
      %v836 = vsub.f32 %v817, %v832
      %v837 = vmul.f32 %v833, 1.442695
      %v838 = vpow.pop %v837
      %v839 = vmul.f32 %v834, 1.442695
      %v840 = vpow.pop %v839
      %v841 = vmul.f32 %v835, 1.442695
      %v842 = vpow.pop %v841
      %v843 = vmul.f32 %v836, 1.442695
      %v844 = vpow.pop %v843
      %v845 = vadd.f32 %v838, %v842
      %v846 = vrot.slane %v845, 4
      %v847 = vadd.f32 %v845, %v846
      %v848 = vrot.slane %v847, 2
      %v849 = vadd.f32 %v847, %v848
      %v850 = vrot.slane %v849, 1
      %v851 = vadd.f32 %v849, %v850
      %v852 = vadd.f32 %v840, %v844
      %v853 = vrot.slane %v852, 4
      %v854 = vadd.f32 %v852, %v853
      %v855 = vrot.slane %v854, 2
      %v856 = vadd.f32 %v854, %v855
      %v857 = vrot.slane %v856, 1
      %v858 = vadd.f32 %v856, %v857
      %v859 = vrcp.pop %v851
      %v860 = vrcp.pop %v858
      %v861 = vmul.f32 %v838, %v859
      %v862 = vmul.f32 %v840, %v860
      %v863 = vmul.f32 %v842, %v859
      %v864 = vmul.f32 %v844, %v860
      %865 = vmatprep.subr.mxu0 0.0
      %866 = vmatpush1.msra.mxu0 0.0
      %867 = vmatprep.subr.mxu0 0.0
      %868 = vmatpush1.msra.mxu0 0.0
      %869 = vmatprep.subr.mxu0 0.0
      %870 = vmatpush1.msra.mxu0 0.0
      %871 = vmatprep.subr.mxu0 0.0
      %872 = vmatpush1.msra.mxu0 0.0
      %873 = vmatprep.subr.mxu0 0.0
      %874 = vmatpush1.msra.mxu0 0.0
      %875 = vmatprep.subr.mxu0 0.0
      %876 = vmatpush1.msra.mxu0 0.0
      %877 = vmatprep.subr.mxu0 0.0
      %878 = vmatpush1.msra.mxu0 0.0
      %879 = vmatprep.subr.mxu0 0.0
      %880 = vmatpush1.msra.mxu0 0.0
      %881 = vmatprep.subr.mxu0 0.0
      %882 = vmatpush1.msra.mxu0 0.0
      %883 = vmatprep.subr.mxu0 0.0
      %884 = vmatpush1.msra.mxu0 0.0
      %885 = vmatprep.subr.mxu0 0.0
      %886 = vmatpush1.msra.mxu0 0.0
      %887 = vmatprep.subr.mxu0 0.0
      %888 = vmatpush1.msra.mxu0 0.0
      %889 = vmatprep.subr.mxu0 0.0
      %890 = vmatpush1.msra.mxu0 0.0
      %891 = vmatprep.subr.mxu0 0.0
      %892 = vmatpush1.msra.mxu0 0.0
      %893 = vmatprep.subr.mxu0 %v864
      %894 = vmatpush1.msra.mxu0 %v863
      %895 = vmatprep.subr.mxu0 %v862
      %896 = vmatpush1.msra.mxu0 %v861
      %897 = vmatprep.subr.mxu0 0.0
      %898 = vmatpush2.msra.mxu0 0.0
      %899 = vmatprep.subr.mxu0 0.0
      %900 = vmatpush2.msra.mxu0 0.0
      %901 = vmatprep.subr.mxu0 0.0
      %902 = vmatpush2.msra.mxu0 0.0
      %903 = vmatprep.subr.mxu0 0.0
      %904 = vmatpush2.msra.mxu0 0.0
      %905 = vmatprep.subr.mxu0 0.0
      %906 = vmatpush2.msra.mxu0 0.0
      %907 = vmatprep.subr.mxu0 0.0
      %908 = vmatpush2.msra.mxu0 0.0
      %909 = vmatprep.subr.mxu0 0.0
      %910 = vmatpush2.msra.mxu0 0.0
      %911 = vmatprep.subr.mxu0 0.0
      %912 = vmatpush2.msra.mxu0 0.0
      %913 = vmatprep.subr.mxu0 0.0
      %914 = vmatpush2.msra.mxu0 0.0
      %915 = vmatprep.subr.mxu0 0.0
      %916 = vmatpush2.msra.mxu0 0.0
      %917 = vmatprep.subr.mxu0 0.0
      %918 = vmatpush2.msra.mxu0 0.0
      %919 = vmatprep.subr.mxu0 0.0
      %920 = vmatpush2.msra.mxu0 0.0
      %921 = vmatprep.subr.mxu0 0.0
      %922 = vmatpush2.msra.mxu0 0.0
      %923 = vmatprep.subr.mxu0 0.0
      %924 = vmatpush2.msra.mxu0 0.0
      %925 = vmatprep.subr.mxu0 0.0
      %926 = vmatpush2.msra.mxu0 0.0
      %927 = vmatprep.subr.mxu0 0.0
      %928 = vmatpush2.msra.mxu0 0.0
      %929 = vmatprep.mubr.f32.mxu0 0.0
      %930 = vmatmul.mubr.f32.gmra.mxu0 %v540
      %v931 = vpop.f32.mrf.mxu0
      %v932 = vadd.f32 0.0, %v931
      %v933 = vpop.f32.mrf.mxu0
      %v934 = vadd.f32 0.0, %v933
      %935 = vmatprep.mubr.f32.mxu0 0.0
      %936 = vmatmul.mubr.f32.gmra.mxu0 %v543
      %v937 = vpop.f32.mrf.mxu0
      %v938 = vadd.f32 0.0, %v937
      %v939 = vpop.f32.mrf.mxu0
      %v940 = vadd.f32 0.0, %v939
      %941 = vmatprep.mubr.f32.mxu0 0.0
      %942 = vmatmul.mubr.f32.gmra.mxu0 %v546
      %v943 = vpop.f32.mrf.mxu0
      %v944 = vadd.f32 0.0, %v943
      %v945 = vpop.f32.mrf.mxu0
      %v946 = vadd.f32 0.0, %v945
      %947 = vmatprep.mubr.f32.mxu0 0.0
      %948 = vmatmul.mubr.f32.gmra.mxu0 %v549
      %v949 = vpop.f32.mrf.mxu0
      %v950 = vadd.f32 0.0, %v949
      %v951 = vpop.f32.mrf.mxu0
      %v952 = vadd.f32 0.0, %v951
      %953 = vdwg.mxu0
      %v954 = vadd.f32 %v785, %v932
      %v955 = vadd.f32 %v787, %v934
      %v956 = vadd.f32 %v791, %v938
      %v957 = vadd.f32 %v793, %v940
      %v958 = vadd.f32 %v797, %v944
      %v959 = vadd.f32 %v799, %v946
      %v960 = vadd.f32 %v803, %v950
      %v961 = vadd.f32 %v805, %v952
      %v962 = vmax.f32 %v954, 0.0
      %v963 = vmax.f32 %v955, 0.0
      %v964 = vmax.f32 %v956, 0.0
      %v965 = vmax.f32 %v957, 0.0
      %v966 = vmax.f32 %v958, 0.0
      %v967 = vmax.f32 %v959, 0.0
      %v968 = vmax.f32 %v960, 0.0
      %v969 = vmax.f32 %v961, 0.0
      %s970 = scalar_lea.vmem %s2, 48
      %v971 = vld [vmem:[%s970] sm:$0xff]
      %v972 = vld [vmem:[%s970 + $0x8] sm:$0xff]
      %v973 = vld [vmem:[%s970 + $0x10] sm:$0xff]
      %v974 = vld [vmem:[%s970 + $0x18] sm:$0xff]
      %v975 = vld [vmem:[%s970 + $0x20] sm:$0xff]
      %v976 = vld [vmem:[%s970 + $0x28] sm:$0xff]
      %s977 = scalar_lea.vmem %s3, 96
      %v978 = vld [vmem:[%s977] sm:$0xff]
      %v979 = vld [vmem:[%s977 + $0x8] sm:$0xff]
      %v980 = vld [vmem:[%s977 + $0x10] sm:$0xff]
      %v981 = vld [vmem:[%s977 + $0x18] sm:$0xff]
      %v982 = vld [vmem:[%s977 + $0x20] sm:$0xff]
      %v983 = vld [vmem:[%s977 + $0x28] sm:$0xff]
      %985 = vset.pattern.permute.xlu0 0
      %986 = vperm.xlu0 %985, %v978
      %v987 = vpop.permute.xlu0 %986
      %990 = vset.pattern.permute.xlu0 0
      %991 = vperm.xlu0 %990, %v979
      %v992 = vpop.permute.xlu0 %991
      %995 = vset.pattern.permute.xlu0 0
      %996 = vperm.xlu0 %995, %v980
      %v997 = vpop.permute.xlu0 %996
      %1000 = vset.pattern.permute.xlu0 0
      %1001 = vperm.xlu0 %1000, %v981
      %v1002 = vpop.permute.xlu0 %1001
      %1005 = vset.pattern.permute.xlu0 0
      %1006 = vperm.xlu0 %1005, %v982
      %v1007 = vpop.permute.xlu0 %1006
      %1010 = vset.pattern.permute.xlu0 0
      %1011 = vperm.xlu0 %1010, %v983
      %v1012 = vpop.permute.xlu0 %1011
      %v1015 = vsel %vm699, %v971, 0
      %v1018 = vsel %vm699, %v972, 0
      %v1021 = vsel %vm699, %v973, 0
      %v1024 = vsel %vm699, %v974, 0
      %v1027 = vsel %vm699, %v975, 0
      %v1030 = vsel %vm699, %v976, 0
      %1032 = vmatprep.subr.mxu0 0.0
      %1033 = vmatpush1.msra.mxu0 0.0
      %1034 = vmatprep.subr.mxu0 0.0
      %1035 = vmatpush1.msra.mxu0 0.0
      %1036 = vmatprep.subr.mxu0 0.0
      %1037 = vmatpush1.msra.mxu0 0.0
      %1038 = vmatprep.subr.mxu0 0.0
      %1039 = vmatpush1.msra.mxu0 0.0
      %1040 = vmatprep.subr.mxu0 0.0
      %1041 = vmatpush1.msra.mxu0 0.0
      %1042 = vmatprep.subr.mxu0 0.0
      %1043 = vmatpush1.msra.mxu0 0.0
      %1044 = vmatprep.subr.mxu0 0.0
      %1045 = vmatpush1.msra.mxu0 0.0
      %1046 = vmatprep.subr.mxu0 0.0
      %1047 = vmatpush1.msra.mxu0 0.0
      %1048 = vmatprep.subr.mxu0 0.0
      %1049 = vmatpush1.msra.mxu0 0.0
      %1050 = vmatprep.subr.mxu0 0.0
      %1051 = vmatpush1.msra.mxu0 0.0
      %1052 = vmatprep.subr.mxu0 0.0
      %1053 = vmatpush1.msra.mxu0 0.0
      %1054 = vmatprep.subr.mxu0 0.0
      %1055 = vmatpush1.msra.mxu0 0.0
      %1056 = vmatprep.subr.mxu0 %v969
      %1057 = vmatpush1.msra.mxu0 %v968
      %1058 = vmatprep.subr.mxu0 %v967
      %1059 = vmatpush1.msra.mxu0 %v966
      %1060 = vmatprep.subr.mxu0 %v965
      %1061 = vmatpush1.msra.mxu0 %v964
      %1062 = vmatprep.subr.mxu0 %v963
      %1063 = vmatpush1.msra.mxu0 %v962
      %1064 = vmatprep.subr.mxu0 0.0
      %1065 = vmatpush2.msra.mxu0 0.0
      %1066 = vmatprep.subr.mxu0 0.0
      %1067 = vmatpush2.msra.mxu0 0.0
      %1068 = vmatprep.subr.mxu0 0.0
      %1069 = vmatpush2.msra.mxu0 0.0
      %1070 = vmatprep.subr.mxu0 0.0
      %1071 = vmatpush2.msra.mxu0 0.0
      %1072 = vmatprep.subr.mxu0 0.0
      %1073 = vmatpush2.msra.mxu0 0.0
      %1074 = vmatprep.subr.mxu0 0.0
      %1075 = vmatpush2.msra.mxu0 0.0
      %1076 = vmatprep.subr.mxu0 0.0
      %1077 = vmatpush2.msra.mxu0 0.0
      %1078 = vmatprep.subr.mxu0 0.0
      %1079 = vmatpush2.msra.mxu0 0.0
      %1080 = vmatprep.subr.mxu0 0.0
      %1081 = vmatpush2.msra.mxu0 0.0
      %1082 = vmatprep.subr.mxu0 0.0
      %1083 = vmatpush2.msra.mxu0 0.0
      %1084 = vmatprep.subr.mxu0 0.0
      %1085 = vmatpush2.msra.mxu0 0.0
      %1086 = vmatprep.subr.mxu0 0.0
      %1087 = vmatpush2.msra.mxu0 0.0
      %1088 = vmatprep.subr.mxu0 0.0
      %1089 = vmatpush2.msra.mxu0 0.0
      %1090 = vmatprep.subr.mxu0 0.0
      %1091 = vmatpush2.msra.mxu0 0.0
      %1092 = vmatprep.subr.mxu0 0.0
      %1093 = vmatpush2.msra.mxu0 0.0
      %1094 = vmatprep.subr.mxu0 0.0
      %1095 = vmatpush2.msra.mxu0 0.0
      %1096 = vmatprep.mubr.f32.mxu0 0.0
      %1097 = vmatmul.mubr.f32.gmra.mxu0 %v1015
      %v1098 = vpop.f32.mrf.mxu0
      %v1099 = vadd.f32 %v987, %v1098
      %v1100 = vpop.f32.mrf.mxu0
      %v1101 = vadd.f32 %v987, %v1100
      %1102 = vmatprep.mubr.f32.mxu0 0.0
      %1103 = vmatmul.mubr.f32.gmra.mxu0 %v1018
      %v1104 = vpop.f32.mrf.mxu0
      %v1105 = vadd.f32 %v992, %v1104
      %v1106 = vpop.f32.mrf.mxu0
      %v1107 = vadd.f32 %v992, %v1106
      %1108 = vmatprep.mubr.f32.mxu0 0.0
      %1109 = vmatmul.mubr.f32.gmra.mxu0 %v1021
      %v1110 = vpop.f32.mrf.mxu0
      %v1111 = vadd.f32 %v997, %v1110
      %v1112 = vpop.f32.mrf.mxu0
      %v1113 = vadd.f32 %v997, %v1112
      %1114 = vmatprep.mubr.f32.mxu0 0.0
      %1115 = vmatmul.mubr.f32.gmra.mxu0 %v1024
      %v1116 = vpop.f32.mrf.mxu0
      %v1117 = vadd.f32 %v1002, %v1116
      %v1118 = vpop.f32.mrf.mxu0
      %v1119 = vadd.f32 %v1002, %v1118
      %1120 = vmatprep.mubr.f32.mxu0 0.0
      %1121 = vmatmul.mubr.f32.gmra.mxu0 %v1027
      %v1122 = vpop.f32.mrf.mxu0
      %v1123 = vadd.f32 %v1007, %v1122
      %v1124 = vpop.f32.mrf.mxu0
      %v1125 = vadd.f32 %v1007, %v1124
      %1126 = vmatprep.mubr.f32.mxu0 0.0
      %1127 = vmatmul.mubr.f32.gmra.mxu0 %v1030
      %v1128 = vpop.f32.mrf.mxu0
      %v1129 = vadd.f32 %v1012, %v1128
      %v1130 = vpop.f32.mrf.mxu0
      %v1131 = vadd.f32 %v1012, %v1130
      %1132 = vdwg.mxu0
      %v1133 = vmax.f32 %v1123, %v1129
      %v1134 = vrot.slane %v1133, 4
      %v1135 = vmax.f32 %v1133, %v1134
      %v1136 = vrot.slane %v1135, 2
      %v1137 = vmax.f32 %v1135, %v1136
      %v1138 = vrot.slane %v1137, 1
      %v1139 = vmax.f32 %v1137, %v1138
      %v1140 = vmax.f32 %v1125, %v1131
      %v1141 = vrot.slane %v1140, 4
      %v1142 = vmax.f32 %v1140, %v1141
      %v1143 = vrot.slane %v1142, 2
      %v1144 = vmax.f32 %v1142, %v1143
      %v1145 = vrot.slane %v1144, 1
      %v1146 = vmax.f32 %v1144, %v1145
      %v1147 = vsub.f32 %v1123, %v1139
      %v1148 = vsub.f32 %v1125, %v1146
      %v1149 = vsub.f32 %v1129, %v1139
      %v1150 = vsub.f32 %v1131, %v1146
      %v1151 = vmul.f32 %v1147, 1.442695
      %v1152 = vpow.pop %v1151
      %v1153 = vmul.f32 %v1148, 1.442695
      %v1154 = vpow.pop %v1153
      %v1155 = vmul.f32 %v1149, 1.442695
      %v1156 = vpow.pop %v1155
      %v1157 = vmul.f32 %v1150, 1.442695
      %v1158 = vpow.pop %v1157
      %v1159 = vadd.f32 %v1152, %v1156
      %v1160 = vrot.slane %v1159, 4
      %v1161 = vadd.f32 %v1159, %v1160
      %v1162 = vrot.slane %v1161, 2
      %v1163 = vadd.f32 %v1161, %v1162
      %v1164 = vrot.slane %v1163, 1
      %v1165 = vadd.f32 %v1163, %v1164
      %v1166 = vadd.f32 %v1154, %v1158
      %v1167 = vrot.slane %v1166, 4
      %v1168 = vadd.f32 %v1166, %v1167
      %v1169 = vrot.slane %v1168, 2
      %v1170 = vadd.f32 %v1168, %v1169
      %v1171 = vrot.slane %v1170, 1
      %v1172 = vadd.f32 %v1170, %v1171
      %v1173 = vrcp.pop %v1165
      %v1174 = vrcp.pop %v1172
      %v1175 = vmul.f32 %v1152, %v1173
      %v1176 = vmul.f32 %v1154, %v1174
      %v1177 = vmul.f32 %v1156, %v1173
      %v1178 = vmul.f32 %v1158, %v1174
      %1179 = vmatprep.subr.mxu0 0.0
      %1180 = vmatpush1.msra.mxu0 0.0
      %1181 = vmatprep.subr.mxu0 0.0
      %1182 = vmatpush1.msra.mxu0 0.0
      %1183 = vmatprep.subr.mxu0 0.0
      %1184 = vmatpush1.msra.mxu0 0.0
      %1185 = vmatprep.subr.mxu0 0.0
      %1186 = vmatpush1.msra.mxu0 0.0
      %1187 = vmatprep.subr.mxu0 0.0
      %1188 = vmatpush1.msra.mxu0 0.0
      %1189 = vmatprep.subr.mxu0 0.0
      %1190 = vmatpush1.msra.mxu0 0.0
      %1191 = vmatprep.subr.mxu0 0.0
      %1192 = vmatpush1.msra.mxu0 0.0
      %1193 = vmatprep.subr.mxu0 0.0
      %1194 = vmatpush1.msra.mxu0 0.0
      %1195 = vmatprep.subr.mxu0 0.0
      %1196 = vmatpush1.msra.mxu0 0.0
      %1197 = vmatprep.subr.mxu0 0.0
      %1198 = vmatpush1.msra.mxu0 0.0
      %1199 = vmatprep.subr.mxu0 0.0
      %1200 = vmatpush1.msra.mxu0 0.0
      %1201 = vmatprep.subr.mxu0 0.0
      %1202 = vmatpush1.msra.mxu0 0.0
      %1203 = vmatprep.subr.mxu0 0.0
      %1204 = vmatpush1.msra.mxu0 0.0
      %1205 = vmatprep.subr.mxu0 0.0
      %1206 = vmatpush1.msra.mxu0 0.0
      %1207 = vmatprep.subr.mxu0 %v1178
      %1208 = vmatpush1.msra.mxu0 %v1177
      %1209 = vmatprep.subr.mxu0 %v1176
      %1210 = vmatpush1.msra.mxu0 %v1175
      %1211 = vmatprep.subr.mxu0 0.0
      %1212 = vmatpush2.msra.mxu0 0.0
      %1213 = vmatprep.subr.mxu0 0.0
      %1214 = vmatpush2.msra.mxu0 0.0
      %1215 = vmatprep.subr.mxu0 0.0
      %1216 = vmatpush2.msra.mxu0 0.0
      %1217 = vmatprep.subr.mxu0 0.0
      %1218 = vmatpush2.msra.mxu0 0.0
      %1219 = vmatprep.subr.mxu0 0.0
      %1220 = vmatpush2.msra.mxu0 0.0
      %1221 = vmatprep.subr.mxu0 0.0
      %1222 = vmatpush2.msra.mxu0 0.0
      %1223 = vmatprep.subr.mxu0 0.0
      %1224 = vmatpush2.msra.mxu0 0.0
      %1225 = vmatprep.subr.mxu0 0.0
      %1226 = vmatpush2.msra.mxu0 0.0
      %1227 = vmatprep.subr.mxu0 0.0
      %1228 = vmatpush2.msra.mxu0 0.0
      %1229 = vmatprep.subr.mxu0 0.0
      %1230 = vmatpush2.msra.mxu0 0.0
      %1231 = vmatprep.subr.mxu0 0.0
      %1232 = vmatpush2.msra.mxu0 0.0
      %1233 = vmatprep.subr.mxu0 0.0
      %1234 = vmatpush2.msra.mxu0 0.0
      %1235 = vmatprep.subr.mxu0 0.0
      %1236 = vmatpush2.msra.mxu0 0.0
      %1237 = vmatprep.subr.mxu0 0.0
      %1238 = vmatpush2.msra.mxu0 0.0
      %1239 = vmatprep.subr.mxu0 0.0
      %1240 = vmatpush2.msra.mxu0 0.0
      %1241 = vmatprep.subr.mxu0 0.0
      %1242 = vmatpush2.msra.mxu0 0.0
      %1243 = vmatprep.mubr.f32.mxu0 0.0
      %1244 = vmatmul.mubr.f32.gmra.mxu0 %v540
      %v1245 = vpop.f32.mrf.mxu0
      %v1246 = vadd.f32 0.0, %v1245
      %v1247 = vpop.f32.mrf.mxu0
      %v1248 = vadd.f32 0.0, %v1247
      %1249 = vmatprep.mubr.f32.mxu0 0.0
      %1250 = vmatmul.mubr.f32.gmra.mxu0 %v543
      %v1251 = vpop.f32.mrf.mxu0
      %v1252 = vadd.f32 0.0, %v1251
      %v1253 = vpop.f32.mrf.mxu0
      %v1254 = vadd.f32 0.0, %v1253
      %1255 = vmatprep.mubr.f32.mxu0 0.0
      %1256 = vmatmul.mubr.f32.gmra.mxu0 %v546
      %v1257 = vpop.f32.mrf.mxu0
      %v1258 = vadd.f32 0.0, %v1257
      %v1259 = vpop.f32.mrf.mxu0
      %v1260 = vadd.f32 0.0, %v1259
      %1261 = vmatprep.mubr.f32.mxu0 0.0
      %1262 = vmatmul.mubr.f32.gmra.mxu0 %v549
      %v1263 = vpop.f32.mrf.mxu0
      %v1264 = vadd.f32 0.0, %v1263
      %v1265 = vpop.f32.mrf.mxu0
      %v1266 = vadd.f32 0.0, %v1265
      %1267 = vdwg.mxu0
      %v1268 = vadd.f32 %v1099, %v1246
      %v1269 = vadd.f32 %v1101, %v1248
      %v1270 = vadd.f32 %v1105, %v1252
      %v1271 = vadd.f32 %v1107, %v1254
      %v1272 = vadd.f32 %v1111, %v1258
      %v1273 = vadd.f32 %v1113, %v1260
      %v1274 = vadd.f32 %v1117, %v1264
      %v1275 = vadd.f32 %v1119, %v1266
      %v1276 = vmax.f32 %v1268, 0.0
      %v1277 = vmax.f32 %v1269, 0.0
      %v1278 = vmax.f32 %v1270, 0.0
      %v1279 = vmax.f32 %v1271, 0.0
      %v1280 = vmax.f32 %v1272, 0.0
      %v1281 = vmax.f32 %v1273, 0.0
      %v1282 = vmax.f32 %v1274, 0.0
      %v1283 = vmax.f32 %v1275, 0.0
      %s1284 = scalar_lea.vmem %s2, 96
      %v1285 = vld [vmem:[%s1284] sm:$0xff]
      %v1286 = vld [vmem:[%s1284 + $0x8] sm:$0xff]
      %v1287 = vld [vmem:[%s1284 + $0x10] sm:$0xff]
      %v1288 = vld [vmem:[%s1284 + $0x18] sm:$0xff]
      %v1289 = vld [vmem:[%s1284 + $0x20] sm:$0xff]
      %v1290 = vld [vmem:[%s1284 + $0x28] sm:$0xff]
      %s1291 = scalar_lea.vmem %s3, 144
      %v1292 = vld [vmem:[%s1291] sm:$0xff]
      %v1293 = vld [vmem:[%s1291 + $0x8] sm:$0xff]
      %v1294 = vld [vmem:[%s1291 + $0x10] sm:$0xff]
      %v1295 = vld [vmem:[%s1291 + $0x18] sm:$0xff]
      %v1296 = vld [vmem:[%s1291 + $0x20] sm:$0xff]
      %v1297 = vld [vmem:[%s1291 + $0x28] sm:$0xff]
      %1299 = vset.pattern.permute.xlu0 0
      %1300 = vperm.xlu0 %1299, %v1292
      %v1301 = vpop.permute.xlu0 %1300
      %1304 = vset.pattern.permute.xlu0 0
      %1305 = vperm.xlu0 %1304, %v1293
      %v1306 = vpop.permute.xlu0 %1305
      %1309 = vset.pattern.permute.xlu0 0
      %1310 = vperm.xlu0 %1309, %v1294
      %v1311 = vpop.permute.xlu0 %1310
      %1314 = vset.pattern.permute.xlu0 0
      %1315 = vperm.xlu0 %1314, %v1295
      %v1316 = vpop.permute.xlu0 %1315
      %1319 = vset.pattern.permute.xlu0 0
      %1320 = vperm.xlu0 %1319, %v1296
      %v1321 = vpop.permute.xlu0 %1320
      %1324 = vset.pattern.permute.xlu0 0
      %1325 = vperm.xlu0 %1324, %v1297
      %v1326 = vpop.permute.xlu0 %1325
      %v1329 = vsel %vm699, %v1285, 0
      %v1332 = vsel %vm699, %v1286, 0
      %v1335 = vsel %vm699, %v1287, 0
      %v1338 = vsel %vm699, %v1288, 0
      %v1341 = vsel %vm699, %v1289, 0
      %v1344 = vsel %vm699, %v1290, 0
      %1346 = vmatprep.subr.mxu0 0.0
      %1347 = vmatpush1.msra.mxu0 0.0
      %1348 = vmatprep.subr.mxu0 0.0
      %1349 = vmatpush1.msra.mxu0 0.0
      %1350 = vmatprep.subr.mxu0 0.0
      %1351 = vmatpush1.msra.mxu0 0.0
      %1352 = vmatprep.subr.mxu0 0.0
      %1353 = vmatpush1.msra.mxu0 0.0
      %1354 = vmatprep.subr.mxu0 0.0
      %1355 = vmatpush1.msra.mxu0 0.0
      %1356 = vmatprep.subr.mxu0 0.0
      %1357 = vmatpush1.msra.mxu0 0.0
      %1358 = vmatprep.subr.mxu0 0.0
      %1359 = vmatpush1.msra.mxu0 0.0
      %1360 = vmatprep.subr.mxu0 0.0
      %1361 = vmatpush1.msra.mxu0 0.0
      %1362 = vmatprep.subr.mxu0 0.0
      %1363 = vmatpush1.msra.mxu0 0.0
      %1364 = vmatprep.subr.mxu0 0.0
      %1365 = vmatpush1.msra.mxu0 0.0
      %1366 = vmatprep.subr.mxu0 0.0
      %1367 = vmatpush1.msra.mxu0 0.0
      %1368 = vmatprep.subr.mxu0 0.0
      %1369 = vmatpush1.msra.mxu0 0.0
      %1370 = vmatprep.subr.mxu0 %v1283
      %1371 = vmatpush1.msra.mxu0 %v1282
      %1372 = vmatprep.subr.mxu0 %v1281
      %1373 = vmatpush1.msra.mxu0 %v1280
      %1374 = vmatprep.subr.mxu0 %v1279
      %1375 = vmatpush1.msra.mxu0 %v1278
      %1376 = vmatprep.subr.mxu0 %v1277
      %1377 = vmatpush1.msra.mxu0 %v1276
      %1378 = vmatprep.subr.mxu0 0.0
      %1379 = vmatpush2.msra.mxu0 0.0
      %1380 = vmatprep.subr.mxu0 0.0
      %1381 = vmatpush2.msra.mxu0 0.0
      %1382 = vmatprep.subr.mxu0 0.0
      %1383 = vmatpush2.msra.mxu0 0.0
      %1384 = vmatprep.subr.mxu0 0.0
      %1385 = vmatpush2.msra.mxu0 0.0
      %1386 = vmatprep.subr.mxu0 0.0
      %1387 = vmatpush2.msra.mxu0 0.0
      %1388 = vmatprep.subr.mxu0 0.0
      %1389 = vmatpush2.msra.mxu0 0.0
      %1390 = vmatprep.subr.mxu0 0.0
      %1391 = vmatpush2.msra.mxu0 0.0
      %1392 = vmatprep.subr.mxu0 0.0
      %1393 = vmatpush2.msra.mxu0 0.0
      %1394 = vmatprep.subr.mxu0 0.0
      %1395 = vmatpush2.msra.mxu0 0.0
      %1396 = vmatprep.subr.mxu0 0.0
      %1397 = vmatpush2.msra.mxu0 0.0
      %1398 = vmatprep.subr.mxu0 0.0
      %1399 = vmatpush2.msra.mxu0 0.0
      %1400 = vmatprep.subr.mxu0 0.0
      %1401 = vmatpush2.msra.mxu0 0.0
      %1402 = vmatprep.subr.mxu0 0.0
      %1403 = vmatpush2.msra.mxu0 0.0
      %1404 = vmatprep.subr.mxu0 0.0
      %1405 = vmatpush2.msra.mxu0 0.0
      %1406 = vmatprep.subr.mxu0 0.0
      %1407 = vmatpush2.msra.mxu0 0.0
      %1408 = vmatprep.subr.mxu0 0.0
      %1409 = vmatpush2.msra.mxu0 0.0
      %1410 = vmatprep.mubr.f32.mxu0 0.0
      %1411 = vmatmul.mubr.f32.gmra.mxu0 %v1329
      %v1412 = vpop.f32.mrf.mxu0
      %v1413 = vadd.f32 %v1301, %v1412
      %v1414 = vpop.f32.mrf.mxu0
      %v1415 = vadd.f32 %v1301, %v1414
      %1416 = vmatprep.mubr.f32.mxu0 0.0
      %1417 = vmatmul.mubr.f32.gmra.mxu0 %v1332
      %v1418 = vpop.f32.mrf.mxu0
      %v1419 = vadd.f32 %v1306, %v1418
      %v1420 = vpop.f32.mrf.mxu0
      %v1421 = vadd.f32 %v1306, %v1420
      %1422 = vmatprep.mubr.f32.mxu0 0.0
      %1423 = vmatmul.mubr.f32.gmra.mxu0 %v1335
      %v1424 = vpop.f32.mrf.mxu0
      %v1425 = vadd.f32 %v1311, %v1424
      %v1426 = vpop.f32.mrf.mxu0
      %v1427 = vadd.f32 %v1311, %v1426
      %1428 = vmatprep.mubr.f32.mxu0 0.0
      %1429 = vmatmul.mubr.f32.gmra.mxu0 %v1338
      %v1430 = vpop.f32.mrf.mxu0
      %v1431 = vadd.f32 %v1316, %v1430
      %v1432 = vpop.f32.mrf.mxu0
      %v1433 = vadd.f32 %v1316, %v1432
      %1434 = vmatprep.mubr.f32.mxu0 0.0
      %1435 = vmatmul.mubr.f32.gmra.mxu0 %v1341
      %v1436 = vpop.f32.mrf.mxu0
      %v1437 = vadd.f32 %v1321, %v1436
      %v1438 = vpop.f32.mrf.mxu0
      %v1439 = vadd.f32 %v1321, %v1438
      %1440 = vmatprep.mubr.f32.mxu0 0.0
      %1441 = vmatmul.mubr.f32.gmra.mxu0 %v1344
      %v1442 = vpop.f32.mrf.mxu0
      %v1443 = vadd.f32 %v1326, %v1442
      %v1444 = vpop.f32.mrf.mxu0
      %v1445 = vadd.f32 %v1326, %v1444
      %1446 = vdwg.mxu0
      %v1447 = vmax.f32 %v1437, %v1443
      %v1448 = vrot.slane %v1447, 4
      %v1449 = vmax.f32 %v1447, %v1448
      %v1450 = vrot.slane %v1449, 2
      %v1451 = vmax.f32 %v1449, %v1450
      %v1452 = vrot.slane %v1451, 1
      %v1453 = vmax.f32 %v1451, %v1452
      %v1454 = vmax.f32 %v1439, %v1445
      %v1455 = vrot.slane %v1454, 4
      %v1456 = vmax.f32 %v1454, %v1455
      %v1457 = vrot.slane %v1456, 2
      %v1458 = vmax.f32 %v1456, %v1457
      %v1459 = vrot.slane %v1458, 1
      %v1460 = vmax.f32 %v1458, %v1459
      %v1461 = vsub.f32 %v1437, %v1453
      %v1462 = vsub.f32 %v1439, %v1460
      %v1463 = vsub.f32 %v1443, %v1453
      %v1464 = vsub.f32 %v1445, %v1460
      %v1465 = vmul.f32 %v1461, 1.442695
      %v1466 = vpow.pop %v1465
      %v1467 = vmul.f32 %v1462, 1.442695
      %v1468 = vpow.pop %v1467
      %v1469 = vmul.f32 %v1463, 1.442695
      %v1470 = vpow.pop %v1469
      %v1471 = vmul.f32 %v1464, 1.442695
      %v1472 = vpow.pop %v1471
      %v1473 = vadd.f32 %v1466, %v1470
      %v1474 = vrot.slane %v1473, 4
      %v1475 = vadd.f32 %v1473, %v1474
      %v1476 = vrot.slane %v1475, 2
      %v1477 = vadd.f32 %v1475, %v1476
      %v1478 = vrot.slane %v1477, 1
      %v1479 = vadd.f32 %v1477, %v1478
      %v1480 = vadd.f32 %v1468, %v1472
      %v1481 = vrot.slane %v1480, 4
      %v1482 = vadd.f32 %v1480, %v1481
      %v1483 = vrot.slane %v1482, 2
      %v1484 = vadd.f32 %v1482, %v1483
      %v1485 = vrot.slane %v1484, 1
      %v1486 = vadd.f32 %v1484, %v1485
      %v1487 = vrcp.pop %v1479
      %v1488 = vrcp.pop %v1486
      %v1489 = vmul.f32 %v1466, %v1487
      %v1490 = vmul.f32 %v1468, %v1488
      %v1491 = vmul.f32 %v1470, %v1487
      %v1492 = vmul.f32 %v1472, %v1488
      %1493 = vmatprep.subr.mxu0 0.0
      %1494 = vmatpush1.msra.mxu0 0.0
      %1495 = vmatprep.subr.mxu0 0.0
      %1496 = vmatpush1.msra.mxu0 0.0
      %1497 = vmatprep.subr.mxu0 0.0
      %1498 = vmatpush1.msra.mxu0 0.0
      %1499 = vmatprep.subr.mxu0 0.0
      %1500 = vmatpush1.msra.mxu0 0.0
      %1501 = vmatprep.subr.mxu0 0.0
      %1502 = vmatpush1.msra.mxu0 0.0
      %1503 = vmatprep.subr.mxu0 0.0
      %1504 = vmatpush1.msra.mxu0 0.0
      %1505 = vmatprep.subr.mxu0 0.0
      %1506 = vmatpush1.msra.mxu0 0.0
      %1507 = vmatprep.subr.mxu0 0.0
      %1508 = vmatpush1.msra.mxu0 0.0
      %1509 = vmatprep.subr.mxu0 0.0
      %1510 = vmatpush1.msra.mxu0 0.0
      %1511 = vmatprep.subr.mxu0 0.0
      %1512 = vmatpush1.msra.mxu0 0.0
      %1513 = vmatprep.subr.mxu0 0.0
      %1514 = vmatpush1.msra.mxu0 0.0
      %1515 = vmatprep.subr.mxu0 0.0
      %1516 = vmatpush1.msra.mxu0 0.0
      %1517 = vmatprep.subr.mxu0 0.0
      %1518 = vmatpush1.msra.mxu0 0.0
      %1519 = vmatprep.subr.mxu0 0.0
      %1520 = vmatpush1.msra.mxu0 0.0
      %1521 = vmatprep.subr.mxu0 %v1492
      %1522 = vmatpush1.msra.mxu0 %v1491
      %1523 = vmatprep.subr.mxu0 %v1490
      %1524 = vmatpush1.msra.mxu0 %v1489
      %1525 = vmatprep.subr.mxu0 0.0
      %1526 = vmatpush2.msra.mxu0 0.0
      %1527 = vmatprep.subr.mxu0 0.0
      %1528 = vmatpush2.msra.mxu0 0.0
      %1529 = vmatprep.subr.mxu0 0.0
      %1530 = vmatpush2.msra.mxu0 0.0
      %1531 = vmatprep.subr.mxu0 0.0
      %1532 = vmatpush2.msra.mxu0 0.0
      %1533 = vmatprep.subr.mxu0 0.0
      %1534 = vmatpush2.msra.mxu0 0.0
      %1535 = vmatprep.subr.mxu0 0.0
      %1536 = vmatpush2.msra.mxu0 0.0
      %1537 = vmatprep.subr.mxu0 0.0
      %1538 = vmatpush2.msra.mxu0 0.0
      %1539 = vmatprep.subr.mxu0 0.0
      %1540 = vmatpush2.msra.mxu0 0.0
      %1541 = vmatprep.subr.mxu0 0.0
      %1542 = vmatpush2.msra.mxu0 0.0
      %1543 = vmatprep.subr.mxu0 0.0
      %1544 = vmatpush2.msra.mxu0 0.0
      %1545 = vmatprep.subr.mxu0 0.0
      %1546 = vmatpush2.msra.mxu0 0.0
      %1547 = vmatprep.subr.mxu0 0.0
      %1548 = vmatpush2.msra.mxu0 0.0
      %1549 = vmatprep.subr.mxu0 0.0
      %1550 = vmatpush2.msra.mxu0 0.0
      %1551 = vmatprep.subr.mxu0 0.0
      %1552 = vmatpush2.msra.mxu0 0.0
      %1553 = vmatprep.subr.mxu0 0.0
      %1554 = vmatpush2.msra.mxu0 0.0
      %1555 = vmatprep.subr.mxu0 0.0
      %1556 = vmatpush2.msra.mxu0 0.0
      %1557 = vmatprep.mubr.f32.mxu0 0.0
      %1558 = vmatmul.mubr.f32.gmra.mxu0 %v540
      %v1559 = vpop.f32.mrf.mxu0
      %v1560 = vadd.f32 0.0, %v1559
      %v1561 = vpop.f32.mrf.mxu0
      %v1562 = vadd.f32 0.0, %v1561
      %1563 = vmatprep.mubr.f32.mxu0 0.0
      %1564 = vmatmul.mubr.f32.gmra.mxu0 %v543
      %v1565 = vpop.f32.mrf.mxu0
      %v1566 = vadd.f32 0.0, %v1565
      %v1567 = vpop.f32.mrf.mxu0
      %v1568 = vadd.f32 0.0, %v1567
      %1569 = vmatprep.mubr.f32.mxu0 0.0
      %1570 = vmatmul.mubr.f32.gmra.mxu0 %v546
      %v1571 = vpop.f32.mrf.mxu0
      %v1572 = vadd.f32 0.0, %v1571
      %v1573 = vpop.f32.mrf.mxu0
      %v1574 = vadd.f32 0.0, %v1573
      %1575 = vmatprep.mubr.f32.mxu0 0.0
      %1576 = vmatmul.mubr.f32.gmra.mxu0 %v549
      %v1577 = vpop.f32.mrf.mxu0
      %v1578 = vadd.f32 0.0, %v1577
      %v1579 = vpop.f32.mrf.mxu0
      %v1580 = vadd.f32 0.0, %v1579
      %1581 = vdwg.mxu0
      %v1582 = vadd.f32 %v1413, %v1560
      %v1583 = vadd.f32 %v1415, %v1562
      %v1584 = vadd.f32 %v1419, %v1566
      %v1585 = vadd.f32 %v1421, %v1568
      %v1586 = vadd.f32 %v1425, %v1572
      %v1587 = vadd.f32 %v1427, %v1574
      %v1588 = vadd.f32 %v1431, %v1578
      %v1589 = vadd.f32 %v1433, %v1580
      %v1590 = vmax.f32 %v1582, 0.0
      %v1591 = vmax.f32 %v1583, 0.0
      %v1592 = vmax.f32 %v1584, 0.0
      %v1593 = vmax.f32 %v1585, 0.0
      %v1594 = vmax.f32 %v1586, 0.0
      %v1595 = vmax.f32 %v1587, 0.0
      %v1596 = vmax.f32 %v1588, 0.0
      %v1597 = vmax.f32 %v1589, 0.0
      %s1598 = scalar_lea.vmem %s2, 144
      %v1599 = vld [vmem:[%s1598] sm:$0xff]
      %v1600 = vld [vmem:[%s1598 + $0x8] sm:$0xff]
      %v1601 = vld [vmem:[%s1598 + $0x10] sm:$0xff]
      %v1602 = vld [vmem:[%s1598 + $0x18] sm:$0xff]
      %v1603 = vld [vmem:[%s1598 + $0x20] sm:$0xff]
      %v1604 = vld [vmem:[%s1598 + $0x28] sm:$0xff]
      %s1605 = scalar_lea.vmem %s3, 192
      %v1606 = vld [vmem:[%s1605] sm:$0xff]
      %v1607 = vld [vmem:[%s1605 + $0x8] sm:$0xff]
      %v1608 = vld [vmem:[%s1605 + $0x10] sm:$0xff]
      %v1609 = vld [vmem:[%s1605 + $0x18] sm:$0xff]
      %v1610 = vld [vmem:[%s1605 + $0x20] sm:$0xff]
      %v1611 = vld [vmem:[%s1605 + $0x28] sm:$0xff]
      %1613 = vset.pattern.permute.xlu0 0
      %1614 = vperm.xlu0 %1613, %v1606
      %v1615 = vpop.permute.xlu0 %1614
      %1618 = vset.pattern.permute.xlu0 0
      %1619 = vperm.xlu0 %1618, %v1607
      %v1620 = vpop.permute.xlu0 %1619
      %1623 = vset.pattern.permute.xlu0 0
      %1624 = vperm.xlu0 %1623, %v1608
      %v1625 = vpop.permute.xlu0 %1624
      %1628 = vset.pattern.permute.xlu0 0
      %1629 = vperm.xlu0 %1628, %v1609
      %v1630 = vpop.permute.xlu0 %1629
      %1633 = vset.pattern.permute.xlu0 0
      %1634 = vperm.xlu0 %1633, %v1610
      %v1635 = vpop.permute.xlu0 %1634
      %1638 = vset.pattern.permute.xlu0 0
      %1639 = vperm.xlu0 %1638, %v1611
      %v1640 = vpop.permute.xlu0 %1639
      %v1643 = vsel %vm699, %v1599, 0
      %v1646 = vsel %vm699, %v1600, 0
      %v1649 = vsel %vm699, %v1601, 0
      %v1652 = vsel %vm699, %v1602, 0
      %v1655 = vsel %vm699, %v1603, 0
      %v1658 = vsel %vm699, %v1604, 0
      %1660 = vmatprep.subr.mxu0 0.0
      %1661 = vmatpush1.msra.mxu0 0.0
      %1662 = vmatprep.subr.mxu0 0.0
      %1663 = vmatpush1.msra.mxu0 0.0
      %1664 = vmatprep.subr.mxu0 0.0
      %1665 = vmatpush1.msra.mxu0 0.0
      %1666 = vmatprep.subr.mxu0 0.0
      %1667 = vmatpush1.msra.mxu0 0.0
      %1668 = vmatprep.subr.mxu0 0.0
      %1669 = vmatpush1.msra.mxu0 0.0
      %1670 = vmatprep.subr.mxu0 0.0
      %1671 = vmatpush1.msra.mxu0 0.0
      %1672 = vmatprep.subr.mxu0 0.0
      %1673 = vmatpush1.msra.mxu0 0.0
      %1674 = vmatprep.subr.mxu0 0.0
      %1675 = vmatpush1.msra.mxu0 0.0
      %1676 = vmatprep.subr.mxu0 0.0
      %1677 = vmatpush1.msra.mxu0 0.0
      %1678 = vmatprep.subr.mxu0 0.0
      %1679 = vmatpush1.msra.mxu0 0.0
      %1680 = vmatprep.subr.mxu0 0.0
      %1681 = vmatpush1.msra.mxu0 0.0
      %1682 = vmatprep.subr.mxu0 0.0
      %1683 = vmatpush1.msra.mxu0 0.0
      %1684 = vmatprep.subr.mxu0 %v1597
      %1685 = vmatpush1.msra.mxu0 %v1596
      %1686 = vmatprep.subr.mxu0 %v1595
      %1687 = vmatpush1.msra.mxu0 %v1594
      %1688 = vmatprep.subr.mxu0 %v1593
      %1689 = vmatpush1.msra.mxu0 %v1592
      %1690 = vmatprep.subr.mxu0 %v1591
      %1691 = vmatpush1.msra.mxu0 %v1590
      %1692 = vmatprep.subr.mxu0 0.0
      %1693 = vmatpush2.msra.mxu0 0.0
      %1694 = vmatprep.subr.mxu0 0.0
      %1695 = vmatpush2.msra.mxu0 0.0
      %1696 = vmatprep.subr.mxu0 0.0
      %1697 = vmatpush2.msra.mxu0 0.0
      %1698 = vmatprep.subr.mxu0 0.0
      %1699 = vmatpush2.msra.mxu0 0.0
      %1700 = vmatprep.subr.mxu0 0.0
      %1701 = vmatpush2.msra.mxu0 0.0
      %1702 = vmatprep.subr.mxu0 0.0
      %1703 = vmatpush2.msra.mxu0 0.0
      %1704 = vmatprep.subr.mxu0 0.0
      %1705 = vmatpush2.msra.mxu0 0.0
      %1706 = vmatprep.subr.mxu0 0.0
      %1707 = vmatpush2.msra.mxu0 0.0
      %1708 = vmatprep.subr.mxu0 0.0
      %1709 = vmatpush2.msra.mxu0 0.0
      %1710 = vmatprep.subr.mxu0 0.0
      %1711 = vmatpush2.msra.mxu0 0.0
      %1712 = vmatprep.subr.mxu0 0.0
      %1713 = vmatpush2.msra.mxu0 0.0
      %1714 = vmatprep.subr.mxu0 0.0
      %1715 = vmatpush2.msra.mxu0 0.0
      %1716 = vmatprep.subr.mxu0 0.0
      %1717 = vmatpush2.msra.mxu0 0.0
      %1718 = vmatprep.subr.mxu0 0.0
      %1719 = vmatpush2.msra.mxu0 0.0
      %1720 = vmatprep.subr.mxu0 0.0
      %1721 = vmatpush2.msra.mxu0 0.0
      %1722 = vmatprep.subr.mxu0 0.0
      %1723 = vmatpush2.msra.mxu0 0.0
      %1724 = vmatprep.mubr.f32.mxu0 0.0
      %1725 = vmatmul.mubr.f32.gmra.mxu0 %v1643
      %v1726 = vpop.f32.mrf.mxu0
      %v1727 = vadd.f32 %v1615, %v1726
      %v1728 = vpop.f32.mrf.mxu0
      %v1729 = vadd.f32 %v1615, %v1728
      %1730 = vmatprep.mubr.f32.mxu0 0.0
      %1731 = vmatmul.mubr.f32.gmra.mxu0 %v1646
      %v1732 = vpop.f32.mrf.mxu0
      %v1733 = vadd.f32 %v1620, %v1732
      %v1734 = vpop.f32.mrf.mxu0
      %v1735 = vadd.f32 %v1620, %v1734
      %1736 = vmatprep.mubr.f32.mxu0 0.0
      %1737 = vmatmul.mubr.f32.gmra.mxu0 %v1649
      %v1738 = vpop.f32.mrf.mxu0
      %v1739 = vadd.f32 %v1625, %v1738
      %v1740 = vpop.f32.mrf.mxu0
      %v1741 = vadd.f32 %v1625, %v1740
      %1742 = vmatprep.mubr.f32.mxu0 0.0
      %1743 = vmatmul.mubr.f32.gmra.mxu0 %v1652
      %v1744 = vpop.f32.mrf.mxu0
      %v1745 = vadd.f32 %v1630, %v1744
      %v1746 = vpop.f32.mrf.mxu0
      %v1747 = vadd.f32 %v1630, %v1746
      %1748 = vmatprep.mubr.f32.mxu0 0.0
      %1749 = vmatmul.mubr.f32.gmra.mxu0 %v1655
      %v1750 = vpop.f32.mrf.mxu0
      %v1751 = vadd.f32 %v1635, %v1750
      %v1752 = vpop.f32.mrf.mxu0
      %v1753 = vadd.f32 %v1635, %v1752
      %1754 = vmatprep.mubr.f32.mxu0 0.0
      %1755 = vmatmul.mubr.f32.gmra.mxu0 %v1658
      %v1756 = vpop.f32.mrf.mxu0
      %v1757 = vadd.f32 %v1640, %v1756
      %v1758 = vpop.f32.mrf.mxu0
      %v1759 = vadd.f32 %v1640, %v1758
      %1760 = vdwg.mxu0
      %v1761 = vmax.f32 %v1751, %v1757
      %v1762 = vrot.slane %v1761, 4
      %v1763 = vmax.f32 %v1761, %v1762
      %v1764 = vrot.slane %v1763, 2
      %v1765 = vmax.f32 %v1763, %v1764
      %v1766 = vrot.slane %v1765, 1
      %v1767 = vmax.f32 %v1765, %v1766
      %v1768 = vmax.f32 %v1753, %v1759
      %v1769 = vrot.slane %v1768, 4
      %v1770 = vmax.f32 %v1768, %v1769
      %v1771 = vrot.slane %v1770, 2
      %v1772 = vmax.f32 %v1770, %v1771
      %v1773 = vrot.slane %v1772, 1
      %v1774 = vmax.f32 %v1772, %v1773
      %v1775 = vsub.f32 %v1751, %v1767
      %v1776 = vsub.f32 %v1753, %v1774
      %v1777 = vsub.f32 %v1757, %v1767
      %v1778 = vsub.f32 %v1759, %v1774
      %v1779 = vmul.f32 %v1775, 1.442695
      %v1780 = vpow.pop %v1779
      %v1781 = vmul.f32 %v1776, 1.442695
      %v1782 = vpow.pop %v1781
      %v1783 = vmul.f32 %v1777, 1.442695
      %v1784 = vpow.pop %v1783
      %v1785 = vmul.f32 %v1778, 1.442695
      %v1786 = vpow.pop %v1785
      %v1787 = vadd.f32 %v1780, %v1784
      %v1788 = vrot.slane %v1787, 4
      %v1789 = vadd.f32 %v1787, %v1788
      %v1790 = vrot.slane %v1789, 2
      %v1791 = vadd.f32 %v1789, %v1790
      %v1792 = vrot.slane %v1791, 1
      %v1793 = vadd.f32 %v1791, %v1792
      %v1794 = vadd.f32 %v1782, %v1786
      %v1795 = vrot.slane %v1794, 4
      %v1796 = vadd.f32 %v1794, %v1795
      %v1797 = vrot.slane %v1796, 2
      %v1798 = vadd.f32 %v1796, %v1797
      %v1799 = vrot.slane %v1798, 1
      %v1800 = vadd.f32 %v1798, %v1799
      %v1801 = vrcp.pop %v1793
      %v1802 = vrcp.pop %v1800
      %v1803 = vmul.f32 %v1780, %v1801
      %v1804 = vmul.f32 %v1782, %v1802
      %v1805 = vmul.f32 %v1784, %v1801
      %v1806 = vmul.f32 %v1786, %v1802
      %1807 = vmatprep.subr.mxu0 0.0
      %1808 = vmatpush1.msra.mxu0 0.0
      %1809 = vmatprep.subr.mxu0 0.0
      %1810 = vmatpush1.msra.mxu0 0.0
      %1811 = vmatprep.subr.mxu0 0.0
      %1812 = vmatpush1.msra.mxu0 0.0
      %1813 = vmatprep.subr.mxu0 0.0
      %1814 = vmatpush1.msra.mxu0 0.0
      %1815 = vmatprep.subr.mxu0 0.0
      %1816 = vmatpush1.msra.mxu0 0.0
      %1817 = vmatprep.subr.mxu0 0.0
      %1818 = vmatpush1.msra.mxu0 0.0
      %1819 = vmatprep.subr.mxu0 0.0
      %1820 = vmatpush1.msra.mxu0 0.0
      %1821 = vmatprep.subr.mxu0 0.0
      %1822 = vmatpush1.msra.mxu0 0.0
      %1823 = vmatprep.subr.mxu0 0.0
      %1824 = vmatpush1.msra.mxu0 0.0
      %1825 = vmatprep.subr.mxu0 0.0
      %1826 = vmatpush1.msra.mxu0 0.0
      %1827 = vmatprep.subr.mxu0 0.0
      %1828 = vmatpush1.msra.mxu0 0.0
      %1829 = vmatprep.subr.mxu0 0.0
      %1830 = vmatpush1.msra.mxu0 0.0
      %1831 = vmatprep.subr.mxu0 0.0
      %1832 = vmatpush1.msra.mxu0 0.0
      %1833 = vmatprep.subr.mxu0 0.0
      %1834 = vmatpush1.msra.mxu0 0.0
      %1835 = vmatprep.subr.mxu0 %v1806
      %1836 = vmatpush1.msra.mxu0 %v1805
      %1837 = vmatprep.subr.mxu0 %v1804
      %1838 = vmatpush1.msra.mxu0 %v1803
      %1839 = vmatprep.subr.mxu0 0.0
      %1840 = vmatpush2.msra.mxu0 0.0
      %1841 = vmatprep.subr.mxu0 0.0
      %1842 = vmatpush2.msra.mxu0 0.0
      %1843 = vmatprep.subr.mxu0 0.0
      %1844 = vmatpush2.msra.mxu0 0.0
      %1845 = vmatprep.subr.mxu0 0.0
      %1846 = vmatpush2.msra.mxu0 0.0
      %1847 = vmatprep.subr.mxu0 0.0
      %1848 = vmatpush2.msra.mxu0 0.0
      %1849 = vmatprep.subr.mxu0 0.0
      %1850 = vmatpush2.msra.mxu0 0.0
      %1851 = vmatprep.subr.mxu0 0.0
      %1852 = vmatpush2.msra.mxu0 0.0
      %1853 = vmatprep.subr.mxu0 0.0
      %1854 = vmatpush2.msra.mxu0 0.0
      %1855 = vmatprep.subr.mxu0 0.0
      %1856 = vmatpush2.msra.mxu0 0.0
      %1857 = vmatprep.subr.mxu0 0.0
      %1858 = vmatpush2.msra.mxu0 0.0
      %1859 = vmatprep.subr.mxu0 0.0
      %1860 = vmatpush2.msra.mxu0 0.0
      %1861 = vmatprep.subr.mxu0 0.0
      %1862 = vmatpush2.msra.mxu0 0.0
      %1863 = vmatprep.subr.mxu0 0.0
      %1864 = vmatpush2.msra.mxu0 0.0
      %1865 = vmatprep.subr.mxu0 0.0
      %1866 = vmatpush2.msra.mxu0 0.0
      %1867 = vmatprep.subr.mxu0 0.0
      %1868 = vmatpush2.msra.mxu0 0.0
      %1869 = vmatprep.subr.mxu0 0.0
      %1870 = vmatpush2.msra.mxu0 0.0
      %1871 = vmatprep.mubr.f32.mxu0 0.0
      %1872 = vmatmul.mubr.f32.gmra.mxu0 %v540
      %v1873 = vpop.f32.mrf.mxu0
      %v1874 = vadd.f32 0.0, %v1873
      %v1875 = vpop.f32.mrf.mxu0
      %v1876 = vadd.f32 0.0, %v1875
      %1877 = vmatprep.mubr.f32.mxu0 0.0
      %1878 = vmatmul.mubr.f32.gmra.mxu0 %v543
      %v1879 = vpop.f32.mrf.mxu0
      %v1880 = vadd.f32 0.0, %v1879
      %v1881 = vpop.f32.mrf.mxu0
      %v1882 = vadd.f32 0.0, %v1881
      %1883 = vmatprep.mubr.f32.mxu0 0.0
      %1884 = vmatmul.mubr.f32.gmra.mxu0 %v546
      %v1885 = vpop.f32.mrf.mxu0
      %v1886 = vadd.f32 0.0, %v1885
      %v1887 = vpop.f32.mrf.mxu0
      %v1888 = vadd.f32 0.0, %v1887
      %1889 = vmatprep.mubr.f32.mxu0 0.0
      %1890 = vmatmul.mubr.f32.gmra.mxu0 %v549
      %v1891 = vpop.f32.mrf.mxu0
      %v1892 = vadd.f32 0.0, %v1891
      %v1893 = vpop.f32.mrf.mxu0
      %v1894 = vadd.f32 0.0, %v1893
      %1895 = vdwg.mxu0
      %v1896 = vadd.f32 %v1727, %v1874
      %v1897 = vadd.f32 %v1729, %v1876
      %v1898 = vadd.f32 %v1733, %v1880
      %v1899 = vadd.f32 %v1735, %v1882
      %v1900 = vadd.f32 %v1739, %v1886
      %v1901 = vadd.f32 %v1741, %v1888
      %v1902 = vadd.f32 %v1745, %v1892
      %v1903 = vadd.f32 %v1747, %v1894
      %v1904 = vmax.f32 %v1896, 0.0
      %v1905 = vmax.f32 %v1897, 0.0
      %v1906 = vmax.f32 %v1898, 0.0
      %v1907 = vmax.f32 %v1899, 0.0
      %v1908 = vmax.f32 %v1900, 0.0
      %v1909 = vmax.f32 %v1901, 0.0
      %v1910 = vmax.f32 %v1902, 0.0
      %v1911 = vmax.f32 %v1903, 0.0
      %s1912 = scalar_lea.vmem %s2, 192
      %v1913 = vld [vmem:[%s1912] sm:$0xff]
      %v1914 = vld [vmem:[%s1912 + $0x8] sm:$0xff]
      %v1915 = vld [vmem:[%s1912 + $0x10] sm:$0xff]
      %v1916 = vld [vmem:[%s1912 + $0x18] sm:$0xff]
      %v1917 = vld [vmem:[%s1912 + $0x20] sm:$0xff]
      %v1918 = vld [vmem:[%s1912 + $0x28] sm:$0xff]
      %s1919 = scalar_lea.vmem %s3, 240
      %v1920 = vld [vmem:[%s1919] sm:$0xff]
      %v1921 = vld [vmem:[%s1919 + $0x8] sm:$0xff]
      %v1922 = vld [vmem:[%s1919 + $0x10] sm:$0xff]
      %v1923 = vld [vmem:[%s1919 + $0x18] sm:$0xff]
      %v1924 = vld [vmem:[%s1919 + $0x20] sm:$0xff]
      %v1925 = vld [vmem:[%s1919 + $0x28] sm:$0xff]
      %1927 = vset.pattern.permute.xlu0 0
      %1928 = vperm.xlu0 %1927, %v1920
      %v1929 = vpop.permute.xlu0 %1928
      %1932 = vset.pattern.permute.xlu0 0
      %1933 = vperm.xlu0 %1932, %v1921
      %v1934 = vpop.permute.xlu0 %1933
      %1937 = vset.pattern.permute.xlu0 0
      %1938 = vperm.xlu0 %1937, %v1922
      %v1939 = vpop.permute.xlu0 %1938
      %1942 = vset.pattern.permute.xlu0 0
      %1943 = vperm.xlu0 %1942, %v1923
      %v1944 = vpop.permute.xlu0 %1943
      %1947 = vset.pattern.permute.xlu0 0
      %1948 = vperm.xlu0 %1947, %v1924
      %v1949 = vpop.permute.xlu0 %1948
      %1952 = vset.pattern.permute.xlu0 0
      %1953 = vperm.xlu0 %1952, %v1925
      %v1954 = vpop.permute.xlu0 %1953
      %v1957 = vsel %vm699, %v1913, 0
      %v1960 = vsel %vm699, %v1914, 0
      %v1963 = vsel %vm699, %v1915, 0
      %v1966 = vsel %vm699, %v1916, 0
      %v1969 = vsel %vm699, %v1917, 0
      %v1972 = vsel %vm699, %v1918, 0
      %1974 = vmatprep.subr.mxu0 0.0
      %1975 = vmatpush1.msra.mxu0 0.0
      %1976 = vmatprep.subr.mxu0 0.0
      %1977 = vmatpush1.msra.mxu0 0.0
      %1978 = vmatprep.subr.mxu0 0.0
      %1979 = vmatpush1.msra.mxu0 0.0
      %1980 = vmatprep.subr.mxu0 0.0
      %1981 = vmatpush1.msra.mxu0 0.0
      %1982 = vmatprep.subr.mxu0 0.0
      %1983 = vmatpush1.msra.mxu0 0.0
      %1984 = vmatprep.subr.mxu0 0.0
      %1985 = vmatpush1.msra.mxu0 0.0
      %1986 = vmatprep.subr.mxu0 0.0
      %1987 = vmatpush1.msra.mxu0 0.0
      %1988 = vmatprep.subr.mxu0 0.0
      %1989 = vmatpush1.msra.mxu0 0.0
      %1990 = vmatprep.subr.mxu0 0.0
      %1991 = vmatpush1.msra.mxu0 0.0
      %1992 = vmatprep.subr.mxu0 0.0
      %1993 = vmatpush1.msra.mxu0 0.0
      %1994 = vmatprep.subr.mxu0 0.0
      %1995 = vmatpush1.msra.mxu0 0.0
      %1996 = vmatprep.subr.mxu0 0.0
      %1997 = vmatpush1.msra.mxu0 0.0
      %1998 = vmatprep.subr.mxu0 %v1911
      %1999 = vmatpush1.msra.mxu0 %v1910
      %2000 = vmatprep.subr.mxu0 %v1909
      %2001 = vmatpush1.msra.mxu0 %v1908
      %2002 = vmatprep.subr.mxu0 %v1907
      %2003 = vmatpush1.msra.mxu0 %v1906
      %2004 = vmatprep.subr.mxu0 %v1905
      %2005 = vmatpush1.msra.mxu0 %v1904
      %2006 = vmatprep.subr.mxu0 0.0
      %2007 = vmatpush2.msra.mxu0 0.0
      %2008 = vmatprep.subr.mxu0 0.0
      %2009 = vmatpush2.msra.mxu0 0.0
      %2010 = vmatprep.subr.mxu0 0.0
      %2011 = vmatpush2.msra.mxu0 0.0
      %2012 = vmatprep.subr.mxu0 0.0
      %2013 = vmatpush2.msra.mxu0 0.0
      %2014 = vmatprep.subr.mxu0 0.0
      %2015 = vmatpush2.msra.mxu0 0.0
      %2016 = vmatprep.subr.mxu0 0.0
      %2017 = vmatpush2.msra.mxu0 0.0
      %2018 = vmatprep.subr.mxu0 0.0
      %2019 = vmatpush2.msra.mxu0 0.0
      %2020 = vmatprep.subr.mxu0 0.0
      %2021 = vmatpush2.msra.mxu0 0.0
      %2022 = vmatprep.subr.mxu0 0.0
      %2023 = vmatpush2.msra.mxu0 0.0
      %2024 = vmatprep.subr.mxu0 0.0
      %2025 = vmatpush2.msra.mxu0 0.0
      %2026 = vmatprep.subr.mxu0 0.0
      %2027 = vmatpush2.msra.mxu0 0.0
      %2028 = vmatprep.subr.mxu0 0.0
      %2029 = vmatpush2.msra.mxu0 0.0
      %2030 = vmatprep.subr.mxu0 0.0
      %2031 = vmatpush2.msra.mxu0 0.0
      %2032 = vmatprep.subr.mxu0 0.0
      %2033 = vmatpush2.msra.mxu0 0.0
      %2034 = vmatprep.subr.mxu0 0.0
      %2035 = vmatpush2.msra.mxu0 0.0
      %2036 = vmatprep.subr.mxu0 0.0
      %2037 = vmatpush2.msra.mxu0 0.0
      %2038 = vmatprep.mubr.f32.mxu0 0.0
      %2039 = vmatmul.mubr.f32.gmra.mxu0 %v1957
      %v2040 = vpop.f32.mrf.mxu0
      %v2041 = vadd.f32 %v1929, %v2040
      %v2042 = vpop.f32.mrf.mxu0
      %v2043 = vadd.f32 %v1929, %v2042
      %2044 = vmatprep.mubr.f32.mxu0 0.0
      %2045 = vmatmul.mubr.f32.gmra.mxu0 %v1960
      %v2046 = vpop.f32.mrf.mxu0
      %v2047 = vadd.f32 %v1934, %v2046
      %v2048 = vpop.f32.mrf.mxu0
      %v2049 = vadd.f32 %v1934, %v2048
      %2050 = vmatprep.mubr.f32.mxu0 0.0
      %2051 = vmatmul.mubr.f32.gmra.mxu0 %v1963
      %v2052 = vpop.f32.mrf.mxu0
      %v2053 = vadd.f32 %v1939, %v2052
      %v2054 = vpop.f32.mrf.mxu0
      %v2055 = vadd.f32 %v1939, %v2054
      %2056 = vmatprep.mubr.f32.mxu0 0.0
      %2057 = vmatmul.mubr.f32.gmra.mxu0 %v1966
      %v2058 = vpop.f32.mrf.mxu0
      %v2059 = vadd.f32 %v1944, %v2058
      %v2060 = vpop.f32.mrf.mxu0
      %v2061 = vadd.f32 %v1944, %v2060
      %2062 = vmatprep.mubr.f32.mxu0 0.0
      %2063 = vmatmul.mubr.f32.gmra.mxu0 %v1969
      %v2064 = vpop.f32.mrf.mxu0
      %v2065 = vadd.f32 %v1949, %v2064
      %v2066 = vpop.f32.mrf.mxu0
      %v2067 = vadd.f32 %v1949, %v2066
      %2068 = vmatprep.mubr.f32.mxu0 0.0
      %2069 = vmatmul.mubr.f32.gmra.mxu0 %v1972
      %v2070 = vpop.f32.mrf.mxu0
      %v2071 = vadd.f32 %v1954, %v2070
      %v2072 = vpop.f32.mrf.mxu0
      %v2073 = vadd.f32 %v1954, %v2072
      %2074 = vdwg.mxu0
      %v2075 = vmax.f32 %v2065, %v2071
      %v2076 = vrot.slane %v2075, 4
      %v2077 = vmax.f32 %v2075, %v2076
      %v2078 = vrot.slane %v2077, 2
      %v2079 = vmax.f32 %v2077, %v2078
      %v2080 = vrot.slane %v2079, 1
      %v2081 = vmax.f32 %v2079, %v2080
      %v2082 = vmax.f32 %v2067, %v2073
      %v2083 = vrot.slane %v2082, 4
      %v2084 = vmax.f32 %v2082, %v2083
      %v2085 = vrot.slane %v2084, 2
      %v2086 = vmax.f32 %v2084, %v2085
      %v2087 = vrot.slane %v2086, 1
      %v2088 = vmax.f32 %v2086, %v2087
      %v2089 = vsub.f32 %v2065, %v2081
      %v2090 = vsub.f32 %v2067, %v2088
      %v2091 = vsub.f32 %v2071, %v2081
      %v2092 = vsub.f32 %v2073, %v2088
      %v2093 = vmul.f32 %v2089, 1.442695
      %v2094 = vpow.pop %v2093
      %v2095 = vmul.f32 %v2090, 1.442695
      %v2096 = vpow.pop %v2095
      %v2097 = vmul.f32 %v2091, 1.442695
      %v2098 = vpow.pop %v2097
      %v2099 = vmul.f32 %v2092, 1.442695
      %v2100 = vpow.pop %v2099
      %v2101 = vadd.f32 %v2094, %v2098
      %v2102 = vrot.slane %v2101, 4
      %v2103 = vadd.f32 %v2101, %v2102
      %v2104 = vrot.slane %v2103, 2
      %v2105 = vadd.f32 %v2103, %v2104
      %v2106 = vrot.slane %v2105, 1
      %v2107 = vadd.f32 %v2105, %v2106
      %v2108 = vadd.f32 %v2096, %v2100
      %v2109 = vrot.slane %v2108, 4
      %v2110 = vadd.f32 %v2108, %v2109
      %v2111 = vrot.slane %v2110, 2
      %v2112 = vadd.f32 %v2110, %v2111
      %v2113 = vrot.slane %v2112, 1
      %v2114 = vadd.f32 %v2112, %v2113
      %v2115 = vrcp.pop %v2107
      %v2116 = vrcp.pop %v2114
      %v2117 = vmul.f32 %v2094, %v2115
      %v2118 = vmul.f32 %v2096, %v2116
      %v2119 = vmul.f32 %v2098, %v2115
      %v2120 = vmul.f32 %v2100, %v2116
      %2121 = vmatprep.subr.mxu0 0.0
      %2122 = vmatpush1.msra.mxu0 0.0
      %2123 = vmatprep.subr.mxu0 0.0
      %2124 = vmatpush1.msra.mxu0 0.0
      %2125 = vmatprep.subr.mxu0 0.0
      %2126 = vmatpush1.msra.mxu0 0.0
      %2127 = vmatprep.subr.mxu0 0.0
      %2128 = vmatpush1.msra.mxu0 0.0
      %2129 = vmatprep.subr.mxu0 0.0
      %2130 = vmatpush1.msra.mxu0 0.0
      %2131 = vmatprep.subr.mxu0 0.0
      %2132 = vmatpush1.msra.mxu0 0.0
      %2133 = vmatprep.subr.mxu0 0.0
      %2134 = vmatpush1.msra.mxu0 0.0
      %2135 = vmatprep.subr.mxu0 0.0
      %2136 = vmatpush1.msra.mxu0 0.0
      %2137 = vmatprep.subr.mxu0 0.0
      %2138 = vmatpush1.msra.mxu0 0.0
      %2139 = vmatprep.subr.mxu0 0.0
      %2140 = vmatpush1.msra.mxu0 0.0
      %2141 = vmatprep.subr.mxu0 0.0
      %2142 = vmatpush1.msra.mxu0 0.0
      %2143 = vmatprep.subr.mxu0 0.0
      %2144 = vmatpush1.msra.mxu0 0.0
      %2145 = vmatprep.subr.mxu0 0.0
      %2146 = vmatpush1.msra.mxu0 0.0
      %2147 = vmatprep.subr.mxu0 0.0
      %2148 = vmatpush1.msra.mxu0 0.0
      %2149 = vmatprep.subr.mxu0 %v2120
      %2150 = vmatpush1.msra.mxu0 %v2119
      %2151 = vmatprep.subr.mxu0 %v2118
      %2152 = vmatpush1.msra.mxu0 %v2117
      %2153 = vmatprep.subr.mxu0 0.0
      %2154 = vmatpush2.msra.mxu0 0.0
      %2155 = vmatprep.subr.mxu0 0.0
      %2156 = vmatpush2.msra.mxu0 0.0
      %2157 = vmatprep.subr.mxu0 0.0
      %2158 = vmatpush2.msra.mxu0 0.0
      %2159 = vmatprep.subr.mxu0 0.0
      %2160 = vmatpush2.msra.mxu0 0.0
      %2161 = vmatprep.subr.mxu0 0.0
      %2162 = vmatpush2.msra.mxu0 0.0
      %2163 = vmatprep.subr.mxu0 0.0
      %2164 = vmatpush2.msra.mxu0 0.0
      %2165 = vmatprep.subr.mxu0 0.0
      %2166 = vmatpush2.msra.mxu0 0.0
      %2167 = vmatprep.subr.mxu0 0.0
      %2168 = vmatpush2.msra.mxu0 0.0
      %2169 = vmatprep.subr.mxu0 0.0
      %2170 = vmatpush2.msra.mxu0 0.0
      %2171 = vmatprep.subr.mxu0 0.0
      %2172 = vmatpush2.msra.mxu0 0.0
      %2173 = vmatprep.subr.mxu0 0.0
      %2174 = vmatpush2.msra.mxu0 0.0
      %2175 = vmatprep.subr.mxu0 0.0
      %2176 = vmatpush2.msra.mxu0 0.0
      %2177 = vmatprep.subr.mxu0 0.0
      %2178 = vmatpush2.msra.mxu0 0.0
      %2179 = vmatprep.subr.mxu0 0.0
      %2180 = vmatpush2.msra.mxu0 0.0
      %2181 = vmatprep.subr.mxu0 0.0
      %2182 = vmatpush2.msra.mxu0 0.0
      %2183 = vmatprep.subr.mxu0 0.0
      %2184 = vmatpush2.msra.mxu0 0.0
      %2185 = vmatprep.mubr.f32.mxu0 0.0
      %2186 = vmatmul.mubr.f32.gmra.mxu0 %v540
      %v2187 = vpop.f32.mrf.mxu0
      %v2188 = vadd.f32 0.0, %v2187
      %v2189 = vpop.f32.mrf.mxu0
      %v2190 = vadd.f32 0.0, %v2189
      %2191 = vmatprep.mubr.f32.mxu0 0.0
      %2192 = vmatmul.mubr.f32.gmra.mxu0 %v543
      %v2193 = vpop.f32.mrf.mxu0
      %v2194 = vadd.f32 0.0, %v2193
      %v2195 = vpop.f32.mrf.mxu0
      %v2196 = vadd.f32 0.0, %v2195
      %2197 = vmatprep.mubr.f32.mxu0 0.0
      %2198 = vmatmul.mubr.f32.gmra.mxu0 %v546
      %v2199 = vpop.f32.mrf.mxu0
      %v2200 = vadd.f32 0.0, %v2199
      %v2201 = vpop.f32.mrf.mxu0
      %v2202 = vadd.f32 0.0, %v2201
      %2203 = vmatprep.mubr.f32.mxu0 0.0
      %2204 = vmatmul.mubr.f32.gmra.mxu0 %v549
      %v2205 = vpop.f32.mrf.mxu0
      %v2206 = vadd.f32 0.0, %v2205
      %v2207 = vpop.f32.mrf.mxu0
      %v2208 = vadd.f32 0.0, %v2207
      %2209 = vdwg.mxu0
      %v2210 = vadd.f32 %v2041, %v2188
      %v2211 = vadd.f32 %v2043, %v2190
      %v2212 = vadd.f32 %v2047, %v2194
      %v2213 = vadd.f32 %v2049, %v2196
      %v2214 = vadd.f32 %v2053, %v2200
      %v2215 = vadd.f32 %v2055, %v2202
      %v2216 = vadd.f32 %v2059, %v2206
      %v2217 = vadd.f32 %v2061, %v2208
      %v2218 = vmax.f32 %v2210, 0.0
      %v2219 = vmax.f32 %v2211, 0.0
      %v2220 = vmax.f32 %v2212, 0.0
      %v2221 = vmax.f32 %v2213, 0.0
      %v2222 = vmax.f32 %v2214, 0.0
      %v2223 = vmax.f32 %v2215, 0.0
      %v2224 = vmax.f32 %v2216, 0.0
      %v2225 = vmax.f32 %v2217, 0.0
      %s2226 = scalar_lea.vmem %s2, 240
      %v2227 = vld [vmem:[%s2226] sm:$0xff]
      %v2228 = vld [vmem:[%s2226 + $0x8] sm:$0xff]
      %v2229 = vld [vmem:[%s2226 + $0x10] sm:$0xff]
      %v2230 = vld [vmem:[%s2226 + $0x18] sm:$0xff]
      %v2231 = vld [vmem:[%s2226 + $0x20] sm:$0xff]
      %v2232 = vld [vmem:[%s2226 + $0x28] sm:$0xff]
      %s2233 = scalar_lea.vmem %s3, 288
      %v2234 = vld [vmem:[%s2233] sm:$0xff]
      %v2235 = vld [vmem:[%s2233 + $0x8] sm:$0xff]
      %v2236 = vld [vmem:[%s2233 + $0x10] sm:$0xff]
      %v2237 = vld [vmem:[%s2233 + $0x18] sm:$0xff]
      %v2238 = vld [vmem:[%s2233 + $0x20] sm:$0xff]
      %v2239 = vld [vmem:[%s2233 + $0x28] sm:$0xff]
      %2241 = vset.pattern.permute.xlu0 0
      %2242 = vperm.xlu0 %2241, %v2234
      %v2243 = vpop.permute.xlu0 %2242
      %2246 = vset.pattern.permute.xlu0 0
      %2247 = vperm.xlu0 %2246, %v2235
      %v2248 = vpop.permute.xlu0 %2247
      %2251 = vset.pattern.permute.xlu0 0
      %2252 = vperm.xlu0 %2251, %v2236
      %v2253 = vpop.permute.xlu0 %2252
      %2256 = vset.pattern.permute.xlu0 0
      %2257 = vperm.xlu0 %2256, %v2237
      %v2258 = vpop.permute.xlu0 %2257
      %2261 = vset.pattern.permute.xlu0 0
      %2262 = vperm.xlu0 %2261, %v2238
      %v2263 = vpop.permute.xlu0 %2262
      %2266 = vset.pattern.permute.xlu0 0
      %2267 = vperm.xlu0 %2266, %v2239
      %v2268 = vpop.permute.xlu0 %2267
      %v2271 = vsel %vm699, %v2227, 0
      %v2274 = vsel %vm699, %v2228, 0
      %v2277 = vsel %vm699, %v2229, 0
      %v2280 = vsel %vm699, %v2230, 0
      %v2283 = vsel %vm699, %v2231, 0
      %v2286 = vsel %vm699, %v2232, 0
      %2288 = vmatprep.subr.mxu0 0.0
      %2289 = vmatpush1.msra.mxu0 0.0
      %2290 = vmatprep.subr.mxu0 0.0
      %2291 = vmatpush1.msra.mxu0 0.0
      %2292 = vmatprep.subr.mxu0 0.0
      %2293 = vmatpush1.msra.mxu0 0.0
      %2294 = vmatprep.subr.mxu0 0.0
      %2295 = vmatpush1.msra.mxu0 0.0
      %2296 = vmatprep.subr.mxu0 0.0
      %2297 = vmatpush1.msra.mxu0 0.0
      %2298 = vmatprep.subr.mxu0 0.0
      %2299 = vmatpush1.msra.mxu0 0.0
      %2300 = vmatprep.subr.mxu0 0.0
      %2301 = vmatpush1.msra.mxu0 0.0
      %2302 = vmatprep.subr.mxu0 0.0
      %2303 = vmatpush1.msra.mxu0 0.0
      %2304 = vmatprep.subr.mxu0 0.0
      %2305 = vmatpush1.msra.mxu0 0.0
      %2306 = vmatprep.subr.mxu0 0.0
      %2307 = vmatpush1.msra.mxu0 0.0
      %2308 = vmatprep.subr.mxu0 0.0
      %2309 = vmatpush1.msra.mxu0 0.0
      %2310 = vmatprep.subr.mxu0 0.0
      %2311 = vmatpush1.msra.mxu0 0.0
      %2312 = vmatprep.subr.mxu0 %v2225
      %2313 = vmatpush1.msra.mxu0 %v2224
      %2314 = vmatprep.subr.mxu0 %v2223
      %2315 = vmatpush1.msra.mxu0 %v2222
      %2316 = vmatprep.subr.mxu0 %v2221
      %2317 = vmatpush1.msra.mxu0 %v2220
      %2318 = vmatprep.subr.mxu0 %v2219
      %2319 = vmatpush1.msra.mxu0 %v2218
      %2320 = vmatprep.subr.mxu0 0.0
      %2321 = vmatpush2.msra.mxu0 0.0
      %2322 = vmatprep.subr.mxu0 0.0
      %2323 = vmatpush2.msra.mxu0 0.0
      %2324 = vmatprep.subr.mxu0 0.0
      %2325 = vmatpush2.msra.mxu0 0.0
      %2326 = vmatprep.subr.mxu0 0.0
      %2327 = vmatpush2.msra.mxu0 0.0
      %2328 = vmatprep.subr.mxu0 0.0
      %2329 = vmatpush2.msra.mxu0 0.0
      %2330 = vmatprep.subr.mxu0 0.0
      %2331 = vmatpush2.msra.mxu0 0.0
      %2332 = vmatprep.subr.mxu0 0.0
      %2333 = vmatpush2.msra.mxu0 0.0
      %2334 = vmatprep.subr.mxu0 0.0
      %2335 = vmatpush2.msra.mxu0 0.0
      %2336 = vmatprep.subr.mxu0 0.0
      %2337 = vmatpush2.msra.mxu0 0.0
      %2338 = vmatprep.subr.mxu0 0.0
      %2339 = vmatpush2.msra.mxu0 0.0
      %2340 = vmatprep.subr.mxu0 0.0
      %2341 = vmatpush2.msra.mxu0 0.0
      %2342 = vmatprep.subr.mxu0 0.0
      %2343 = vmatpush2.msra.mxu0 0.0
      %2344 = vmatprep.subr.mxu0 0.0
      %2345 = vmatpush2.msra.mxu0 0.0
      %2346 = vmatprep.subr.mxu0 0.0
      %2347 = vmatpush2.msra.mxu0 0.0
      %2348 = vmatprep.subr.mxu0 0.0
      %2349 = vmatpush2.msra.mxu0 0.0
      %2350 = vmatprep.subr.mxu0 0.0
      %2351 = vmatpush2.msra.mxu0 0.0
      %2352 = vmatprep.mubr.f32.mxu0 0.0
      %2353 = vmatmul.mubr.f32.gmra.mxu0 %v2271
      %v2354 = vpop.f32.mrf.mxu0
      %v2355 = vadd.f32 %v2243, %v2354
      %v2356 = vpop.f32.mrf.mxu0
      %v2357 = vadd.f32 %v2243, %v2356
      %2358 = vmatprep.mubr.f32.mxu0 0.0
      %2359 = vmatmul.mubr.f32.gmra.mxu0 %v2274
      %v2360 = vpop.f32.mrf.mxu0
      %v2361 = vadd.f32 %v2248, %v2360
      %v2362 = vpop.f32.mrf.mxu0
      %v2363 = vadd.f32 %v2248, %v2362
      %2364 = vmatprep.mubr.f32.mxu0 0.0
      %2365 = vmatmul.mubr.f32.gmra.mxu0 %v2277
      %v2366 = vpop.f32.mrf.mxu0
      %v2367 = vadd.f32 %v2253, %v2366
      %v2368 = vpop.f32.mrf.mxu0
      %v2369 = vadd.f32 %v2253, %v2368
      %2370 = vmatprep.mubr.f32.mxu0 0.0
      %2371 = vmatmul.mubr.f32.gmra.mxu0 %v2280
      %v2372 = vpop.f32.mrf.mxu0
      %v2373 = vadd.f32 %v2258, %v2372
      %v2374 = vpop.f32.mrf.mxu0
      %v2375 = vadd.f32 %v2258, %v2374
      %2376 = vmatprep.mubr.f32.mxu0 0.0
      %2377 = vmatmul.mubr.f32.gmra.mxu0 %v2283
      %v2378 = vpop.f32.mrf.mxu0
      %v2379 = vadd.f32 %v2263, %v2378
      %v2380 = vpop.f32.mrf.mxu0
      %v2381 = vadd.f32 %v2263, %v2380
      %2382 = vmatprep.mubr.f32.mxu0 0.0
      %2383 = vmatmul.mubr.f32.gmra.mxu0 %v2286
      %v2384 = vpop.f32.mrf.mxu0
      %v2385 = vadd.f32 %v2268, %v2384
      %v2386 = vpop.f32.mrf.mxu0
      %v2387 = vadd.f32 %v2268, %v2386
      %2388 = vdwg.mxu0
      %v2389 = vmax.f32 %v2379, %v2385
      %v2390 = vrot.slane %v2389, 4
      %v2391 = vmax.f32 %v2389, %v2390
      %v2392 = vrot.slane %v2391, 2
      %v2393 = vmax.f32 %v2391, %v2392
      %v2394 = vrot.slane %v2393, 1
      %v2395 = vmax.f32 %v2393, %v2394
      %v2396 = vmax.f32 %v2381, %v2387
      %v2397 = vrot.slane %v2396, 4
      %v2398 = vmax.f32 %v2396, %v2397
      %v2399 = vrot.slane %v2398, 2
      %v2400 = vmax.f32 %v2398, %v2399
      %v2401 = vrot.slane %v2400, 1
      %v2402 = vmax.f32 %v2400, %v2401
      %v2403 = vsub.f32 %v2379, %v2395
      %v2404 = vsub.f32 %v2381, %v2402
      %v2405 = vsub.f32 %v2385, %v2395
      %v2406 = vsub.f32 %v2387, %v2402
      %v2407 = vmul.f32 %v2403, 1.442695
      %v2408 = vpow.pop %v2407
      %v2409 = vmul.f32 %v2404, 1.442695
      %v2410 = vpow.pop %v2409
      %v2411 = vmul.f32 %v2405, 1.442695
      %v2412 = vpow.pop %v2411
      %v2413 = vmul.f32 %v2406, 1.442695
      %v2414 = vpow.pop %v2413
      %v2415 = vadd.f32 %v2408, %v2412
      %v2416 = vrot.slane %v2415, 4
      %v2417 = vadd.f32 %v2415, %v2416
      %v2418 = vrot.slane %v2417, 2
      %v2419 = vadd.f32 %v2417, %v2418
      %v2420 = vrot.slane %v2419, 1
      %v2421 = vadd.f32 %v2419, %v2420
      %v2422 = vadd.f32 %v2410, %v2414
      %v2423 = vrot.slane %v2422, 4
      %v2424 = vadd.f32 %v2422, %v2423
      %v2425 = vrot.slane %v2424, 2
      %v2426 = vadd.f32 %v2424, %v2425
      %v2427 = vrot.slane %v2426, 1
      %v2428 = vadd.f32 %v2426, %v2427
      %v2429 = vrcp.pop %v2421
      %v2430 = vrcp.pop %v2428
      %v2431 = vmul.f32 %v2408, %v2429
      %v2432 = vmul.f32 %v2410, %v2430
      %v2433 = vmul.f32 %v2412, %v2429
      %v2434 = vmul.f32 %v2414, %v2430
      %2435 = vmatprep.subr.mxu0 0.0
      %2436 = vmatpush1.msra.mxu0 0.0
      %2437 = vmatprep.subr.mxu0 0.0
      %2438 = vmatpush1.msra.mxu0 0.0
      %2439 = vmatprep.subr.mxu0 0.0
      %2440 = vmatpush1.msra.mxu0 0.0
      %2441 = vmatprep.subr.mxu0 0.0
      %2442 = vmatpush1.msra.mxu0 0.0
      %2443 = vmatprep.subr.mxu0 0.0
      %2444 = vmatpush1.msra.mxu0 0.0
      %2445 = vmatprep.subr.mxu0 0.0
      %2446 = vmatpush1.msra.mxu0 0.0
      %2447 = vmatprep.subr.mxu0 0.0
      %2448 = vmatpush1.msra.mxu0 0.0
      %2449 = vmatprep.subr.mxu0 0.0
      %2450 = vmatpush1.msra.mxu0 0.0
      %2451 = vmatprep.subr.mxu0 0.0
      %2452 = vmatpush1.msra.mxu0 0.0
      %2453 = vmatprep.subr.mxu0 0.0
      %2454 = vmatpush1.msra.mxu0 0.0
      %2455 = vmatprep.subr.mxu0 0.0
      %2456 = vmatpush1.msra.mxu0 0.0
      %2457 = vmatprep.subr.mxu0 0.0
      %2458 = vmatpush1.msra.mxu0 0.0
      %2459 = vmatprep.subr.mxu0 0.0
      %2460 = vmatpush1.msra.mxu0 0.0
      %2461 = vmatprep.subr.mxu0 0.0
      %2462 = vmatpush1.msra.mxu0 0.0
      %2463 = vmatprep.subr.mxu0 %v2434
      %2464 = vmatpush1.msra.mxu0 %v2433
      %2465 = vmatprep.subr.mxu0 %v2432
      %2466 = vmatpush1.msra.mxu0 %v2431
      %2467 = vmatprep.subr.mxu0 0.0
      %2468 = vmatpush2.msra.mxu0 0.0
      %2469 = vmatprep.subr.mxu0 0.0
      %2470 = vmatpush2.msra.mxu0 0.0
      %2471 = vmatprep.subr.mxu0 0.0
      %2472 = vmatpush2.msra.mxu0 0.0
      %2473 = vmatprep.subr.mxu0 0.0
      %2474 = vmatpush2.msra.mxu0 0.0
      %2475 = vmatprep.subr.mxu0 0.0
      %2476 = vmatpush2.msra.mxu0 0.0
      %2477 = vmatprep.subr.mxu0 0.0
      %2478 = vmatpush2.msra.mxu0 0.0
      %2479 = vmatprep.subr.mxu0 0.0
      %2480 = vmatpush2.msra.mxu0 0.0
      %2481 = vmatprep.subr.mxu0 0.0
      %2482 = vmatpush2.msra.mxu0 0.0
      %2483 = vmatprep.subr.mxu0 0.0
      %2484 = vmatpush2.msra.mxu0 0.0
      %2485 = vmatprep.subr.mxu0 0.0
      %2486 = vmatpush2.msra.mxu0 0.0
      %2487 = vmatprep.subr.mxu0 0.0
      %2488 = vmatpush2.msra.mxu0 0.0
      %2489 = vmatprep.subr.mxu0 0.0
      %2490 = vmatpush2.msra.mxu0 0.0
      %2491 = vmatprep.subr.mxu0 0.0
      %2492 = vmatpush2.msra.mxu0 0.0
      %2493 = vmatprep.subr.mxu0 0.0
      %2494 = vmatpush2.msra.mxu0 0.0
      %2495 = vmatprep.subr.mxu0 0.0
      %2496 = vmatpush2.msra.mxu0 0.0
      %2497 = vmatprep.subr.mxu0 0.0
      %2498 = vmatpush2.msra.mxu0 0.0
      %2499 = vmatprep.mubr.f32.mxu0 0.0
      %2500 = vmatmul.mubr.f32.gmra.mxu0 %v540
      %v2501 = vpop.f32.mrf.mxu0
      %v2502 = vadd.f32 0.0, %v2501
      %v2503 = vpop.f32.mrf.mxu0
      %v2504 = vadd.f32 0.0, %v2503
      %2505 = vmatprep.mubr.f32.mxu0 0.0
      %2506 = vmatmul.mubr.f32.gmra.mxu0 %v543
      %v2507 = vpop.f32.mrf.mxu0
      %v2508 = vadd.f32 0.0, %v2507
      %v2509 = vpop.f32.mrf.mxu0
      %v2510 = vadd.f32 0.0, %v2509
      %2511 = vmatprep.mubr.f32.mxu0 0.0
      %2512 = vmatmul.mubr.f32.gmra.mxu0 %v546
      %v2513 = vpop.f32.mrf.mxu0
      %v2514 = vadd.f32 0.0, %v2513
      %v2515 = vpop.f32.mrf.mxu0
      %v2516 = vadd.f32 0.0, %v2515
      %2517 = vmatprep.mubr.f32.mxu0 0.0
      %2518 = vmatmul.mubr.f32.gmra.mxu0 %v549
      %v2519 = vpop.f32.mrf.mxu0
      %v2520 = vadd.f32 0.0, %v2519
      %v2521 = vpop.f32.mrf.mxu0
      %v2522 = vadd.f32 0.0, %v2521
      %2523 = vdwg.mxu0
      %v2524 = vadd.f32 %v2355, %v2502
      %v2525 = vadd.f32 %v2357, %v2504
      %v2526 = vadd.f32 %v2361, %v2508
      %v2527 = vadd.f32 %v2363, %v2510
      %v2528 = vadd.f32 %v2367, %v2514
      %v2529 = vadd.f32 %v2369, %v2516
      %v2530 = vadd.f32 %v2373, %v2520
      %v2531 = vadd.f32 %v2375, %v2522
      %v2532 = vmax.f32 %v2524, 0.0
      %v2533 = vmax.f32 %v2525, 0.0
      %v2534 = vmax.f32 %v2526, 0.0
      %v2535 = vmax.f32 %v2527, 0.0
      %v2536 = vmax.f32 %v2528, 0.0
      %v2537 = vmax.f32 %v2529, 0.0
      %v2538 = vmax.f32 %v2530, 0.0
      %v2539 = vmax.f32 %v2531, 0.0
      %s2540 = scalar_lea.vmem %s2, 288
      %v2541 = vld [vmem:[%s2540] sm:$0xff]
      %v2542 = vld [vmem:[%s2540 + $0x8] sm:$0xff]
      %v2543 = vld [vmem:[%s2540 + $0x10] sm:$0xff]
      %v2544 = vld [vmem:[%s2540 + $0x18] sm:$0xff]
      %v2545 = vld [vmem:[%s2540 + $0x20] sm:$0xff]
      %v2546 = vld [vmem:[%s2540 + $0x28] sm:$0xff]
      %s2547 = scalar_lea.vmem %s3, 336
      %v2548 = vld [vmem:[%s2547] sm:$0xff]
      %v2549 = vld [vmem:[%s2547 + $0x8] sm:$0xff]
      %v2550 = vld [vmem:[%s2547 + $0x10] sm:$0xff]
      %v2551 = vld [vmem:[%s2547 + $0x18] sm:$0xff]
      %v2552 = vld [vmem:[%s2547 + $0x20] sm:$0xff]
      %v2553 = vld [vmem:[%s2547 + $0x28] sm:$0xff]
      %2555 = vset.pattern.permute.xlu0 0
      %2556 = vperm.xlu0 %2555, %v2548
      %v2557 = vpop.permute.xlu0 %2556
      %2560 = vset.pattern.permute.xlu0 0
      %2561 = vperm.xlu0 %2560, %v2549
      %v2562 = vpop.permute.xlu0 %2561
      %2565 = vset.pattern.permute.xlu0 0
      %2566 = vperm.xlu0 %2565, %v2550
      %v2567 = vpop.permute.xlu0 %2566
      %2570 = vset.pattern.permute.xlu0 0
      %2571 = vperm.xlu0 %2570, %v2551
      %v2572 = vpop.permute.xlu0 %2571
      %2575 = vset.pattern.permute.xlu0 0
      %2576 = vperm.xlu0 %2575, %v2552
      %v2577 = vpop.permute.xlu0 %2576
      %2580 = vset.pattern.permute.xlu0 0
      %2581 = vperm.xlu0 %2580, %v2553
      %v2582 = vpop.permute.xlu0 %2581
      %v2585 = vsel %vm699, %v2541, 0
      %v2588 = vsel %vm699, %v2542, 0
      %v2591 = vsel %vm699, %v2543, 0
      %v2594 = vsel %vm699, %v2544, 0
      %v2597 = vsel %vm699, %v2545, 0
      %v2600 = vsel %vm699, %v2546, 0
      %2602 = vmatprep.subr.mxu0 0.0
      %2603 = vmatpush1.msra.mxu0 0.0
      %2604 = vmatprep.subr.mxu0 0.0
      %2605 = vmatpush1.msra.mxu0 0.0
      %2606 = vmatprep.subr.mxu0 0.0
      %2607 = vmatpush1.msra.mxu0 0.0
      %2608 = vmatprep.subr.mxu0 0.0
      %2609 = vmatpush1.msra.mxu0 0.0
      %2610 = vmatprep.subr.mxu0 0.0
      %2611 = vmatpush1.msra.mxu0 0.0
      %2612 = vmatprep.subr.mxu0 0.0
      %2613 = vmatpush1.msra.mxu0 0.0
      %2614 = vmatprep.subr.mxu0 0.0
      %2615 = vmatpush1.msra.mxu0 0.0
      %2616 = vmatprep.subr.mxu0 0.0
      %2617 = vmatpush1.msra.mxu0 0.0
      %2618 = vmatprep.subr.mxu0 0.0
      %2619 = vmatpush1.msra.mxu0 0.0
      %2620 = vmatprep.subr.mxu0 0.0
      %2621 = vmatpush1.msra.mxu0 0.0
      %2622 = vmatprep.subr.mxu0 0.0
      %2623 = vmatpush1.msra.mxu0 0.0
      %2624 = vmatprep.subr.mxu0 0.0
      %2625 = vmatpush1.msra.mxu0 0.0
      %2626 = vmatprep.subr.mxu0 %v2539
      %2627 = vmatpush1.msra.mxu0 %v2538
      %2628 = vmatprep.subr.mxu0 %v2537
      %2629 = vmatpush1.msra.mxu0 %v2536
      %2630 = vmatprep.subr.mxu0 %v2535
      %2631 = vmatpush1.msra.mxu0 %v2534
      %2632 = vmatprep.subr.mxu0 %v2533
      %2633 = vmatpush1.msra.mxu0 %v2532
      %2634 = vmatprep.subr.mxu0 0.0
      %2635 = vmatpush2.msra.mxu0 0.0
      %2636 = vmatprep.subr.mxu0 0.0
      %2637 = vmatpush2.msra.mxu0 0.0
      %2638 = vmatprep.subr.mxu0 0.0
      %2639 = vmatpush2.msra.mxu0 0.0
      %2640 = vmatprep.subr.mxu0 0.0
      %2641 = vmatpush2.msra.mxu0 0.0
      %2642 = vmatprep.subr.mxu0 0.0
      %2643 = vmatpush2.msra.mxu0 0.0
      %2644 = vmatprep.subr.mxu0 0.0
      %2645 = vmatpush2.msra.mxu0 0.0
      %2646 = vmatprep.subr.mxu0 0.0
      %2647 = vmatpush2.msra.mxu0 0.0
      %2648 = vmatprep.subr.mxu0 0.0
      %2649 = vmatpush2.msra.mxu0 0.0
      %2650 = vmatprep.subr.mxu0 0.0
      %2651 = vmatpush2.msra.mxu0 0.0
      %2652 = vmatprep.subr.mxu0 0.0
      %2653 = vmatpush2.msra.mxu0 0.0
      %2654 = vmatprep.subr.mxu0 0.0
      %2655 = vmatpush2.msra.mxu0 0.0
      %2656 = vmatprep.subr.mxu0 0.0
      %2657 = vmatpush2.msra.mxu0 0.0
      %2658 = vmatprep.subr.mxu0 0.0
      %2659 = vmatpush2.msra.mxu0 0.0
      %2660 = vmatprep.subr.mxu0 0.0
      %2661 = vmatpush2.msra.mxu0 0.0
      %2662 = vmatprep.subr.mxu0 0.0
      %2663 = vmatpush2.msra.mxu0 0.0
      %2664 = vmatprep.subr.mxu0 0.0
      %2665 = vmatpush2.msra.mxu0 0.0
      %2666 = vmatprep.mubr.f32.mxu0 0.0
      %2667 = vmatmul.mubr.f32.gmra.mxu0 %v2585
      %v2668 = vpop.f32.mrf.mxu0
      %v2669 = vadd.f32 %v2557, %v2668
      %v2670 = vpop.f32.mrf.mxu0
      %v2671 = vadd.f32 %v2557, %v2670
      %2672 = vmatprep.mubr.f32.mxu0 0.0
      %2673 = vmatmul.mubr.f32.gmra.mxu0 %v2588
      %v2674 = vpop.f32.mrf.mxu0
      %v2675 = vadd.f32 %v2562, %v2674
      %v2676 = vpop.f32.mrf.mxu0
      %v2677 = vadd.f32 %v2562, %v2676
      %2678 = vmatprep.mubr.f32.mxu0 0.0
      %2679 = vmatmul.mubr.f32.gmra.mxu0 %v2591
      %v2680 = vpop.f32.mrf.mxu0
      %v2681 = vadd.f32 %v2567, %v2680
      %v2682 = vpop.f32.mrf.mxu0
      %v2683 = vadd.f32 %v2567, %v2682
      %2684 = vmatprep.mubr.f32.mxu0 0.0
      %2685 = vmatmul.mubr.f32.gmra.mxu0 %v2594
      %v2686 = vpop.f32.mrf.mxu0
      %v2687 = vadd.f32 %v2572, %v2686
      %v2688 = vpop.f32.mrf.mxu0
      %v2689 = vadd.f32 %v2572, %v2688
      %2690 = vmatprep.mubr.f32.mxu0 0.0
      %2691 = vmatmul.mubr.f32.gmra.mxu0 %v2597
      %v2692 = vpop.f32.mrf.mxu0
      %v2693 = vadd.f32 %v2577, %v2692
      %v2694 = vpop.f32.mrf.mxu0
      %v2695 = vadd.f32 %v2577, %v2694
      %2696 = vmatprep.mubr.f32.mxu0 0.0
      %2697 = vmatmul.mubr.f32.gmra.mxu0 %v2600
      %v2698 = vpop.f32.mrf.mxu0
      %v2699 = vadd.f32 %v2582, %v2698
      %v2700 = vpop.f32.mrf.mxu0
      %v2701 = vadd.f32 %v2582, %v2700
      %2702 = vdwg.mxu0
      %v2703 = vmax.f32 %v2693, %v2699
      %v2704 = vrot.slane %v2703, 4
      %v2705 = vmax.f32 %v2703, %v2704
      %v2706 = vrot.slane %v2705, 2
      %v2707 = vmax.f32 %v2705, %v2706
      %v2708 = vrot.slane %v2707, 1
      %v2709 = vmax.f32 %v2707, %v2708
      %v2710 = vmax.f32 %v2695, %v2701
      %v2711 = vrot.slane %v2710, 4
      %v2712 = vmax.f32 %v2710, %v2711
      %v2713 = vrot.slane %v2712, 2
      %v2714 = vmax.f32 %v2712, %v2713
      %v2715 = vrot.slane %v2714, 1
      %v2716 = vmax.f32 %v2714, %v2715
      %v2717 = vsub.f32 %v2693, %v2709
      %v2718 = vsub.f32 %v2695, %v2716
      %v2719 = vsub.f32 %v2699, %v2709
      %v2720 = vsub.f32 %v2701, %v2716
      %v2721 = vmul.f32 %v2717, 1.442695
      %v2722 = vpow.pop %v2721
      %v2723 = vmul.f32 %v2718, 1.442695
      %v2724 = vpow.pop %v2723
      %v2725 = vmul.f32 %v2719, 1.442695
      %v2726 = vpow.pop %v2725
      %v2727 = vmul.f32 %v2720, 1.442695
      %v2728 = vpow.pop %v2727
      %v2729 = vadd.f32 %v2722, %v2726
      %v2730 = vrot.slane %v2729, 4
      %v2731 = vadd.f32 %v2729, %v2730
      %v2732 = vrot.slane %v2731, 2
      %v2733 = vadd.f32 %v2731, %v2732
      %v2734 = vrot.slane %v2733, 1
      %v2735 = vadd.f32 %v2733, %v2734
      %v2736 = vadd.f32 %v2724, %v2728
      %v2737 = vrot.slane %v2736, 4
      %v2738 = vadd.f32 %v2736, %v2737
      %v2739 = vrot.slane %v2738, 2
      %v2740 = vadd.f32 %v2738, %v2739
      %v2741 = vrot.slane %v2740, 1
      %v2742 = vadd.f32 %v2740, %v2741
      %v2743 = vrcp.pop %v2735
      %v2744 = vrcp.pop %v2742
      %v2745 = vmul.f32 %v2722, %v2743
      %v2746 = vmul.f32 %v2724, %v2744
      %v2747 = vmul.f32 %v2726, %v2743
      %v2748 = vmul.f32 %v2728, %v2744
      %2749 = vmatprep.subr.mxu0 0.0
      %2750 = vmatpush1.msra.mxu0 0.0
      %2751 = vmatprep.subr.mxu0 0.0
      %2752 = vmatpush1.msra.mxu0 0.0
      %2753 = vmatprep.subr.mxu0 0.0
      %2754 = vmatpush1.msra.mxu0 0.0
      %2755 = vmatprep.subr.mxu0 0.0
      %2756 = vmatpush1.msra.mxu0 0.0
      %2757 = vmatprep.subr.mxu0 0.0
      %2758 = vmatpush1.msra.mxu0 0.0
      %2759 = vmatprep.subr.mxu0 0.0
      %2760 = vmatpush1.msra.mxu0 0.0
      %2761 = vmatprep.subr.mxu0 0.0
      %2762 = vmatpush1.msra.mxu0 0.0
      %2763 = vmatprep.subr.mxu0 0.0
      %2764 = vmatpush1.msra.mxu0 0.0
      %2765 = vmatprep.subr.mxu0 0.0
      %2766 = vmatpush1.msra.mxu0 0.0
      %2767 = vmatprep.subr.mxu0 0.0
      %2768 = vmatpush1.msra.mxu0 0.0
      %2769 = vmatprep.subr.mxu0 0.0
      %2770 = vmatpush1.msra.mxu0 0.0
      %2771 = vmatprep.subr.mxu0 0.0
      %2772 = vmatpush1.msra.mxu0 0.0
      %2773 = vmatprep.subr.mxu0 0.0
      %2774 = vmatpush1.msra.mxu0 0.0
      %2775 = vmatprep.subr.mxu0 0.0
      %2776 = vmatpush1.msra.mxu0 0.0
      %2777 = vmatprep.subr.mxu0 %v2748
      %2778 = vmatpush1.msra.mxu0 %v2747
      %2779 = vmatprep.subr.mxu0 %v2746
      %2780 = vmatpush1.msra.mxu0 %v2745
      %2781 = vmatprep.subr.mxu0 0.0
      %2782 = vmatpush2.msra.mxu0 0.0
      %2783 = vmatprep.subr.mxu0 0.0
      %2784 = vmatpush2.msra.mxu0 0.0
      %2785 = vmatprep.subr.mxu0 0.0
      %2786 = vmatpush2.msra.mxu0 0.0
      %2787 = vmatprep.subr.mxu0 0.0
      %2788 = vmatpush2.msra.mxu0 0.0
      %2789 = vmatprep.subr.mxu0 0.0
      %2790 = vmatpush2.msra.mxu0 0.0
      %2791 = vmatprep.subr.mxu0 0.0
      %2792 = vmatpush2.msra.mxu0 0.0
      %2793 = vmatprep.subr.mxu0 0.0
      %2794 = vmatpush2.msra.mxu0 0.0
      %2795 = vmatprep.subr.mxu0 0.0
      %2796 = vmatpush2.msra.mxu0 0.0
      %2797 = vmatprep.subr.mxu0 0.0
      %2798 = vmatpush2.msra.mxu0 0.0
      %2799 = vmatprep.subr.mxu0 0.0
      %2800 = vmatpush2.msra.mxu0 0.0
      %2801 = vmatprep.subr.mxu0 0.0
      %2802 = vmatpush2.msra.mxu0 0.0
      %2803 = vmatprep.subr.mxu0 0.0
      %2804 = vmatpush2.msra.mxu0 0.0
      %2805 = vmatprep.subr.mxu0 0.0
      %2806 = vmatpush2.msra.mxu0 0.0
      %2807 = vmatprep.subr.mxu0 0.0
      %2808 = vmatpush2.msra.mxu0 0.0
      %2809 = vmatprep.subr.mxu0 0.0
      %2810 = vmatpush2.msra.mxu0 0.0
      %2811 = vmatprep.subr.mxu0 0.0
      %2812 = vmatpush2.msra.mxu0 0.0
      %2813 = vmatprep.mubr.f32.mxu0 0.0
      %2814 = vmatmul.mubr.f32.gmra.mxu0 %v540
      %v2815 = vpop.f32.mrf.mxu0
      %v2816 = vadd.f32 0.0, %v2815
      %v2817 = vpop.f32.mrf.mxu0
      %v2818 = vadd.f32 0.0, %v2817
      %2819 = vmatprep.mubr.f32.mxu0 0.0
      %2820 = vmatmul.mubr.f32.gmra.mxu0 %v543
      %v2821 = vpop.f32.mrf.mxu0
      %v2822 = vadd.f32 0.0, %v2821
      %v2823 = vpop.f32.mrf.mxu0
      %v2824 = vadd.f32 0.0, %v2823
      %2825 = vmatprep.mubr.f32.mxu0 0.0
      %2826 = vmatmul.mubr.f32.gmra.mxu0 %v546
      %v2827 = vpop.f32.mrf.mxu0
      %v2828 = vadd.f32 0.0, %v2827
      %v2829 = vpop.f32.mrf.mxu0
      %v2830 = vadd.f32 0.0, %v2829
      %2831 = vmatprep.mubr.f32.mxu0 0.0
      %2832 = vmatmul.mubr.f32.gmra.mxu0 %v549
      %v2833 = vpop.f32.mrf.mxu0
      %v2834 = vadd.f32 0.0, %v2833
      %v2835 = vpop.f32.mrf.mxu0
      %v2836 = vadd.f32 0.0, %v2835
      %2837 = vdwg.mxu0
      %v2838 = vadd.f32 %v2669, %v2816
      %v2839 = vadd.f32 %v2671, %v2818
      %v2840 = vadd.f32 %v2675, %v2822
      %v2841 = vadd.f32 %v2677, %v2824
      %v2842 = vadd.f32 %v2681, %v2828
      %v2843 = vadd.f32 %v2683, %v2830
      %v2844 = vadd.f32 %v2687, %v2834
      %v2845 = vadd.f32 %v2689, %v2836
      %v2846 = vmax.f32 %v2838, 0.0
      %v2847 = vmax.f32 %v2839, 0.0
      %v2848 = vmax.f32 %v2840, 0.0
      %v2849 = vmax.f32 %v2841, 0.0
      %v2850 = vmax.f32 %v2842, 0.0
      %v2851 = vmax.f32 %v2843, 0.0
      %v2852 = vmax.f32 %v2844, 0.0
      %v2853 = vmax.f32 %v2845, 0.0
      %v2854 = vld [vmem:[%s5] sm:$0x7]
      %v2855 = vld [vmem:[%s6] sm:$0x7]
      %2857 = vset.pattern.permute.xlu0 0
      %2858 = vperm.xlu0 %2857, %v2855
      %v2859 = vpop.permute.xlu0 %2858
      %v2862 = vsel %vm699, %v2854, 0
      %2864 = vmatprep.subr.mxu0 0.0
      %2865 = vmatpush1.msra.mxu0 0.0
      %2866 = vmatprep.subr.mxu0 0.0
      %2867 = vmatpush1.msra.mxu0 0.0
      %2868 = vmatprep.subr.mxu0 0.0
      %2869 = vmatpush1.msra.mxu0 0.0
      %2870 = vmatprep.subr.mxu0 0.0
      %2871 = vmatpush1.msra.mxu0 0.0
      %2872 = vmatprep.subr.mxu0 0.0
      %2873 = vmatpush1.msra.mxu0 0.0
      %2874 = vmatprep.subr.mxu0 0.0
      %2875 = vmatpush1.msra.mxu0 0.0
      %2876 = vmatprep.subr.mxu0 0.0
      %2877 = vmatpush1.msra.mxu0 0.0
      %2878 = vmatprep.subr.mxu0 0.0
      %2879 = vmatpush1.msra.mxu0 0.0
      %2880 = vmatprep.subr.mxu0 0.0
      %2881 = vmatpush1.msra.mxu0 0.0
      %2882 = vmatprep.subr.mxu0 0.0
      %2883 = vmatpush1.msra.mxu0 0.0
      %2884 = vmatprep.subr.mxu0 0.0
      %2885 = vmatpush1.msra.mxu0 0.0
      %2886 = vmatprep.subr.mxu0 0.0
      %2887 = vmatpush1.msra.mxu0 0.0
      %2888 = vmatprep.subr.mxu0 %v2853
      %2889 = vmatpush1.msra.mxu0 %v2852
      %2890 = vmatprep.subr.mxu0 %v2851
      %2891 = vmatpush1.msra.mxu0 %v2850
      %2892 = vmatprep.subr.mxu0 %v2849
      %2893 = vmatpush1.msra.mxu0 %v2848
      %2894 = vmatprep.subr.mxu0 %v2847
      %2895 = vmatpush1.msra.mxu0 %v2846
      %2896 = vmatprep.subr.mxu0 0.0
      %2897 = vmatpush2.msra.mxu0 0.0
      %2898 = vmatprep.subr.mxu0 0.0
      %2899 = vmatpush2.msra.mxu0 0.0
      %2900 = vmatprep.subr.mxu0 0.0
      %2901 = vmatpush2.msra.mxu0 0.0
      %2902 = vmatprep.subr.mxu0 0.0
      %2903 = vmatpush2.msra.mxu0 0.0
      %2904 = vmatprep.subr.mxu0 0.0
      %2905 = vmatpush2.msra.mxu0 0.0
      %2906 = vmatprep.subr.mxu0 0.0
      %2907 = vmatpush2.msra.mxu0 0.0
      %2908 = vmatprep.subr.mxu0 0.0
      %2909 = vmatpush2.msra.mxu0 0.0
      %2910 = vmatprep.subr.mxu0 0.0
      %2911 = vmatpush2.msra.mxu0 0.0
      %2912 = vmatprep.subr.mxu0 0.0
      %2913 = vmatpush2.msra.mxu0 0.0
      %2914 = vmatprep.subr.mxu0 0.0
      %2915 = vmatpush2.msra.mxu0 0.0
      %2916 = vmatprep.subr.mxu0 0.0
      %2917 = vmatpush2.msra.mxu0 0.0
      %2918 = vmatprep.subr.mxu0 0.0
      %2919 = vmatpush2.msra.mxu0 0.0
      %2920 = vmatprep.subr.mxu0 0.0
      %2921 = vmatpush2.msra.mxu0 0.0
      %2922 = vmatprep.subr.mxu0 0.0
      %2923 = vmatpush2.msra.mxu0 0.0
      %2924 = vmatprep.subr.mxu0 0.0
      %2925 = vmatpush2.msra.mxu0 0.0
      %2926 = vmatprep.subr.mxu0 0.0
      %2927 = vmatpush2.msra.mxu0 0.0
      %2928 = vmatprep.mubr.f32.mxu0 0.0
      %2929 = vmatmul.mubr.f32.gmra.mxu0 %v2862
      %v2930 = vpop.f32.mrf.mxu0
      %v2931 = vadd.f32 %v2859, %v2930
      %v2932 = vpop.f32.mrf.mxu0
      %v2933 = vadd.f32 %v2859, %v2932
      %2934 = vdwg.mxu0
      %v2937 = vcombine.low %v2931, %v2933
      %2939 = vst [vmem:[%s316] sm:$0x77] %v2937
      %s2940 = smul.u32 2, %s23
      %p2941 = scmp.lt.s32.totalorder %s22, 1
      %s2942 = scalar_select %p2941, %s22, 1
      %p2943 = scmp.lt.s32.totalorder %s2940, 1
      %s2944 = scalar_select %p2943, %s2940, 1
      %s2945 = smul.addr %s2942, 2
      %s2946 = sadd.s32 %s2944, %s2945
      %s2947 = smul.addr %s2946, 4
      %s2948 = scalar_lea.vmem %s7, %s2947
      // Predicated region
      $region49: #{tpu_custom_call.1} parent=47 // pred_check
        %p2949 = pneg %p204
      $region50: #{tpu_custom_call.1} parent=47 // pred_check_branch
        %2951 = sbr.rel (%p2949) target = $region52
      $region51: #{tpu_custom_call.1} parent=47 // pred_region
        %s2952 = smul.u32 2, %s23
      $region52: #{tpu_custom_call.1} parent=47 // pred_fallthru
        _
    $region48: #{tpu_custom_call.1} parent=5 // pred_fallthru
      _
    %p2953 = scmp.le.s32.totalorder 2, %s13
    // Predicated region
    $region53: #{tpu_custom_call.1} parent=5 // pred_check
      %p2954 = pneg %p2953
    $region54: #{tpu_custom_call.1} parent=5 // pred_check_branch
      %2956 = sbr.rel (%p2954) target = $region56
    $region55: #{tpu_custom_call.1} parent=5 // pred_region
      %s2957 = ssub.s32 %s13, 2
      // Predicated region
      $region57: #{tpu_custom_call.1} parent=55 // pred_check
        %p2958 = pneg %p210
      $region58: #{tpu_custom_call.1} parent=55 // pred_check_branch
        %2960 = sbr.rel (%p2958) target = $region60
      $region59: #{tpu_custom_call.1} parent=55 // pred_region
        %s2961 = smul.u32 2, %s25
        %p2962 = scmp.lt.s32.totalorder %s24, 1
        %s2963 = scalar_select %p2962, %s24, 1
        %p2964 = scmp.lt.s32.totalorder %s2961, 1
        %s2965 = scalar_select %p2964, %s2961, 1
        %s2966 = smul.addr %s2963, 2
        %s2967 = sadd.s32 %s2965, %s2966
        %s2968 = smul.addr %s2967, 4
        %s2969 = scalar_lea.vmem %s7, %s2968
      $region60: #{tpu_custom_call.1} parent=55 // pred_fallthru
        _
    $region56: #{tpu_custom_call.1} parent=5 // pred_fallthru
      _
  $region6: #{tpu_custom_call.1} parent=0 // loop_footer
    %s17 = sadd.s32 1, %s13
  $region7: #{tpu_custom_call.1} parent=0 // loop_footer_branch
    %12 = sbr.rel target = $region3
  $region8: #{tpu_custom_call.1} parent=0 // loop_exit
    _

</llo_original>
